<compile_context>
chip_gen: v5e
topology: v5e:2x2
jax: 0.10.0
libtpu: 0.0.40
codegen_flags: <defaults>
</compile_context>

<pallas_src>
import math
from functools import partial

import jax
import jax.numpy as jnp
from jax import lax
from jax.experimental import pallas as pl
from jax.experimental.pallas import tpu as pltpu

_LANE = 128


def _round_up(x, m):
    return (x + m - 1) // m * m


def causal_vae_kernel(
    x_ref, eps_ref,
    we1_ref, be1_ref, se1_ref, ise1_ref,
    we2_ref, be2_ref, se2_ref, ise2_ref,
    wmv_ref, bmv_ref,
    mdag_ref,
    wqkv_ref, bqkv_ref, wo_ref, bo_ref,
    mask_ref,
    w1c_ref, b1c_ref, s1c_ref, is1c_ref,
    w2bd_ref, b2c_ref,
    klrow_ref,
    out_ref,
    attn_sc, qkv_sc, z_sc, kl_sc,
    *, tile_b, seq, num_heads, head_dim, e_pad,
):
    f32 = jnp.float32
    bf16 = jnp.bfloat16

    def mm(a, w_ref, b_ref=None):
        # bf16 MXU operands, f32 accumulation; bias add in f32.
        y = jnp.dot(a.astype(bf16), w_ref[...], preferred_element_type=f32)
        if b_ref is not None:
            y = y + b_ref[...]
        return y

    def scaled_tanh(v, s_ref, inv_ref):
        # tanh(v / s) * s, with 1/s precomputed host-side (no in-kernel recip).
        return jnp.tanh(v * inv_ref[...]) * s_ref[...]

    # ---------------- encoder: Linear -> ScaledTanh -> Linear -> ScaledTanh --
    x = x_ref[...]                                           # [T, D_pad] bf16
    h = scaled_tanh(mm(x, we1_ref, be1_ref), se1_ref, ise1_ref)
    h = scaled_tanh(mm(h, we2_ref, be2_ref), se2_ref, ise2_ref)

    # ---------------- fused mu | log_var head + reparameterize ----------------
    mv = mm(h, wmv_ref, bmv_ref)                             # [T, 2*E_pad] f32
    mu = mv[:, :e_pad]
    log_var = mv[:, e_pad:]
    std = jnp.exp(0.5 * log_var)
    z = mu + eps_ref[...].astype(f32) * std
    # KL row-sums NOW so mu/log_var/std die before attention; exp(lv) == std*std.
    # Pad lanes give 1 + 0 - 0 - 1 = 0 so they don't perturb the sum.
    kl_sc[...] = jnp.sum(1.0 + log_var - mu * mu - std * std, axis=1,
                         keepdims=True)                      # [T, 1]

    # ---------------- DAG layer: z @ (I - A)^-1 (zero-padded block) -----------
    z = mm(z, mdag_ref)                                      # [T, E_pad] f32

    # ---------------- fused q | k | v, parked in VMEM scratch -----------------
    qkv_sc[...] = mm(z, wqkv_ref, bqkv_ref).astype(bf16)     # [T, 3*E_pad] bf16
    z_sc[...] = z            # stash post-DAG z: no tile-sized vreg value stays
                             # live across the attention loop.

    # ---------------- multi-head self-attention (batch_first, no mask) --------
    inv_sqrt_d = 1.0 / math.sqrt(head_dim)

    def attn_body(b):
        r0 = b * seq
        if not isinstance(r0, int):
            r0 = pl.multiple_of(r0, seq)
        for hh in range(num_heads):                          # static head offsets
            c0 = hh * head_dim
            qh = qkv_sc[pl.ds(r0, seq), c0:c0 + head_dim]
            kh = qkv_sc[pl.ds(r0, seq), e_pad + c0:e_pad + c0 + head_dim]
            vh = qkv_sc[pl.ds(r0, seq), 2 * e_pad + c0:2 * e_pad + c0 + head_dim]
            # scores: contract head_dim of both operands (no transpose)
            s = lax.dot_general(qh, kh, (((1,), (1,)), ((), ())),
                                preferred_element_type=f32) * inv_sqrt_d
            s = s - jnp.max(s, axis=-1, keepdims=True)
            p = jnp.exp(s)
            p = p * pl.reciprocal(jnp.sum(p, axis=-1, keepdims=True),
                                  approx=True)
            hv = lax.dot_general(p.astype(bf16), vh, (((1,), (0,)), ((), ())),
                                 preferred_element_type=f32)
            # per-head lane slice of the [T, E] attention scratch
            attn_sc[pl.ds(r0, seq), c0:c0 + head_dim] = hv

    if tile_b <= 8:
        for b in range(tile_b):        # small trip count: fully static offsets
            attn_body(b)
    else:
        def loop_body(b, carry):       # bounded live ranges for big tiles
            attn_body(b)
            return carry
        lax.fori_loop(0, tile_b, loop_body, None, unroll=2)
    # TODO(synk): batching heads along the sublane axis (scores [H*seq, seq])
    # could raise softmax vreg fill for small head_dim -- benchmark separately.

    # single out-projection matmul over the whole tile (hoisted out of loops)
    z = z_sc[...] + mm(attn_sc[...], wo_ref, bo_ref)

    # ---------------- mask layer (no intervention) ----------------------------
    z = z * mask_ref[...]

    # ---------------- fused concept decoders + KL padding column --------------
    h1 = scaled_tanh(mm(z, w1c_ref, b1c_ref), s1c_ref, is1c_ref)
    dec = mm(h1, w2bd_ref, b2c_ref)                          # [T, O_slab]
    # dec's kl_col column is exactly zero by construction; one mul+add, no iota.
    out_ref[...] = dec + kl_sc[...] * klrow_ref[...]


# ----------------------------- parameter setup --------------------------------
def _linear(key, fan_in, fan_out):
    kw, kb = jax.random.split(key)
    bound = 1.0 / math.sqrt(fan_in)
    w = jax.random.uniform(kw, (fan_in, fan_out), jnp.float32, -bound, bound)
    b = jax.random.uniform(kb, (1, fan_out), jnp.float32, -bound, bound)
    return w, b


def init_params(key, input_dim, output_dim, num_concepts=4, num_heads=4):
    bottleneck = max(32, min(input_dim, output_dim))
    latent = ((bottleneck + num_heads - 1) // num_heads) * num_heads
    keys = jax.random.split(key, 10)
    p = {}
    # encoder
    p["we1"], p["be1"] = _linear(keys[0], input_dim, bottleneck)
    p["se1"] = jnp.ones((1, bottleneck), jnp.float32)      # ScaledTanh scale=1.0
    p["we2"], p["be2"] = _linear(keys[1], bottleneck, bottleneck)
    p["se2"] = jnp.ones((1, bottleneck), jnp.float32)
    # mu / var heads
    p["wmu"], p["bmu"] = _linear(keys[2], bottleneck, latent)
    p["wvar"], p["bvar"] = _linear(keys[3], bottleneck, latent)
    # DAG parameter  A ~ U(-0.1, 0.1)
    p["A"] = jax.random.uniform(keys[4], (latent, latent), jnp.float32, -0.1, 0.1)
    # mask layer (ones)
    p["mask"] = jnp.ones((1, latent), jnp.float32)
    # multi-head attention (q/k/v in-proj + out-proj), stored [in, out]
    p["wq"], p["bq"] = _linear(keys[5], latent, latent)
    p["wk"], p["bk"] = _linear(keys[6], latent, latent)
    p["wv"], p["bv"] = _linear(keys[7], latent, latent)
    p["wo"], p["bo"] = _linear(keys[8], latent, latent)
    # concept decoders
    if output_dim % num_concepts != 0:
        base = output_dim // num_concepts
        extra = output_dim % num_concepts
        concept_dims = [base + (1 if i < extra else 0) for i in range(num_concepts)]
    else:
        concept_dims = [output_dim // num_concepts] * num_concepts
    dec_keys = jax.random.split(keys[9], 2 * num_concepts)
    decoders = []
    for i, cdim in enumerate(concept_dims):
        w1, b1 = _linear(dec_keys[2 * i], latent, bottleneck)
        w2, b2 = _linear(dec_keys[2 * i + 1], bottleneck, cdim)
        s1 = jnp.ones((1, bottleneck), jnp.float32)
        decoders.append((w1, b1, s1, w2, b2))
    p["decoders"] = decoders
    dims = dict(input_dim=input_dim, output_dim=output_dim, bottleneck=bottleneck,
                latent=latent, num_heads=num_heads, num_concepts=num_concepts)
    return p, dims


def pack_params(p, dims):
    """Pad / fuse logical parameters into lane-dense kernel operands."""
    f32, bf16 = jnp.float32, jnp.bfloat16
    D, O = dims["input_dim"], dims["output_dim"]
    BN, E, C = dims["bottleneck"], dims["latent"], dims["num_concepts"]

    d_pad = _round_up(D, _LANE)
    bn_pad = _round_up(BN, _LANE)
    e_pad = _round_up(E, _LANE)
    cb = C * BN
    cb_pad = _round_up(cb, _LANE)
    o_slab = _round_up(O + 1, _LANE)      # +1 pad column carries KL row-sums
    kl_col = o_slab - 1

    def padw(w, rows, cols):
        return jnp.zeros((rows, cols), f32).at[:w.shape[0], :w.shape[1]].set(w)

    def padrow(b, cols, fill=0.0):
        return jnp.full((1, cols), fill, f32).at[:, :b.shape[1]].set(b)

    # encoder (pad scale lanes = 1 so pad lanes stay exactly 0 through tanh)
    we1 = padw(p["we1"], d_pad, bn_pad)
    be1 = padrow(p["be1"], bn_pad)
    se1 = padrow(p["se1"], bn_pad, fill=1.0)
    we2 = padw(p["we2"], bn_pad, bn_pad)
    be2 = padrow(p["be2"], bn_pad)
    se2 = padrow(p["se2"], bn_pad, fill=1.0)

    # fused mu | log_var head (pad log_var lanes stay 0 -> std=1, KL term 0)
    wmv = jnp.zeros((bn_pad, 2 * e_pad), f32)
    wmv = wmv.at[:BN, :E].set(p["wmu"]).at[:BN, e_pad:e_pad + E].set(p["wvar"])
    bmv = jnp.zeros((1, 2 * e_pad), f32)
    bmv = bmv.at[:, :E].set(p["bmu"]).at[:, e_pad:e_pad + E].set(p["bvar"])

    # DAG mixing matrix: (I - A) is unit upper-triangular -> triangular solve.
    A_mask = jnp.triu(jnp.ones_like(p["A"]), k=1)
    Am = p["A"] * A_mask
    eye = jnp.eye(E, dtype=f32)
    m_dag = jax.scipy.linalg.solve_triangular(eye - Am, eye, lower=False)
    m_dag_p = padw(m_dag, e_pad, e_pad)

    # fused q | k | v projections
    wqkv = jnp.zeros((e_pad, 3 * e_pad), f32)
    bqkv = jnp.zeros((1, 3 * e_pad), f32)
    for i, (w, b) in enumerate(((p["wq"], p["bq"]),
                                (p["wk"], p["bk"]),
                                (p["wv"], p["bv"]))):
        wqkv = wqkv.at[:E, i * e_pad:i * e_pad + E].set(w)
        bqkv = bqkv.at[:, i * e_pad:i * e_pad + E].set(b)
    # out-projection keeps only its E real rows: the attention scratch is
    # exactly E columns wide, so no garbage/pad lanes ever feed this matmul.
    wo = padw(p["wo"], E, e_pad)
    bo = padrow(p["bo"], e_pad)
    mask = padrow(p["mask"], e_pad)

    # fused concept decoders: wide stage-1 + block-diagonal stage-2
    w1c = jnp.zeros((e_pad, cb_pad), f32)
    b1c = jnp.zeros((1, cb_pad), f32)
    s1c = jnp.ones((1, cb_pad), f32)
    w2bd = jnp.zeros((cb_pad, o_slab), f32)
    b2c = jnp.zeros((1, o_slab), f32)
    col = 0
    for i, (w1, b1, s1, w2, b2) in enumerate(p["decoders"]):
        cdim = w2.shape[1]
        w1c = w1c.at[:E, i * BN:(i + 1) * BN].set(w1)
        b1c = b1c.at[:, i * BN:(i + 1) * BN].set(b1)
        s1c = s1c.at[:, i * BN:(i + 1) * BN].set(s1)
        w2bd = w2bd.at[i * BN:(i + 1) * BN, col:col + cdim].set(w2)
        b2c = b2c.at[:, col:col + cdim].set(b2)
        col += cdim

    # host-side ScaledTanh inverse scales (pad lanes are 1 -> inverse 1)
    # TODO(synk): clamp |scale| away from 0 before inverting if scales train.
    ise1 = 1.0 / se1
    ise2 = 1.0 / se2
    is1c = 1.0 / s1c

    # one-hot row selecting the KL padding column of the output slab
    klrow = jnp.zeros((1, o_slab), f32).at[0, kl_col].set(1.0)

    # matrices stored bf16 (MXU operands, half the weight DMA); rows stay f32
    weights = [
        we1.astype(bf16), be1, se1, ise1,
        we2.astype(bf16), be2, se2, ise2,
        wmv.astype(bf16), bmv,
        m_dag_p.astype(bf16),
        wqkv.astype(bf16), bqkv, wo.astype(bf16), bo,
        mask,
        w1c.astype(bf16), b1c, s1c, is1c,
        w2bd.astype(bf16), b2c,
        klrow,
    ]
    pads = dict(d_pad=d_pad, bn_pad=bn_pad, e_pad=e_pad, cb_pad=cb_pad,
                o_slab=o_slab, kl_col=kl_col)
    return weights, pads


# ----------------------------- forward wrapper --------------------------------
def causal_vae_forward(params, dims, x, eps, beta=1.0):
    B, S, D = x.shape
    N = B * S
    E = dims["latent"]
    O = dims["output_dim"]
    H = dims["num_heads"]
    head_dim = E // H

    weights, pads = pack_params(params, dims)
    d_pad, e_pad = pads["d_pad"], pads["e_pad"]
    o_slab, kl_col = pads["o_slab"], pads["kl_col"]

    act_dtype = jnp.bfloat16        # streamed activations: half the HBM bytes
    # TODO(synk): for D << 128, benchmark streaming x unpadded ([N, D] block)
    # instead of lane-padding to d_pad.

    # ---------------- tile sizing from an explicit VMEM byte budget ----------
    try:
        vmem_phys = int(pltpu.get_tpu_info().vmem_capacity_bytes)
    except Exception:
        vmem_phys = 64 * 1024 * 1024            # conservative (v7x per-core)
    vmem_limit = min(vmem_phys * 3 // 4, 100 * 1024 * 1024)
    budget = int(vmem_limit * 0.85)

    # resident weights are double-buffered by the default pipeline (conservative).
    # TODO(synk): pipeline_mode=pl.Buffered(1) on the resident specs would halve
    # this once validated on the target jax version.
    resident_bytes = 2 * sum(int(w.size) * w.dtype.itemsize for w in weights)
    per_row_bytes = (
        2 * (2 * d_pad + 2 * e_pad + 4 * o_slab)          # streamed x/eps/out, x2 bufs
        + 4 * E + 2 * 3 * e_pad + 4 * e_pad + 4 * _LANE)  # attn/qkv/z/kl scratch
    rows_budget = max(8, (budget - resident_bytes) // per_row_bytes)

    # Tiles hold whole sequences (attention mixes tokens within a sequence);
    # tile_n must be a multiple of 16 so bf16 activation blocks are tileable.
    req_rows = 16
    req_b = max(1, req_rows // math.gcd(S, req_rows))
    tile_b = min(max(B, req_b), max(req_b, rows_budget // max(S, 1)))
    tile_b = max(req_b, (tile_b // req_b) * req_b)

    def _cdiv(a, b):
        return -(-a // b)

    # shrink tiles until there are >= 4 grid steps when the batch allows it
    # (pipeline depth; on v7x "parallel" shards the grid across 2 TensorCores).
    while _cdiv(B, tile_b) < 4 and tile_b > req_b:
        smaller = max(req_b, ((tile_b // 2) // req_b) * req_b)
        if smaller == tile_b:
            break
        tile_b = smaller
    grid_steps = max(_cdiv(B, tile_b), 2)   # >= 2 steps; pad batch with dummy
    b_pad = grid_steps * tile_b             # sequences (stripped afterwards)
    tile_n = tile_b * S
    n_pad = b_pad * S

    # lane-dense bf16 activation slabs; zero padding keeps pad lanes/rows at 0
    x_pad = jnp.zeros((n_pad, d_pad), act_dtype).at[:N, :D].set(
        x.reshape(N, D).astype(act_dtype))
    eps_pad = jnp.zeros((n_pad, e_pad), act_dtype).at[:N, :E].set(
        eps.reshape(N, E).astype(act_dtype))

    def act_spec(cols):
        return pl.BlockSpec((tile_n, cols), lambda i: (i, 0))

    def resident_spec(a):          # weights: constant block index -> VMEM-resident
        return pl.BlockSpec(a.shape, lambda i: (0, 0))

    kernel = partial(
        causal_vae_kernel,
        tile_b=tile_b, seq=S, num_heads=H, head_dim=head_dim, e_pad=e_pad)

    slab = pl.pallas_call(
        kernel,
        out_shape=jax.ShapeDtypeStruct((n_pad, o_slab), jnp.float32),
        grid_spec=pltpu.PrefetchScalarGridSpec(
            num_scalar_prefetch=0,
            grid=(grid_steps,),
            in_specs=[act_spec(d_pad), act_spec(e_pad)]
                     + [resident_spec(w) for w in weights],
            out_specs=act_spec(o_slab),
            scratch_shapes=[
                pltpu.VMEM((tile_n, E), jnp.float32),            # attn per-head out
                pltpu.VMEM((tile_n, 3 * e_pad), jnp.bfloat16),   # fused q|k|v
                pltpu.VMEM((tile_n, e_pad), jnp.float32),        # post-DAG z stash
                pltpu.VMEM((tile_n, 1), jnp.float32),            # per-token KL rows
            ],
        ),
        compiler_params=pltpu.CompilerParams(
            dimension_semantics=("parallel",),   # v7x: shard tiles over 2 TCs
            vmem_limit_bytes=vmem_limit,
        ),
    )(x_pad, eps_pad, *weights)

    compressed = slab[:N, :O].reshape(B, S, O)
    # KL = -0.5 * mean_tokens( sum_latent(1 + lv - mu^2 - e^lv) ); row sums were
    # written into the kl_col padding column of the output slab.
    kl_loss = -0.5 * jnp.mean(slab[:N, kl_col])

    # DAG constraint tr(e^(A ⊙ A)) - dim  (tiny latent x latent, plain JAX)
    A_mask = jnp.triu(jnp.ones_like(params["A"]), k=1)
    Am = params["A"] * A_mask
    dag_loss = jnp.trace(jax.scipy.linalg.expm(Am * Am)) - E
    # TODO(synk): conditional-prior loss branch (u is not None) not exercised; u defaults to None.
    total_loss = beta * kl_loss + 0.1 * dag_loss
    return compressed, total_loss


if __name__ == "__main__":
    input_dim, output_dim, num_concepts = 16, 16, 4
    B, S = 2, 8

    key = jax.random.PRNGKey(0)
    kp, kx, ke = jax.random.split(key, 3)
    params, dims = init_params(kp, input_dim, output_dim, num_concepts)

    x = jax.random.normal(kx, (B, S, input_dim), jnp.float32)
    eps = jax.random.normal(ke, (B * S, dims["latent"]), jnp.float32)  # reparam noise

    compressed, total_loss = causal_vae_forward(params, dims, x, eps, beta=1.0)
    jax.block_until_ready((compressed, total_loss))

    assert compressed.shape == (B, S, output_dim)
    assert total_loss.shape == ()
    assert bool(jnp.all(jnp.isfinite(compressed)))
    assert bool(jnp.isfinite(total_loss))
    print("KERNEL_OK")
</pallas_src>

<mosaic_0001>
module attributes {stable_mosaic.version = 11 : i64} {
  func.func @causal_vae_kernel(%arg0: i32, %arg1: memref<16x128xbf16, #tpu.memory_space<vmem>>, %arg2: memref<16x128xbf16, #tpu.memory_space<vmem>>, %arg3: memref<128x128xbf16, #tpu.memory_space<vmem>>, %arg4: memref<1x128xf32, #tpu.memory_space<vmem>>, %arg5: memref<1x128xf32, #tpu.memory_space<vmem>>, %arg6: memref<1x128xf32, #tpu.memory_space<vmem>>, %arg7: memref<128x128xbf16, #tpu.memory_space<vmem>>, %arg8: memref<1x128xf32, #tpu.memory_space<vmem>>, %arg9: memref<1x128xf32, #tpu.memory_space<vmem>>, %arg10: memref<1x128xf32, #tpu.memory_space<vmem>>, %arg11: memref<128x256xbf16, #tpu.memory_space<vmem>>, %arg12: memref<1x256xf32, #tpu.memory_space<vmem>>, %arg13: memref<128x128xbf16, #tpu.memory_space<vmem>>, %arg14: memref<128x384xbf16, #tpu.memory_space<vmem>>, %arg15: memref<1x384xf32, #tpu.memory_space<vmem>>, %arg16: memref<32x128xbf16, #tpu.memory_space<vmem>>, %arg17: memref<1x128xf32, #tpu.memory_space<vmem>>, %arg18: memref<1x128xf32, #tpu.memory_space<vmem>>, %arg19: memref<128x128xbf16, #tpu.memory_space<vmem>>, %arg20: memref<1x128xf32, #tpu.memory_space<vmem>>, %arg21: memref<1x128xf32, #tpu.memory_space<vmem>>, %arg22: memref<1x128xf32, #tpu.memory_space<vmem>>, %arg23: memref<128x128xbf16, #tpu.memory_space<vmem>>, %arg24: memref<1x128xf32, #tpu.memory_space<vmem>>, %arg25: memref<1x128xf32, #tpu.memory_space<vmem>>, %arg26: memref<16x128xf32, #tpu.memory_space<vmem>>, %arg27: memref<16x32xf32, #tpu.memory_space<vmem>>, %arg28: memref<16x384xbf16, #tpu.memory_space<vmem>>, %arg29: memref<16x128xf32, #tpu.memory_space<vmem>>, %arg30: memref<16x1xf32, #tpu.memory_space<vmem>>) attributes {dimension_semantics = [#tpu.dimension_semantics<parallel>], iteration_bounds = array<i64: 2>, scalar_prefetch = 0 : i64, scratch_operands = 4 : i64, tpu.core_type = #tpu.core_type<tc>, window_params = [{transform_indices = @transform_0, window_bounds = array<i64: 16, 128>}, {transform_indices = @transform_1, window_bounds = array<i64: 16, 128>}, {pipeline_mode = #tpu.pipeline_mode<synchronous>, transform_indices = @transform_2, window_bounds = array<i64: 128, 128>}, {pipeline_mode = #tpu.pipeline_mode<synchronous>, transform_indices = @transform_3, window_bounds = array<i64: 1, 128>}, {pipeline_mode = #tpu.pipeline_mode<synchronous>, transform_indices = @transform_4, window_bounds = array<i64: 1, 128>}, {pipeline_mode = #tpu.pipeline_mode<synchronous>, transform_indices = @transform_5, window_bounds = array<i64: 1, 128>}, {pipeline_mode = #tpu.pipeline_mode<synchronous>, transform_indices = @transform_6, window_bounds = array<i64: 128, 128>}, {pipeline_mode = #tpu.pipeline_mode<synchronous>, transform_indices = @transform_7, window_bounds = array<i64: 1, 128>}, {pipeline_mode = #tpu.pipeline_mode<synchronous>, transform_indices = @transform_8, window_bounds = array<i64: 1, 128>}, {pipeline_mode = #tpu.pipeline_mode<synchronous>, transform_indices = @transform_9, window_bounds = array<i64: 1, 128>}, {pipeline_mode = #tpu.pipeline_mode<synchronous>, transform_indices = @transform_10, window_bounds = array<i64: 128, 256>}, {pipeline_mode = #tpu.pipeline_mode<synchronous>, transform_indices = @transform_11, window_bounds = array<i64: 1, 256>}, {pipeline_mode = #tpu.pipeline_mode<synchronous>, transform_indices = @transform_12, window_bounds = array<i64: 128, 128>}, {pipeline_mode = #tpu.pipeline_mode<synchronous>, transform_indices = @transform_13, window_bounds = array<i64: 128, 384>}, {pipeline_mode = #tpu.pipeline_mode<synchronous>, transform_indices = @transform_14, window_bounds = array<i64: 1, 384>}, {pipeline_mode = #tpu.pipeline_mode<synchronous>, transform_indices = @transform_15, window_bounds = array<i64: 32, 128>}, {pipeline_mode = #tpu.pipeline_mode<synchronous>, transform_indices = @transform_16, window_bounds = array<i64: 1, 128>}, {pipeline_mode = #tpu.pipeline_mode<synchronous>, transform_indices = @transform_17, window_bounds = array<i64: 1, 128>}, {pipeline_mode = #tpu.pipeline_mode<synchronous>, transform_indices = @transform_18, window_bounds = array<i64: 128, 128>}, {pipeline_mode = #tpu.pipeline_mode<synchronous>, transform_indices = @transform_19, window_bounds = array<i64: 1, 128>}, {pipeline_mode = #tpu.pipeline_mode<synchronous>, transform_indices = @transform_20, window_bounds = array<i64: 1, 128>}, {pipeline_mode = #tpu.pipeline_mode<synchronous>, transform_indices = @transform_21, window_bounds = array<i64: 1, 128>}, {pipeline_mode = #tpu.pipeline_mode<synchronous>, transform_indices = @transform_22, window_bounds = array<i64: 128, 128>}, {pipeline_mode = #tpu.pipeline_mode<synchronous>, transform_indices = @transform_23, window_bounds = array<i64: 1, 128>}, {pipeline_mode = #tpu.pipeline_mode<synchronous>, transform_indices = @transform_24, window_bounds = array<i64: 1, 128>}, {transform_indices = @transform_25, window_bounds = array<i64: 16, 128>}]} {
    %c0 = arith.constant 0 : index
    %c0_0 = arith.constant 0 : index
    %0 = vector.load %arg1[%c0, %c0_0] : memref<16x128xbf16, #tpu.memory_space<vmem>>, vector<16x128xbf16>
    %c0_1 = arith.constant 0 : index
    %c0_2 = arith.constant 0 : index
    %1 = vector.load %arg3[%c0_1, %c0_2] : memref<128x128xbf16, #tpu.memory_space<vmem>>, vector<128x128xbf16>
    %cst = arith.constant dense<0.000000e+00> : vector<16x128xf32>
    %2 = tpu.matmul %0, %1, %cst {dimension_numbers = #tpu.dot_dimension_numbers<[1], [0], [0], [1], [0, 0, 1, 1], [], []>} : vector<16x128xbf16>, vector<128x128xbf16>, vector<16x128xf32> -> vector<16x128xf32>
    %c0_3 = arith.constant 0 : index
    %c0_4 = arith.constant 0 : index
    %3 = vector.load %arg4[%c0_3, %c0_4] : memref<1x128xf32, #tpu.memory_space<vmem>>, vector<1x128xf32>
    %4 = vector.broadcast %3 : vector<1x128xf32> to vector<16x128xf32>
    %5 = arith.addf %2, %4 : vector<16x128xf32>
    %c0_5 = arith.constant 0 : index
    %c0_6 = arith.constant 0 : index
    %6 = vector.load %arg6[%c0_5, %c0_6] : memref<1x128xf32, #tpu.memory_space<vmem>>, vector<1x128xf32>
    %7 = vector.broadcast %6 : vector<1x128xf32> to vector<16x128xf32>
    %8 = arith.mulf %5, %7 : vector<16x128xf32>
    %9 = math.tanh %8 : vector<16x128xf32>
    %c0_7 = arith.constant 0 : index
    %c0_8 = arith.constant 0 : index
    %10 = vector.load %arg5[%c0_7, %c0_8] : memref<1x128xf32, #tpu.memory_space<vmem>>, vector<1x128xf32>
    %11 = vector.broadcast %10 : vector<1x128xf32> to vector<16x128xf32>
    %12 = arith.mulf %9, %11 : vector<16x128xf32>
    %13 = arith.truncf %12 : vector<16x128xf32> to vector<16x128xbf16>
    %c0_9 = arith.constant 0 : index
    %c0_10 = arith.constant 0 : index
    %14 = vector.load %arg7[%c0_9, %c0_10] : memref<128x128xbf16, #tpu.memory_space<vmem>>, vector<128x128xbf16>
    %cst_11 = arith.constant dense<0.000000e+00> : vector<16x128xf32>
    %15 = tpu.matmul %13, %14, %cst_11 {dimension_numbers = #tpu.dot_dimension_numbers<[1], [0], [0], [1], [0, 0, 1, 1], [], []>} : vector<16x128xbf16>, vector<128x128xbf16>, vector<16x128xf32> -> vector<16x128xf32>
    %c0_12 = arith.constant 0 : index
    %c0_13 = arith.constant 0 : index
    %16 = vector.load %arg8[%c0_12, %c0_13] : memref<1x128xf32, #tpu.memory_space<vmem>>, vector<1x128xf32>
    %17 = vector.broadcast %16 : vector<1x128xf32> to vector<16x128xf32>
    %18 = arith.addf %15, %17 : vector<16x128xf32>
    %c0_14 = arith.constant 0 : index
    %c0_15 = arith.constant 0 : index
    %19 = vector.load %arg10[%c0_14, %c0_15] : memref<1x128xf32, #tpu.memory_space<vmem>>, vector<1x128xf32>
    %20 = vector.broadcast %19 : vector<1x128xf32> to vector<16x128xf32>
    %21 = arith.mulf %18, %20 : vector<16x128xf32>
    %22 = math.tanh %21 : vector<16x128xf32>
    %c0_16 = arith.constant 0 : index
    %c0_17 = arith.constant 0 : index
    %23 = vector.load %arg9[%c0_16, %c0_17] : memref<1x128xf32, #tpu.memory_space<vmem>>, vector<1x128xf32>
    %24 = vector.broadcast %23 : vector<1x128xf32> to vector<16x128xf32>
    %25 = arith.mulf %22, %24 : vector<16x128xf32>
    %26 = arith.truncf %25 : vector<16x128xf32> to vector<16x128xbf16>
    %c0_18 = arith.constant 0 : index
    %c0_19 = arith.constant 0 : index
    %27 = vector.load %arg11[%c0_18, %c0_19] : memref<128x256xbf16, #tpu.memory_space<vmem>>, vector<128x256xbf16>
    %cst_20 = arith.constant dense<0.000000e+00> : vector<16x256xf32>
    %28 = tpu.matmul %26, %27, %cst_20 {dimension_numbers = #tpu.dot_dimension_numbers<[1], [0], [0], [1], [0, 0, 1, 1], [], []>} : vector<16x128xbf16>, vector<128x256xbf16>, vector<16x256xf32> -> vector<16x256xf32>
    %c0_21 = arith.constant 0 : index
    %c0_22 = arith.constant 0 : index
    %29 = vector.load %arg12[%c0_21, %c0_22] : memref<1x256xf32, #tpu.memory_space<vmem>>, vector<1x256xf32>
    %30 = vector.broadcast %29 : vector<1x256xf32> to vector<16x256xf32>
    %31 = arith.addf %28, %30 : vector<16x256xf32>
    %32 = vector.extract_strided_slice %31 {offsets = [0, 0], sizes = [16, 128], strides = [1, 1]} : vector<16x256xf32> to vector<16x128xf32>
    %33 = vector.extract_strided_slice %31 {offsets = [0, 128], sizes = [16, 128], strides = [1, 1]} : vector<16x256xf32> to vector<16x128xf32>
    %cst_23 = arith.constant 5.000000e-01 : f32
    %34 = vector.broadcast %cst_23 : f32 to vector<16x128xf32>
    %35 = arith.mulf %34, %33 : vector<16x128xf32>
    %36 = math.exp %35 : vector<16x128xf32>
    %c0_24 = arith.constant 0 : index
    %c0_25 = arith.constant 0 : index
    %37 = vector.load %arg2[%c0_24, %c0_25] : memref<16x128xbf16, #tpu.memory_space<vmem>>, vector<16x128xbf16>
    %38 = arith.extf %37 : vector<16x128xbf16> to vector<16x128xf32>
    %39 = arith.mulf %38, %36 : vector<16x128xf32>
    %40 = arith.addf %32, %39 : vector<16x128xf32>
    %cst_26 = arith.constant 1.000000e+00 : f32
    %41 = vector.broadcast %cst_26 : f32 to vector<16x128xf32>
    %42 = arith.addf %41, %33 : vector<16x128xf32>
    %43 = arith.mulf %32, %32 : vector<16x128xf32>
    %44 = arith.subf %42, %43 : vector<16x128xf32>
    %45 = arith.mulf %36, %36 : vector<16x128xf32>
    %46 = arith.subf %44, %45 : vector<16x128xf32>
    %cst_27 = arith.constant dense<0.000000e+00> : vector<16xf32>
    %47 = vector.multi_reduction <add>, %46, %cst_27 [1] : vector<16x128xf32> to vector<16xf32>
    %48 = vector.shape_cast %47 : vector<16xf32> to vector<16x1xf32>
    %c0_28 = arith.constant 0 : index
    %c0_29 = arith.constant 0 : index
    %49 = vector.load %arg30[%c0_28, %c0_29] : memref<16x1xf32, #tpu.memory_space<vmem>>, vector<16x1xf32>
    tpu.vector_store %arg30[%c0_28, %c0_29], %48 {strides = array<i32>} : memref<16x1xf32, #tpu.memory_space<vmem>>, vector<16x1xf32>,
    %50 = arith.truncf %40 : vector<16x128xf32> to vector<16x128xbf16>
    %c0_30 = arith.constant 0 : index
    %c0_31 = arith.constant 0 : index
    %51 = vector.load %arg13[%c0_30, %c0_31] : memref<128x128xbf16, #tpu.memory_space<vmem>>, vector<128x128xbf16>
    %cst_32 = arith.constant dense<0.000000e+00> : vector<16x128xf32>
    %52 = tpu.matmul %50, %51, %cst_32 {dimension_numbers = #tpu.dot_dimension_numbers<[1], [0], [0], [1], [0, 0, 1, 1], [], []>} : vector<16x128xbf16>, vector<128x128xbf16>, vector<16x128xf32> -> vector<16x128xf32>
    %53 = arith.truncf %52 : vector<16x128xf32> to vector<16x128xbf16>
    %c0_33 = arith.constant 0 : index
    %c0_34 = arith.constant 0 : index
    %54 = vector.load %arg14[%c0_33, %c0_34] : memref<128x384xbf16, #tpu.memory_space<vmem>>, vector<128x384xbf16>
    %cst_35 = arith.constant dense<0.000000e+00> : vector<16x384xf32>
    %55 = tpu.matmul %53, %54, %cst_35 {dimension_numbers = #tpu.dot_dimension_numbers<[1], [0], [0], [1], [0, 0, 1, 1], [], []>} : vector<16x128xbf16>, vector<128x384xbf16>, vector<16x384xf32> -> vector<16x384xf32>
    %c0_36 = arith.constant 0 : index
    %c0_37 = arith.constant 0 : index
    %56 = vector.load %arg15[%c0_36, %c0_37] : memref<1x384xf32, #tpu.memory_space<vmem>>, vector<1x384xf32>
    %57 = vector.broadcast %56 : vector<1x384xf32> to vector<16x384xf32>
    %58 = arith.addf %55, %57 : vector<16x384xf32>
    %59 = arith.truncf %58 : vector<16x384xf32> to vector<16x384xbf16>
    %c0_38 = arith.constant 0 : index
    %c0_39 = arith.constant 0 : index
    %60 = vector.load %arg28[%c0_38, %c0_39] : memref<16x384xbf16, #tpu.memory_space<vmem>>, vector<16x384xbf16>
    tpu.vector_store %arg28[%c0_38, %c0_39], %59 {strides = array<i32>} : memref<16x384xbf16, #tpu.memory_space<vmem>>, vector<16x384xbf16>,
    %c0_40 = arith.constant 0 : index
    %c0_41 = arith.constant 0 : index
    %61 = vector.load %arg29[%c0_40, %c0_41] : memref<16x128xf32, #tpu.memory_space<vmem>>, vector<16x128xf32>
    tpu.vector_store %arg29[%c0_40, %c0_41], %52 {strides = array<i32>} : memref<16x128xf32, #tpu.memory_space<vmem>>, vector<16x128xf32>,
    %c0_42 = arith.constant 0 : index
    %c0_43 = arith.constant 0 : index
    %62 = vector.load %arg28[%c0_42, %c0_43] : memref<16x384xbf16, #tpu.memory_space<vmem>>, vector<8x8xbf16>
    %c0_44 = arith.constant 0 : index
    %c128 = arith.constant 128 : index
    %63 = vector.load %arg28[%c0_44, %c128] : memref<16x384xbf16, #tpu.memory_space<vmem>>, vector<8x8xbf16>
    %c0_45 = arith.constant 0 : index
    %c256 = arith.constant 256 : index
    %64 = vector.load %arg28[%c0_45, %c256] : memref<16x384xbf16, #tpu.memory_space<vmem>>, vector<8x8xbf16>
    %cst_46 = arith.constant dense<0.000000e+00> : vector<8x8xf32>
    %65 = tpu.matmul %62, %63, %cst_46 {dimension_numbers = #tpu.dot_dimension_numbers<[1], [1], [0], [0], [0, 0, 1, 0], [], []>} : vector<8x8xbf16>, vector<8x8xbf16>, vector<8x8xf32> -> vector<8x8xf32>
    %cst_47 = arith.constant 0.353553385 : f32
    %66 = vector.broadcast %cst_47 : f32 to vector<8x8xf32>
    %67 = arith.mulf %65, %66 : vector<8x8xf32>
    %cst_48 = arith.constant dense<0xFF800000> : vector<8xf32>
    %68 = vector.multi_reduction <maximumf>, %67, %cst_48 [1] : vector<8x8xf32> to vector<8xf32>
    %69 = vector.shape_cast %68 : vector<8xf32> to vector<8x1xf32>
    %70 = vector.broadcast %69 : vector<8x1xf32> to vector<8x8xf32>
    %71 = arith.subf %67, %70 : vector<8x8xf32>
    %72 = math.exp %71 : vector<8x8xf32>
    %cst_49 = arith.constant dense<0.000000e+00> : vector<8xf32>
    %73 = vector.multi_reduction <add>, %72, %cst_49 [1] : vector<8x8xf32> to vector<8xf32>
    %74 = vector.shape_cast %73 : vector<8xf32> to vector<8x1xf32>
    %75 = tpu.reciprocal %74 {approx = true} : vector<8x1xf32> -> vector<8x1xf32>
    %76 = vector.broadcast %75 : vector<8x1xf32> to vector<8x8xf32>
    %77 = arith.mulf %72, %76 : vector<8x8xf32>
    %78 = arith.truncf %77 : vector<8x8xf32> to vector<8x8xbf16>
    %cst_50 = arith.constant dense<0.000000e+00> : vector<8x8xf32>
    %79 = tpu.matmul %78, %64, %cst_50 {dimension_numbers = #tpu.dot_dimension_numbers<[1], [0], [0], [1], [0, 0, 1, 1], [], []>} : vector<8x8xbf16>, vector<8x8xbf16>, vector<8x8xf32> -> vector<8x8xf32>
    %c0_51 = arith.constant 0 : index
    %c0_52 = arith.constant 0 : index
    %80 = vector.load %arg27[%c0_51, %c0_52] : memref<16x32xf32, #tpu.memory_space<vmem>>, vector<8x8xf32>
    tpu.vector_store %arg27[%c0_51, %c0_52], %79 {strides = array<i32>} : memref<16x32xf32, #tpu.memory_space<vmem>>, vector<8x8xf32>,
    %c0_53 = arith.constant 0 : index
    %c8 = arith.constant 8 : index
    %81 = vector.load %arg28[%c0_53, %c8] : memref<16x384xbf16, #tpu.memory_space<vmem>>, vector<8x8xbf16>
    %c0_54 = arith.constant 0 : index
    %c136 = arith.constant 136 : index
    %82 = vector.load %arg28[%c0_54, %c136] : memref<16x384xbf16, #tpu.memory_space<vmem>>, vector<8x8xbf16>
    %c0_55 = arith.constant 0 : index
    %c264 = arith.constant 264 : index
    %83 = vector.load %arg28[%c0_55, %c264] : memref<16x384xbf16, #tpu.memory_space<vmem>>, vector<8x8xbf16>
    %cst_56 = arith.constant dense<0.000000e+00> : vector<8x8xf32>
    %84 = tpu.matmul %81, %82, %cst_56 {dimension_numbers = #tpu.dot_dimension_numbers<[1], [1], [0], [0], [0, 0, 1, 0], [], []>} : vector<8x8xbf16>, vector<8x8xbf16>, vector<8x8xf32> -> vector<8x8xf32>
    %cst_57 = arith.constant 0.353553385 : f32
    %85 = vector.broadcast %cst_57 : f32 to vector<8x8xf32>
    %86 = arith.mulf %84, %85 : vector<8x8xf32>
    %cst_58 = arith.constant dense<0xFF800000> : vector<8xf32>
    %87 = vector.multi_reduction <maximumf>, %86, %cst_58 [1] : vector<8x8xf32> to vector<8xf32>
    %88 = vector.shape_cast %87 : vector<8xf32> to vector<8x1xf32>
    %89 = vector.broadcast %88 : vector<8x1xf32> to vector<8x8xf32>
    %90 = arith.subf %86, %89 : vector<8x8xf32>
    %91 = math.exp %90 : vector<8x8xf32>
    %cst_59 = arith.constant dense<0.000000e+00> : vector<8xf32>
    %92 = vector.multi_reduction <add>, %91, %cst_59 [1] : vector<8x8xf32> to vector<8xf32>
    %93 = vector.shape_cast %92 : vector<8xf32> to vector<8x1xf32>
    %94 = tpu.reciprocal %93 {approx = true} : vector<8x1xf32> -> vector<8x1xf32>
    %95 = vector.broadcast %94 : vector<8x1xf32> to vector<8x8xf32>
    %96 = arith.mulf %91, %95 : vector<8x8xf32>
    %97 = arith.truncf %96 : vector<8x8xf32> to vector<8x8xbf16>
    %cst_60 = arith.constant dense<0.000000e+00> : vector<8x8xf32>
    %98 = tpu.matmul %97, %83, %cst_60 {dimension_numbers = #tpu.dot_dimension_numbers<[1], [0], [0], [1], [0, 0, 1, 1], [], []>} : vector<8x8xbf16>, vector<8x8xbf16>, vector<8x8xf32> -> vector<8x8xf32>
    %c0_61 = arith.constant 0 : index
    %c8_62 = arith.constant 8 : index
    %99 = vector.load %arg27[%c0_61, %c8_62] : memref<16x32xf32, #tpu.memory_space<vmem>>, vector<8x8xf32>
    tpu.vector_store %arg27[%c0_61, %c8_62], %98 {strides = array<i32>} : memref<16x32xf32, #tpu.memory_space<vmem>>, vector<8x8xf32>,
    %c0_63 = arith.constant 0 : index
    %c16 = arith.constant 16 : index
    %100 = vector.load %arg28[%c0_63, %c16] : memref<16x384xbf16, #tpu.memory_space<vmem>>, vector<8x8xbf16>
    %c0_64 = arith.constant 0 : index
    %c144 = arith.constant 144 : index
    %101 = vector.load %arg28[%c0_64, %c144] : memref<16x384xbf16, #tpu.memory_space<vmem>>, vector<8x8xbf16>
    %c0_65 = arith.constant 0 : index
    %c272 = arith.constant 272 : index
    %102 = vector.load %arg28[%c0_65, %c272] : memref<16x384xbf16, #tpu.memory_space<vmem>>, vector<8x8xbf16>
    %cst_66 = arith.constant dense<0.000000e+00> : vector<8x8xf32>
    %103 = tpu.matmul %100, %101, %cst_66 {dimension_numbers = #tpu.dot_dimension_numbers<[1], [1], [0], [0], [0, 0, 1, 0], [], []>} : vector<8x8xbf16>, vector<8x8xbf16>, vector<8x8xf32> -> vector<8x8xf32>
    %cst_67 = arith.constant 0.353553385 : f32
    %104 = vector.broadcast %cst_67 : f32 to vector<8x8xf32>
    %105 = arith.mulf %103, %104 : vector<8x8xf32>
    %cst_68 = arith.constant dense<0xFF800000> : vector<8xf32>
    %106 = vector.multi_reduction <maximumf>, %105, %cst_68 [1] : vector<8x8xf32> to vector<8xf32>
    %107 = vector.shape_cast %106 : vector<8xf32> to vector<8x1xf32>
    %108 = vector.broadcast %107 : vector<8x1xf32> to vector<8x8xf32>
    %109 = arith.subf %105, %108 : vector<8x8xf32>
    %110 = math.exp %109 : vector<8x8xf32>
    %cst_69 = arith.constant dense<0.000000e+00> : vector<8xf32>
    %111 = vector.multi_reduction <add>, %110, %cst_69 [1] : vector<8x8xf32> to vector<8xf32>
    %112 = vector.shape_cast %111 : vector<8xf32> to vector<8x1xf32>
    %113 = tpu.reciprocal %112 {approx = true} : vector<8x1xf32> -> vector<8x1xf32>
    %114 = vector.broadcast %113 : vector<8x1xf32> to vector<8x8xf32>
    %115 = arith.mulf %110, %114 : vector<8x8xf32>
    %116 = arith.truncf %115 : vector<8x8xf32> to vector<8x8xbf16>
    %cst_70 = arith.constant dense<0.000000e+00> : vector<8x8xf32>
    %117 = tpu.matmul %116, %102, %cst_70 {dimension_numbers = #tpu.dot_dimension_numbers<[1], [0], [0], [1], [0, 0, 1, 1], [], []>} : vector<8x8xbf16>, vector<8x8xbf16>, vector<8x8xf32> -> vector<8x8xf32>
    %c0_71 = arith.constant 0 : index
    %c16_72 = arith.constant 16 : index
    %118 = vector.load %arg27[%c0_71, %c16_72] : memref<16x32xf32, #tpu.memory_space<vmem>>, vector<8x8xf32>
    tpu.vector_store %arg27[%c0_71, %c16_72], %117 {strides = array<i32>} : memref<16x32xf32, #tpu.memory_space<vmem>>, vector<8x8xf32>,
    %c0_73 = arith.constant 0 : index
    %c24 = arith.constant 24 : index
    %119 = vector.load %arg28[%c0_73, %c24] : memref<16x384xbf16, #tpu.memory_space<vmem>>, vector<8x8xbf16>
    %c0_74 = arith.constant 0 : index
    %c152 = arith.constant 152 : index
    %120 = vector.load %arg28[%c0_74, %c152] : memref<16x384xbf16, #tpu.memory_space<vmem>>, vector<8x8xbf16>
    %c0_75 = arith.constant 0 : index
    %c280 = arith.constant 280 : index
    %121 = vector.load %arg28[%c0_75, %c280] : memref<16x384xbf16, #tpu.memory_space<vmem>>, vector<8x8xbf16>
    %cst_76 = arith.constant dense<0.000000e+00> : vector<8x8xf32>
    %122 = tpu.matmul %119, %120, %cst_76 {dimension_numbers = #tpu.dot_dimension_numbers<[1], [1], [0], [0], [0, 0, 1, 0], [], []>} : vector<8x8xbf16>, vector<8x8xbf16>, vector<8x8xf32> -> vector<8x8xf32>
    %cst_77 = arith.constant 0.353553385 : f32
    %123 = vector.broadcast %cst_77 : f32 to vector<8x8xf32>
    %124 = arith.mulf %122, %123 : vector<8x8xf32>
    %cst_78 = arith.constant dense<0xFF800000> : vector<8xf32>
    %125 = vector.multi_reduction <maximumf>, %124, %cst_78 [1] : vector<8x8xf32> to vector<8xf32>
    %126 = vector.shape_cast %125 : vector<8xf32> to vector<8x1xf32>
    %127 = vector.broadcast %126 : vector<8x1xf32> to vector<8x8xf32>
    %128 = arith.subf %124, %127 : vector<8x8xf32>
    %129 = math.exp %128 : vector<8x8xf32>
    %cst_79 = arith.constant dense<0.000000e+00> : vector<8xf32>
    %130 = vector.multi_reduction <add>, %129, %cst_79 [1] : vector<8x8xf32> to vector<8xf32>
    %131 = vector.shape_cast %130 : vector<8xf32> to vector<8x1xf32>
    %132 = tpu.reciprocal %131 {approx = true} : vector<8x1xf32> -> vector<8x1xf32>
    %133 = vector.broadcast %132 : vector<8x1xf32> to vector<8x8xf32>
    %134 = arith.mulf %129, %133 : vector<8x8xf32>
    %135 = arith.truncf %134 : vector<8x8xf32> to vector<8x8xbf16>
    %cst_80 = arith.constant dense<0.000000e+00> : vector<8x8xf32>
    %136 = tpu.matmul %135, %121, %cst_80 {dimension_numbers = #tpu.dot_dimension_numbers<[1], [0], [0], [1], [0, 0, 1, 1], [], []>} : vector<8x8xbf16>, vector<8x8xbf16>, vector<8x8xf32> -> vector<8x8xf32>
    %c0_81 = arith.constant 0 : index
    %c24_82 = arith.constant 24 : index
    %137 = vector.load %arg27[%c0_81, %c24_82] : memref<16x32xf32, #tpu.memory_space<vmem>>, vector<8x8xf32>
    tpu.vector_store %arg27[%c0_81, %c24_82], %136 {strides = array<i32>} : memref<16x32xf32, #tpu.memory_space<vmem>>, vector<8x8xf32>,
    %c8_83 = arith.constant 8 : index
    %c0_84 = arith.constant 0 : index
    %138 = vector.load %arg28[%c8_83, %c0_84] : memref<16x384xbf16, #tpu.memory_space<vmem>>, vector<8x8xbf16>
    %c8_85 = arith.constant 8 : index
    %c128_86 = arith.constant 128 : index
    %139 = vector.load %arg28[%c8_85, %c128_86] : memref<16x384xbf16, #tpu.memory_space<vmem>>, vector<8x8xbf16>
    %c8_87 = arith.constant 8 : index
    %c256_88 = arith.constant 256 : index
    %140 = vector.load %arg28[%c8_87, %c256_88] : memref<16x384xbf16, #tpu.memory_space<vmem>>, vector<8x8xbf16>
    %cst_89 = arith.constant dense<0.000000e+00> : vector<8x8xf32>
    %141 = tpu.matmul %138, %139, %cst_89 {dimension_numbers = #tpu.dot_dimension_numbers<[1], [1], [0], [0], [0, 0, 1, 0], [], []>} : vector<8x8xbf16>, vector<8x8xbf16>, vector<8x8xf32> -> vector<8x8xf32>
    %cst_90 = arith.constant 0.353553385 : f32
    %142 = vector.broadcast %cst_90 : f32 to vector<8x8xf32>
    %143 = arith.mulf %141, %142 : vector<8x8xf32>
    %cst_91 = arith.constant dense<0xFF800000> : vector<8xf32>
    %144 = vector.multi_reduction <maximumf>, %143, %cst_91 [1] : vector<8x8xf32> to vector<8xf32>
    %145 = vector.shape_cast %144 : vector<8xf32> to vector<8x1xf32>
    %146 = vector.broadcast %145 : vector<8x1xf32> to vector<8x8xf32>
    %147 = arith.subf %143, %146 : vector<8x8xf32>
    %148 = math.exp %147 : vector<8x8xf32>
    %cst_92 = arith.constant dense<0.000000e+00> : vector<8xf32>
    %149 = vector.multi_reduction <add>, %148, %cst_92 [1] : vector<8x8xf32> to vector<8xf32>
    %150 = vector.shape_cast %149 : vector<8xf32> to vector<8x1xf32>
    %151 = tpu.reciprocal %150 {approx = true} : vector<8x1xf32> -> vector<8x1xf32>
    %152 = vector.broadcast %151 : vector<8x1xf32> to vector<8x8xf32>
    %153 = arith.mulf %148, %152 : vector<8x8xf32>
    %154 = arith.truncf %153 : vector<8x8xf32> to vector<8x8xbf16>
    %cst_93 = arith.constant dense<0.000000e+00> : vector<8x8xf32>
    %155 = tpu.matmul %154, %140, %cst_93 {dimension_numbers = #tpu.dot_dimension_numbers<[1], [0], [0], [1], [0, 0, 1, 1], [], []>} : vector<8x8xbf16>, vector<8x8xbf16>, vector<8x8xf32> -> vector<8x8xf32>
    %c8_94 = arith.constant 8 : index
    %c0_95 = arith.constant 0 : index
    %156 = vector.load %arg27[%c8_94, %c0_95] : memref<16x32xf32, #tpu.memory_space<vmem>>, vector<8x8xf32>
    tpu.vector_store %arg27[%c8_94, %c0_95], %155 {strides = array<i32>} : memref<16x32xf32, #tpu.memory_space<vmem>>, vector<8x8xf32>,
    %c8_96 = arith.constant 8 : index
    %c8_97 = arith.constant 8 : index
    %157 = vector.load %arg28[%c8_96, %c8_97] : memref<16x384xbf16, #tpu.memory_space<vmem>>, vector<8x8xbf16>
    %c8_98 = arith.constant 8 : index
    %c136_99 = arith.constant 136 : index
    %158 = vector.load %arg28[%c8_98, %c136_99] : memref<16x384xbf16, #tpu.memory_space<vmem>>, vector<8x8xbf16>
    %c8_100 = arith.constant 8 : index
    %c264_101 = arith.constant 264 : index
    %159 = vector.load %arg28[%c8_100, %c264_101] : memref<16x384xbf16, #tpu.memory_space<vmem>>, vector<8x8xbf16>
    %cst_102 = arith.constant dense<0.000000e+00> : vector<8x8xf32>
    %160 = tpu.matmul %157, %158, %cst_102 {dimension_numbers = #tpu.dot_dimension_numbers<[1], [1], [0], [0], [0, 0, 1, 0], [], []>} : vector<8x8xbf16>, vector<8x8xbf16>, vector<8x8xf32> -> vector<8x8xf32>
    %cst_103 = arith.constant 0.353553385 : f32
    %161 = vector.broadcast %cst_103 : f32 to vector<8x8xf32>
    %162 = arith.mulf %160, %161 : vector<8x8xf32>
    %cst_104 = arith.constant dense<0xFF800000> : vector<8xf32>
    %163 = vector.multi_reduction <maximumf>, %162, %cst_104 [1] : vector<8x8xf32> to vector<8xf32>
    %164 = vector.shape_cast %163 : vector<8xf32> to vector<8x1xf32>
    %165 = vector.broadcast %164 : vector<8x1xf32> to vector<8x8xf32>
    %166 = arith.subf %162, %165 : vector<8x8xf32>
    %167 = math.exp %166 : vector<8x8xf32>
    %cst_105 = arith.constant dense<0.000000e+00> : vector<8xf32>
    %168 = vector.multi_reduction <add>, %167, %cst_105 [1] : vector<8x8xf32> to vector<8xf32>
    %169 = vector.shape_cast %168 : vector<8xf32> to vector<8x1xf32>
    %170 = tpu.reciprocal %169 {approx = true} : vector<8x1xf32> -> vector<8x1xf32>
    %171 = vector.broadcast %170 : vector<8x1xf32> to vector<8x8xf32>
    %172 = arith.mulf %167, %171 : vector<8x8xf32>
    %173 = arith.truncf %172 : vector<8x8xf32> to vector<8x8xbf16>
    %cst_106 = arith.constant dense<0.000000e+00> : vector<8x8xf32>
    %174 = tpu.matmul %173, %159, %cst_106 {dimension_numbers = #tpu.dot_dimension_numbers<[1], [0], [0], [1], [0, 0, 1, 1], [], []>} : vector<8x8xbf16>, vector<8x8xbf16>, vector<8x8xf32> -> vector<8x8xf32>
    %c8_107 = arith.constant 8 : index
    %c8_108 = arith.constant 8 : index
    %175 = vector.load %arg27[%c8_107, %c8_108] : memref<16x32xf32, #tpu.memory_space<vmem>>, vector<8x8xf32>
    tpu.vector_store %arg27[%c8_107, %c8_108], %174 {strides = array<i32>} : memref<16x32xf32, #tpu.memory_space<vmem>>, vector<8x8xf32>,
    %c8_109 = arith.constant 8 : index
    %c16_110 = arith.constant 16 : index
    %176 = vector.load %arg28[%c8_109, %c16_110] : memref<16x384xbf16, #tpu.memory_space<vmem>>, vector<8x8xbf16>
    %c8_111 = arith.constant 8 : index
    %c144_112 = arith.constant 144 : index
    %177 = vector.load %arg28[%c8_111, %c144_112] : memref<16x384xbf16, #tpu.memory_space<vmem>>, vector<8x8xbf16>
    %c8_113 = arith.constant 8 : index
    %c272_114 = arith.constant 272 : index
    %178 = vector.load %arg28[%c8_113, %c272_114] : memref<16x384xbf16, #tpu.memory_space<vmem>>, vector<8x8xbf16>
    %cst_115 = arith.constant dense<0.000000e+00> : vector<8x8xf32>
    %179 = tpu.matmul %176, %177, %cst_115 {dimension_numbers = #tpu.dot_dimension_numbers<[1], [1], [0], [0], [0, 0, 1, 0], [], []>} : vector<8x8xbf16>, vector<8x8xbf16>, vector<8x8xf32> -> vector<8x8xf32>
    %cst_116 = arith.constant 0.353553385 : f32
    %180 = vector.broadcast %cst_116 : f32 to vector<8x8xf32>
    %181 = arith.mulf %179, %180 : vector<8x8xf32>
    %cst_117 = arith.constant dense<0xFF800000> : vector<8xf32>
    %182 = vector.multi_reduction <maximumf>, %181, %cst_117 [1] : vector<8x8xf32> to vector<8xf32>
    %183 = vector.shape_cast %182 : vector<8xf32> to vector<8x1xf32>
    %184 = vector.broadcast %183 : vector<8x1xf32> to vector<8x8xf32>
    %185 = arith.subf %181, %184 : vector<8x8xf32>
    %186 = math.exp %185 : vector<8x8xf32>
    %cst_118 = arith.constant dense<0.000000e+00> : vector<8xf32>
    %187 = vector.multi_reduction <add>, %186, %cst_118 [1] : vector<8x8xf32> to vector<8xf32>
    %188 = vector.shape_cast %187 : vector<8xf32> to vector<8x1xf32>
    %189 = tpu.reciprocal %188 {approx = true} : vector<8x1xf32> -> vector<8x1xf32>
    %190 = vector.broadcast %189 : vector<8x1xf32> to vector<8x8xf32>
    %191 = arith.mulf %186, %190 : vector<8x8xf32>
    %192 = arith.truncf %191 : vector<8x8xf32> to vector<8x8xbf16>
    %cst_119 = arith.constant dense<0.000000e+00> : vector<8x8xf32>
    %193 = tpu.matmul %192, %178, %cst_119 {dimension_numbers = #tpu.dot_dimension_numbers<[1], [0], [0], [1], [0, 0, 1, 1], [], []>} : vector<8x8xbf16>, vector<8x8xbf16>, vector<8x8xf32> -> vector<8x8xf32>
    %c8_120 = arith.constant 8 : index
    %c16_121 = arith.constant 16 : index
    %194 = vector.load %arg27[%c8_120, %c16_121] : memref<16x32xf32, #tpu.memory_space<vmem>>, vector<8x8xf32>
    tpu.vector_store %arg27[%c8_120, %c16_121], %193 {strides = array<i32>} : memref<16x32xf32, #tpu.memory_space<vmem>>, vector<8x8xf32>,
    %c8_122 = arith.constant 8 : index
    %c24_123 = arith.constant 24 : index
    %195 = vector.load %arg28[%c8_122, %c24_123] : memref<16x384xbf16, #tpu.memory_space<vmem>>, vector<8x8xbf16>
    %c8_124 = arith.constant 8 : index
    %c152_125 = arith.constant 152 : index
    %196 = vector.load %arg28[%c8_124, %c152_125] : memref<16x384xbf16, #tpu.memory_space<vmem>>, vector<8x8xbf16>
    %c8_126 = arith.constant 8 : index
    %c280_127 = arith.constant 280 : index
    %197 = vector.load %arg28[%c8_126, %c280_127] : memref<16x384xbf16, #tpu.memory_space<vmem>>, vector<8x8xbf16>
    %cst_128 = arith.constant dense<0.000000e+00> : vector<8x8xf32>
    %198 = tpu.matmul %195, %196, %cst_128 {dimension_numbers = #tpu.dot_dimension_numbers<[1], [1], [0], [0], [0, 0, 1, 0], [], []>} : vector<8x8xbf16>, vector<8x8xbf16>, vector<8x8xf32> -> vector<8x8xf32>
    %cst_129 = arith.constant 0.353553385 : f32
    %199 = vector.broadcast %cst_129 : f32 to vector<8x8xf32>
    %200 = arith.mulf %198, %199 : vector<8x8xf32>
    %cst_130 = arith.constant dense<0xFF800000> : vector<8xf32>
    %201 = vector.multi_reduction <maximumf>, %200, %cst_130 [1] : vector<8x8xf32> to vector<8xf32>
    %202 = vector.shape_cast %201 : vector<8xf32> to vector<8x1xf32>
    %203 = vector.broadcast %202 : vector<8x1xf32> to vector<8x8xf32>
    %204 = arith.subf %200, %203 : vector<8x8xf32>
    %205 = math.exp %204 : vector<8x8xf32>
    %cst_131 = arith.constant dense<0.000000e+00> : vector<8xf32>
    %206 = vector.multi_reduction <add>, %205, %cst_131 [1] : vector<8x8xf32> to vector<8xf32>
    %207 = vector.shape_cast %206 : vector<8xf32> to vector<8x1xf32>
    %208 = tpu.reciprocal %207 {approx = true} : vector<8x1xf32> -> vector<8x1xf32>
    %209 = vector.broadcast %208 : vector<8x1xf32> to vector<8x8xf32>
    %210 = arith.mulf %205, %209 : vector<8x8xf32>
    %211 = arith.truncf %210 : vector<8x8xf32> to vector<8x8xbf16>
    %cst_132 = arith.constant dense<0.000000e+00> : vector<8x8xf32>
    %212 = tpu.matmul %211, %197, %cst_132 {dimension_numbers = #tpu.dot_dimension_numbers<[1], [0], [0], [1], [0, 0, 1, 1], [], []>} : vector<8x8xbf16>, vector<8x8xbf16>, vector<8x8xf32> -> vector<8x8xf32>
    %c8_133 = arith.constant 8 : index
    %c24_134 = arith.constant 24 : index
    %213 = vector.load %arg27[%c8_133, %c24_134] : memref<16x32xf32, #tpu.memory_space<vmem>>, vector<8x8xf32>
    tpu.vector_store %arg27[%c8_133, %c24_134], %212 {strides = array<i32>} : memref<16x32xf32, #tpu.memory_space<vmem>>, vector<8x8xf32>,
    %c0_135 = arith.constant 0 : index
    %c0_136 = arith.constant 0 : index
    %214 = vector.load %arg29[%c0_135, %c0_136] : memref<16x128xf32, #tpu.memory_space<vmem>>, vector<16x128xf32>
    %c0_137 = arith.constant 0 : index
    %c0_138 = arith.constant 0 : index
    %215 = vector.load %arg27[%c0_137, %c0_138] : memref<16x32xf32, #tpu.memory_space<vmem>>, vector<16x32xf32>
    %216 = arith.truncf %215 : vector<16x32xf32> to vector<16x32xbf16>
    %c0_139 = arith.constant 0 : index
    %c0_140 = arith.constant 0 : index
    %217 = vector.load %arg16[%c0_139, %c0_140] : memref<32x128xbf16, #tpu.memory_space<vmem>>, vector<32x128xbf16>
    %cst_141 = arith.constant dense<0.000000e+00> : vector<16x128xf32>
    %218 = tpu.matmul %216, %217, %cst_141 {dimension_numbers = #tpu.dot_dimension_numbers<[1], [0], [0], [1], [0, 0, 1, 1], [], []>} : vector<16x32xbf16>, vector<32x128xbf16>, vector<16x128xf32> -> vector<16x128xf32>
    %c0_142 = arith.constant 0 : index
    %c0_143 = arith.constant 0 : index
    %219 = vector.load %arg17[%c0_142, %c0_143] : memref<1x128xf32, #tpu.memory_space<vmem>>, vector<1x128xf32>
    %220 = vector.broadcast %219 : vector<1x128xf32> to vector<16x128xf32>
    %221 = arith.addf %218, %220 : vector<16x128xf32>
    %222 = arith.addf %214, %221 : vector<16x128xf32>
    %c0_144 = arith.constant 0 : index
    %c0_145 = arith.constant 0 : index
    %223 = vector.load %arg18[%c0_144, %c0_145] : memref<1x128xf32, #tpu.memory_space<vmem>>, vector<1x128xf32>
    %224 = vector.broadcast %223 : vector<1x128xf32> to vector<16x128xf32>
    %225 = arith.mulf %222, %224 : vector<16x128xf32>
    %226 = arith.truncf %225 : vector<16x128xf32> to vector<16x128xbf16>
    %c0_146 = arith.constant 0 : index
    %c0_147 = arith.constant 0 : index
    %227 = vector.load %arg19[%c0_146, %c0_147] : memref<128x128xbf16, #tpu.memory_space<vmem>>, vector<128x128xbf16>
    %cst_148 = arith.constant dense<0.000000e+00> : vector<16x128xf32>
    %228 = tpu.matmul %226, %227, %cst_148 {dimension_numbers = #tpu.dot_dimension_numbers<[1], [0], [0], [1], [0, 0, 1, 1], [], []>} : vector<16x128xbf16>, vector<128x128xbf16>, vector<16x128xf32> -> vector<16x128xf32>
    %c0_149 = arith.constant 0 : index
    %c0_150 = arith.constant 0 : index
    %229 = vector.load %arg20[%c0_149, %c0_150] : memref<1x128xf32, #tpu.memory_space<vmem>>, vector<1x128xf32>
    %230 = vector.broadcast %229 : vector<1x128xf32> to vector<16x128xf32>
    %231 = arith.addf %228, %230 : vector<16x128xf32>
    %c0_151 = arith.constant 0 : index
    %c0_152 = arith.constant 0 : index
    %232 = vector.load %arg22[%c0_151, %c0_152] : memref<1x128xf32, #tpu.memory_space<vmem>>, vector<1x128xf32>
    %233 = vector.broadcast %232 : vector<1x128xf32> to vector<16x128xf32>
    %234 = arith.mulf %231, %233 : vector<16x128xf32>
    %235 = math.tanh %234 : vector<16x128xf32>
    %c0_153 = arith.constant 0 : index
    %c0_154 = arith.constant 0 : index
    %236 = vector.load %arg21[%c0_153, %c0_154] : memref<1x128xf32, #tpu.memory_space<vmem>>, vector<1x128xf32>
    %237 = vector.broadcast %236 : vector<1x128xf32> to vector<16x128xf32>
    %238 = arith.mulf %235, %237 : vector<16x128xf32>
    %239 = arith.truncf %238 : vector<16x128xf32> to vector<16x128xbf16>
    %c0_155 = arith.constant 0 : index
    %c0_156 = arith.constant 0 : index
    %240 = vector.load %arg23[%c0_155, %c0_156] : memref<128x128xbf16, #tpu.memory_space<vmem>>, vector<128x128xbf16>
    %cst_157 = arith.constant dense<0.000000e+00> : vector<16x128xf32>
    %241 = tpu.matmul %239, %240, %cst_157 {dimension_numbers = #tpu.dot_dimension_numbers<[1], [0], [0], [1], [0, 0, 1, 1], [], []>} : vector<16x128xbf16>, vector<128x128xbf16>, vector<16x128xf32> -> vector<16x128xf32>
    %c0_158 = arith.constant 0 : index
    %c0_159 = arith.constant 0 : index
    %242 = vector.load %arg24[%c0_158, %c0_159] : memref<1x128xf32, #tpu.memory_space<vmem>>, vector<1x128xf32>
    %243 = vector.broadcast %242 : vector<1x128xf32> to vector<16x128xf32>
    %244 = arith.addf %241, %243 : vector<16x128xf32>
    %c0_160 = arith.constant 0 : index
    %c0_161 = arith.constant 0 : index
    %245 = vector.load %arg30[%c0_160, %c0_161] : memref<16x1xf32, #tpu.memory_space<vmem>>, vector<16x1xf32>
    %c0_162 = arith.constant 0 : index
    %c0_163 = arith.constant 0 : index
    %246 = vector.load %arg25[%c0_162, %c0_163] : memref<1x128xf32, #tpu.memory_space<vmem>>, vector<1x128xf32>
    %247 = vector.broadcast %245 : vector<16x1xf32> to vector<16x128xf32>
    %248 = vector.broadcast %246 : vector<1x128xf32> to vector<16x128xf32>
    %249 = arith.mulf %247, %248 : vector<16x128xf32>
    %250 = arith.addf %244, %249 : vector<16x128xf32>
    %c0_164 = arith.constant 0 : index
    %c0_165 = arith.constant 0 : index
    %251 = vector.load %arg26[%c0_164, %c0_165] : memref<16x128xf32, #tpu.memory_space<vmem>>, vector<16x128xf32>
    tpu.vector_store %arg26[%c0_164, %c0_165], %250 {strides = array<i32>} : memref<16x128xf32, #tpu.memory_space<vmem>>, vector<16x128xf32>,
    return
  }
  func.func @transform_0(%arg0: i32) -> (i32, i32) {
    %c0_i32 = arith.constant 0 : i32
    %c0_i32_0 = arith.constant 0 : i32
    return %arg0, %c0_i32 : i32, i32
  }
  func.func @transform_1(%arg0: i32) -> (i32, i32) {
    %c0_i32 = arith.constant 0 : i32
    %c0_i32_0 = arith.constant 0 : i32
    return %arg0, %c0_i32 : i32, i32
  }
  func.func @transform_2(%arg0: i32) -> (i32, i32) {
    %c0_i32 = arith.constant 0 : i32
    %c0_i32_0 = arith.constant 0 : i32
    %c0_i32_1 = arith.constant 0 : i32
    return %c0_i32, %c0_i32_0 : i32, i32
  }
  func.func @transform_3(%arg0: i32) -> (i32, i32) {
    %c0_i32 = arith.constant 0 : i32
    %c0_i32_0 = arith.constant 0 : i32
    %c0_i32_1 = arith.constant 0 : i32
    return %c0_i32, %c0_i32_0 : i32, i32
  }
  func.func @transform_4(%arg0: i32) -> (i32, i32) {
    %c0_i32 = arith.constant 0 : i32
    %c0_i32_0 = arith.constant 0 : i32
    %c0_i32_1 = arith.constant 0 : i32
    return %c0_i32, %c0_i32_0 : i32, i32
  }
  func.func @transform_5(%arg0: i32) -> (i32, i32) {
    %c0_i32 = arith.constant 0 : i32
    %c0_i32_0 = arith.constant 0 : i32
    %c0_i32_1 = arith.constant 0 : i32
    return %c0_i32, %c0_i32_0 : i32, i32
  }
  func.func @transform_6(%arg0: i32) -> (i32, i32) {
    %c0_i32 = arith.constant 0 : i32
    %c0_i32_0 = arith.constant 0 : i32
    %c0_i32_1 = arith.constant 0 : i32
    return %c0_i32, %c0_i32_0 : i32, i32
  }
  func.func @transform_7(%arg0: i32) -> (i32, i32) {
    %c0_i32 = arith.constant 0 : i32
    %c0_i32_0 = arith.constant 0 : i32
    %c0_i32_1 = arith.constant 0 : i32
    return %c0_i32, %c0_i32_0 : i32, i32
  }
  func.func @transform_8(%arg0: i32) -> (i32, i32) {
    %c0_i32 = arith.constant 0 : i32
    %c0_i32_0 = arith.constant 0 : i32
    %c0_i32_1 = arith.constant 0 : i32
    return %c0_i32, %c0_i32_0 : i32, i32
  }
  func.func @transform_9(%arg0: i32) -> (i32, i32) {
    %c0_i32 = arith.constant 0 : i32
    %c0_i32_0 = arith.constant 0 : i32
    %c0_i32_1 = arith.constant 0 : i32
    return %c0_i32, %c0_i32_0 : i32, i32
  }
  func.func @transform_10(%arg0: i32) -> (i32, i32) {
    %c0_i32 = arith.constant 0 : i32
    %c0_i32_0 = arith.constant 0 : i32
    %c0_i32_1 = arith.constant 0 : i32
    return %c0_i32, %c0_i32_0 : i32, i32
  }
  func.func @transform_11(%arg0: i32) -> (i32, i32) {
    %c0_i32 = arith.constant 0 : i32
    %c0_i32_0 = arith.constant 0 : i32
    %c0_i32_1 = arith.constant 0 : i32
    return %c0_i32, %c0_i32_0 : i32, i32
  }
  func.func @transform_12(%arg0: i32) -> (i32, i32) {
    %c0_i32 = arith.constant 0 : i32
    %c0_i32_0 = arith.constant 0 : i32
    %c0_i32_1 = arith.constant 0 : i32
    return %c0_i32, %c0_i32_0 : i32, i32
  }
  func.func @transform_13(%arg0: i32) -> (i32, i32) {
    %c0_i32 = arith.constant 0 : i32
    %c0_i32_0 = arith.constant 0 : i32
    %c0_i32_1 = arith.constant 0 : i32
    return %c0_i32, %c0_i32_0 : i32, i32
  }
  func.func @transform_14(%arg0: i32) -> (i32, i32) {
    %c0_i32 = arith.constant 0 : i32
    %c0_i32_0 = arith.constant 0 : i32
    %c0_i32_1 = arith.constant 0 : i32
    return %c0_i32, %c0_i32_0 : i32, i32
  }
  func.func @transform_15(%arg0: i32) -> (i32, i32) {
    %c0_i32 = arith.constant 0 : i32
    %c0_i32_0 = arith.constant 0 : i32
    %c0_i32_1 = arith.constant 0 : i32
    return %c0_i32, %c0_i32_0 : i32, i32
  }
  func.func @transform_16(%arg0: i32) -> (i32, i32) {
    %c0_i32 = arith.constant 0 : i32
    %c0_i32_0 = arith.constant 0 : i32
    %c0_i32_1 = arith.constant 0 : i32
    return %c0_i32, %c0_i32_0 : i32, i32
  }
  func.func @transform_17(%arg0: i32) -> (i32, i32) {
    %c0_i32 = arith.constant 0 : i32
    %c0_i32_0 = arith.constant 0 : i32
    %c0_i32_1 = arith.constant 0 : i32
    return %c0_i32, %c0_i32_0 : i32, i32
  }
  func.func @transform_18(%arg0: i32) -> (i32, i32) {
    %c0_i32 = arith.constant 0 : i32
    %c0_i32_0 = arith.constant 0 : i32
    %c0_i32_1 = arith.constant 0 : i32
    return %c0_i32, %c0_i32_0 : i32, i32
  }
  func.func @transform_19(%arg0: i32) -> (i32, i32) {
    %c0_i32 = arith.constant 0 : i32
    %c0_i32_0 = arith.constant 0 : i32
    %c0_i32_1 = arith.constant 0 : i32
    return %c0_i32, %c0_i32_0 : i32, i32
  }
  func.func @transform_20(%arg0: i32) -> (i32, i32) {
    %c0_i32 = arith.constant 0 : i32
    %c0_i32_0 = arith.constant 0 : i32
    %c0_i32_1 = arith.constant 0 : i32
    return %c0_i32, %c0_i32_0 : i32, i32
  }
  func.func @transform_21(%arg0: i32) -> (i32, i32) {
    %c0_i32 = arith.constant 0 : i32
    %c0_i32_0 = arith.constant 0 : i32
    %c0_i32_1 = arith.constant 0 : i32
    return %c0_i32, %c0_i32_0 : i32, i32
  }
  func.func @transform_22(%arg0: i32) -> (i32, i32) {
    %c0_i32 = arith.constant 0 : i32
    %c0_i32_0 = arith.constant 0 : i32
    %c0_i32_1 = arith.constant 0 : i32
    return %c0_i32, %c0_i32_0 : i32, i32
  }
  func.func @transform_23(%arg0: i32) -> (i32, i32) {
    %c0_i32 = arith.constant 0 : i32
    %c0_i32_0 = arith.constant 0 : i32
    %c0_i32_1 = arith.constant 0 : i32
    return %c0_i32, %c0_i32_0 : i32, i32
  }
  func.func @transform_24(%arg0: i32) -> (i32, i32) {
    %c0_i32 = arith.constant 0 : i32
    %c0_i32_0 = arith.constant 0 : i32
    %c0_i32_1 = arith.constant 0 : i32
    return %c0_i32, %c0_i32_0 : i32, i32
  }
  func.func @transform_25(%arg0: i32) -> (i32, i32) {
    %c0_i32 = arith.constant 0 : i32
    %c0_i32_0 = arith.constant 0 : i32
    return %arg0, %c0_i32 : i32, i32
  }
}

</mosaic_0001>

<llo_original>
// kernel: tpu_custom_call.1
$region0: #{tpu_custom_call.1}
  #allocation0 [shape = 'u32[]', space=smem, size = 0x4, offset = 0x4, fixed_abs, tag = 'smem constant byte address 0x4 - core index']
  #allocation1 [shape = 'u32[72,128]{1,0:T(1,128)}', space=vmem, size = 0x9000, scoped, tag = 'internal scratch']
  #allocation2 [shape = 'f32[16,32]{1,0:T(8,128)}', space=vmem, size = 0x2000, scoped, tag = 'scratch operand']
  #allocation3 [shape = 'bf16[16,384]{1,0:T(8,128)(2,1)}', space=vmem, size = 0x3000, scoped, tag = 'scratch operand']
  #allocation4 [shape = 'f32[16,128]{1,0:T(8,128)}', space=vmem, size = 0x2000, scoped, tag = 'scratch operand']
  #allocation5 [shape = 'f32[16,1]{1,0:T(8,128)}', space=vmem, size = 0x2000, scoped, tag = 'scratch operand']
  %s0 = inlined_call_operand.hbm [shape: bf16[32,128], index: 0, kind: input, shape index: {}]
  %s1 = inlined_call_operand.hbm [shape: bf16[32,128], index: 1, kind: input, shape index: {}]
  %s2 = inlined_call_operand.hbm [shape: bf16[128,128], index: 2, kind: input, shape index: {}]
  %s3 = inlined_call_operand.hbm [shape: f32[1,128], index: 3, kind: input, shape index: {}]
  %s4 = inlined_call_operand.hbm [shape: f32[1,128], index: 4, kind: input, shape index: {}]
  %s5 = inlined_call_operand.hbm [shape: f32[1,128], index: 5, kind: input, shape index: {}]
  %s6 = inlined_call_operand.hbm [shape: bf16[128,128], index: 6, kind: input, shape index: {}]
  %s7 = inlined_call_operand.vmem [shape: f32[1,128], index: 7, kind: input, shape index: {}]
  %s8 = inlined_call_operand.vmem [shape: f32[1,128], index: 8, kind: input, shape index: {}]
  %s9 = inlined_call_operand.vmem [shape: f32[1,128], index: 9, kind: input, shape index: {}]
  %s10 = inlined_call_operand.hbm [shape: bf16[128,256], index: 10, kind: input, shape index: {}]
  %s11 = inlined_call_operand.vmem [shape: f32[1,256], index: 11, kind: input, shape index: {}]
  %s12 = inlined_call_operand.hbm [shape: bf16[128,128], index: 12, kind: input, shape index: {}]
  %s13 = inlined_call_operand.hbm [shape: bf16[128,384], index: 13, kind: input, shape index: {}]
  %s14 = inlined_call_operand.vmem [shape: f32[1,384], index: 14, kind: input, shape index: {}]
  %s15 = inlined_call_operand.hbm [shape: bf16[32,128], index: 15, kind: input, shape index: {}]
  %s16 = inlined_call_operand.vmem [shape: f32[1,128], index: 16, kind: input, shape index: {}]
  %s17 = inlined_call_operand.vmem [shape: f32[1,128], index: 17, kind: input, shape index: {}]
  %s18 = inlined_call_operand.hbm [shape: bf16[128,128], index: 18, kind: input, shape index: {}]
  %s19 = inlined_call_operand.vmem [shape: f32[1,128], index: 19, kind: input, shape index: {}]
  %s20 = inlined_call_operand.vmem [shape: f32[1,128], index: 20, kind: input, shape index: {}]
  %s21 = inlined_call_operand.vmem [shape: f32[1,128], index: 21, kind: input, shape index: {}]
  %s22 = inlined_call_operand.hbm [shape: bf16[128,128], index: 22, kind: input, shape index: {}]
  %s23 = inlined_call_operand.vmem [shape: f32[1,128], index: 23, kind: input, shape index: {}]
  %s24 = inlined_call_operand.vmem [shape: f32[1,128], index: 24, kind: input, shape index: {}]
  %s25 = inlined_call_operand.hbm [shape: f32[32,128], index: 25, kind: output, shape index: {}]
  %s26 = sld [smem:[#allocation0]]
  $region185: #{tpu_custom_call.1} parent=0
    _
  %s28 = ssub.s32 1, %s26
  %s29 = scalar_select 0, %s28, %s26
  $region1: #{tpu_custom_call.1} parent=0
    #allocation6 [shape = 'u8[8192]{0}', space=vmem, size = 0x2000, scoped, tag = 'input window, operand 0']
    #allocation7 [shape = 's32[2]{0}', space=sflag, size = 0x8, scoped, tag = 'scoped memory for tpu_custom_call.1']
    #allocation8 [shape = 's32[2]{0}', space=sflag, size = 0x8, scoped, tag = 'scoped memory for tpu_custom_call.1']
    #allocation9 [shape = 'u8[8192]{0}', space=vmem, size = 0x2000, scoped, tag = 'input window, operand 1']
    #allocation10 [shape = 's32[2]{0}', space=sflag, size = 0x8, scoped, tag = 'scoped memory for tpu_custom_call.1']
    #allocation11 [shape = 'u8[32768]{0}', space=vmem, size = 0x8000, scoped, tag = 'input window, operand 2, single buffered']
    #allocation12 [shape = 'u8[512]{0}', space=vmem, size = 0x400, scoped, tag = 'input window, operand 3, single buffered']
    #allocation13 [shape = 's32[1]{0}', space=sflag, size = 0x4, scoped, tag = 'scoped memory for tpu_custom_call.1']
    #allocation14 [shape = 'u8[512]{0}', space=vmem, size = 0x400, scoped, tag = 'input window, operand 4, single buffered']
    #allocation15 [shape = 'u8[512]{0}', space=vmem, size = 0x400, scoped, tag = 'input window, operand 5, single buffered']
    #allocation16 [shape = 's32[1]{0}', space=sflag, size = 0x4, scoped, tag = 'scoped memory for tpu_custom_call.1']
    #allocation17 [shape = 'u8[32768]{0}', space=vmem, size = 0x8000, scoped, tag = 'input window, operand 6, single buffered']
    #allocation18 [shape = 'u8[65536]{0}', space=vmem, size = 0x10000, scoped, tag = 'input window, operand 10, single buffered']
    #allocation19 [shape = 's32[1]{0}', space=sflag, size = 0x4, scoped, tag = 'scoped memory for tpu_custom_call.1']
    #allocation20 [shape = 'u8[32768]{0}', space=vmem, size = 0x8000, scoped, tag = 'input window, operand 12, single buffered']
    #allocation21 [shape = 'u8[98304]{0}', space=vmem, size = 0x18000, scoped, tag = 'input window, operand 13, single buffered']
    #allocation22 [shape = 's32[1]{0}', space=sflag, size = 0x4, scoped, tag = 'scoped memory for tpu_custom_call.1']
    #allocation23 [shape = 'u8[8192]{0}', space=vmem, size = 0x2000, scoped, tag = 'input window, operand 15, single buffered']
    #allocation24 [shape = 'u8[32768]{0}', space=vmem, size = 0x8000, scoped, tag = 'input window, operand 18, single buffered']
    #allocation25 [shape = 's32[1]{0}', space=sflag, size = 0x4, scoped, tag = 'scoped memory for tpu_custom_call.1']
    #allocation26 [shape = 'u8[32768]{0}', space=vmem, size = 0x8000, scoped, tag = 'input window, operand 22, single buffered']
    #allocation27 [shape = 'u8[16384]{0}', space=vmem, size = 0x4000, scoped, tag = 'output window, operand 0']
    %30 = vsyncpa [#allocation7], 0
    %s31 = scalar_lea.sflag [#allocation7], 1
    %32 = vsyncpa %s31, 0
    %33 = vsyncpa [#allocation10], 0
    %s34 = scalar_lea.sflag [#allocation10], 1
    %35 = vsyncpa %s34, 0
    %36 = vsyncpa [#allocation13], 0
    %37 = vsyncpa [#allocation16], 0
    %38 = vsyncpa [#allocation19], 0
    %39 = vsyncpa [#allocation22], 0
    %40 = vsyncpa [#allocation25], 0
    %41 = vsyncpa [#allocation8], 0
    %s42 = scalar_lea.sflag [#allocation8], 1
    %43 = vsyncpa %s42, 0
    loop: start=0, step=1, limit=4
    $region2: #{tpu_custom_call.1} parent=1 // loop_pre_header
      _
    $region3: #{tpu_custom_call.1} parent=1 // loop_header
      %s45 = sphi 0, %s49
      %p46 = scmp.ge.s32.totalorder %s45, 4
      %s55 = sphi 0, %s57
      %s58 = sphi 0, %s55
      %s59 = sphi 0, %s58
      %s75 = sphi 0, %s59
      %s81 = sphi 0, %s83
      %s84 = sphi 0, %s81
      %s85 = sphi 0, %s84
      %s101 = sphi 0, %s85
      %s105 = sphi 0, %s105
      %s107 = sphi 0, %s105
      %s108 = sphi 0, %s107
      %s122 = sphi 0, %s108
      %s126 = sphi 0, %s126
      %s128 = sphi 0, %s126
      %s129 = sphi 0, %s128
      %s143 = sphi 0, %s129
      %s147 = sphi 0, %s147
      %s149 = sphi 0, %s147
      %s150 = sphi 0, %s149
      %s164 = sphi 0, %s150
      %s168 = sphi 0, %s168
      %s170 = sphi 0, %s168
      %s171 = sphi 0, %s170
      %s185 = sphi 0, %s171
      %s189 = sphi 0, %s189
      %s191 = sphi 0, %s189
      %s192 = sphi 0, %s191
      %s206 = sphi 0, %s192
      %s210 = sphi 0, %s210
      %s212 = sphi 0, %s210
      %s213 = sphi 0, %s212
      %s227 = sphi 0, %s213
      %s231 = sphi 0, %s231
      %s233 = sphi 0, %s231
      %s234 = sphi 0, %s233
      %s248 = sphi 0, %s234
      %s252 = sphi 0, %s252
      %s254 = sphi 0, %s252
      %s255 = sphi 0, %s254
      %s269 = sphi 0, %s255
      %s273 = sphi 0, %s273
      %s275 = sphi 0, %s273
      %s276 = sphi 0, %s275
      %s290 = sphi 0, %s276
      %s294 = sphi 0, %s294
      %s296 = sphi 0, %s294
      %s297 = sphi 0, %s296
      %s311 = sphi 0, %s297
      %s315 = sphi 0, %s315
      %s317 = sphi 0, %s315
      %s318 = sphi 0, %s317
      %s332 = sphi 0, %s318
      %s336 = sphi 0, %s336
      %s338 = sphi 0, %s336
      %s339 = sphi 0, %s338
      %s353 = sphi 0, %s339
      %s357 = sphi 0, %s357
      %s359 = sphi 0, %s357
      %s360 = sphi 0, %s359
      %s374 = sphi 0, %s360
      %s378 = sphi 0, %s378
      %s380 = sphi 0, %s378
      %s381 = sphi 0, %s380
      %s395 = sphi 0, %s381
      %s399 = sphi 0, %s399
      %s401 = sphi 0, %s399
      %s402 = sphi 0, %s401
      %s416 = sphi 0, %s402
      %s420 = sphi 0, %s420
      %s422 = sphi 0, %s420
      %s423 = sphi 0, %s422
      %s437 = sphi 0, %s423
      %s441 = sphi 0, %s441
      %s443 = sphi 0, %s441
      %s444 = sphi 0, %s443
      %s458 = sphi 0, %s444
      %s462 = sphi 0, %s462
      %s464 = sphi 0, %s462
      %s465 = sphi 0, %s464
      %s479 = sphi 0, %s465
      %s483 = sphi 0, %s483
      %s485 = sphi 0, %s483
      %s486 = sphi 0, %s485
      %s500 = sphi 0, %s486
      %s504 = sphi 0, %s504
      %s506 = sphi 0, %s504
      %s507 = sphi 0, %s506
      %s521 = sphi 0, %s507
      %s525 = sphi 0, %s525
      %s527 = sphi 0, %s525
      %s528 = sphi 0, %s527
      %s542 = sphi 0, %s528
      %s546 = sphi 0, %s546
      %s548 = sphi 0, %s546
      %s549 = sphi 0, %s548
      %s563 = sphi 0, %s549
      %s567 = sphi 0, %s567
      %s569 = sphi 0, %s567
      %s570 = sphi 0, %s569
      %s584 = sphi 0, %s570
      %s590 = sphi 0, %s592
      %s593 = sphi 0, %s590
      %s594 = sphi 0, %s593
      %s610 = sphi 0, %s594
    $region4: #{tpu_custom_call.1} parent=1 // loop_header_branch
      %48 = sbr.rel (%p46) target = $region8
    $region5: #{tpu_custom_call.1} parent=1 // loop_body
      %s50 = ssub.s32 %s45, 1
      %s51 = ssub.s32 %s45, 2
      %s52 = sadd.s32 %s45, 1
      %s53 = ssub.s32 %s45, %s52
      %p54 = scmp.eq.s32.totalorder %s53, 0
      %s56 = sadd.s32 %s55, 1
      %s57 = scalar_select %p54, %s55, %s56
      %p60 = pneg %p54
      %p61 = scmp.eq.s32.totalorder %s45, 1
      %p62 = por %p60, %p61
      %p63 = scmp.ne.s32.totalorder %s55, %s58
      %p64 = scmp.eq.s32.totalorder %s45, 0
      %p65 = por %p63, %p64
      %p66 = scmp.ne.s32.totalorder %s55, %s58
      %p67 = scmp.eq.s32.totalorder %s50, 1
      %p68 = por %p66, %p67
      %p69 = scmp.ne.s32.totalorder %s58, %s59
      %p70 = scmp.eq.s32.totalorder %s50, 0
      %p71 = por %p69, %p70
      %p72 = scmp.ne.s32.totalorder %s58, %s59
      %p73 = scmp.eq.s32.totalorder %s51, 1
      %p74 = por %p72, %p73
      %p76 = scmp.ne.s32.totalorder %s59, %s75
      %p77 = scmp.eq.s32.totalorder %s51, 0
      %p78 = por %p76, %p77
      %s79 = ssub.s32 %s45, %s52
      %p80 = scmp.eq.s32.totalorder %s79, 0
      %s82 = sadd.s32 %s81, 1
      %s83 = scalar_select %p80, %s81, %s82
      %p86 = pneg %p80
      %p87 = scmp.eq.s32.totalorder %s45, 1
      %p88 = por %p86, %p87
      %p89 = scmp.ne.s32.totalorder %s81, %s84
      %p90 = scmp.eq.s32.totalorder %s45, 0
      %p91 = por %p89, %p90
      %p92 = scmp.ne.s32.totalorder %s81, %s84
      %p93 = scmp.eq.s32.totalorder %s50, 1
      %p94 = por %p92, %p93
      %p95 = scmp.ne.s32.totalorder %s84, %s85
      %p96 = scmp.eq.s32.totalorder %s50, 0
      %p97 = por %p95, %p96
      %p98 = scmp.ne.s32.totalorder %s84, %s85
      %p99 = scmp.eq.s32.totalorder %s51, 1
      %p100 = por %p98, %p99
      %p102 = scmp.ne.s32.totalorder %s85, %s101
      %p103 = scmp.eq.s32.totalorder %s51, 0
      %p104 = por %p102, %p103
      %s106 = sadd.s32 %s105, 1
      %p109 = scmp.eq.s32.totalorder %s45, 1
      %p110 = scmp.ne.s32.totalorder %s105, %s107
      %p111 = scmp.eq.s32.totalorder %s45, 0
      %p112 = por %p110, %p111
      %p113 = scmp.ne.s32.totalorder %s105, %s107
      %p114 = scmp.eq.s32.totalorder %s50, 1
      %p115 = por %p113, %p114
      %p116 = scmp.ne.s32.totalorder %s107, %s108
      %p117 = scmp.eq.s32.totalorder %s50, 0
      %p118 = por %p116, %p117
      %p119 = scmp.ne.s32.totalorder %s107, %s108
      %p120 = scmp.eq.s32.totalorder %s51, 1
      %p121 = por %p119, %p120
      %p123 = scmp.ne.s32.totalorder %s108, %s122
      %p124 = scmp.eq.s32.totalorder %s51, 0
      %p125 = por %p123, %p124
      %s127 = sadd.s32 %s126, 1
      %p130 = scmp.eq.s32.totalorder %s45, 1
      %p131 = scmp.ne.s32.totalorder %s126, %s128
      %p132 = scmp.eq.s32.totalorder %s45, 0
      %p133 = por %p131, %p132
      %p134 = scmp.ne.s32.totalorder %s126, %s128
      %p135 = scmp.eq.s32.totalorder %s50, 1
      %p136 = por %p134, %p135
      %p137 = scmp.ne.s32.totalorder %s128, %s129
      %p138 = scmp.eq.s32.totalorder %s50, 0
      %p139 = por %p137, %p138
      %p140 = scmp.ne.s32.totalorder %s128, %s129
      %p141 = scmp.eq.s32.totalorder %s51, 1
      %p142 = por %p140, %p141
      %p144 = scmp.ne.s32.totalorder %s129, %s143
      %p145 = scmp.eq.s32.totalorder %s51, 0
      %p146 = por %p144, %p145
      %s148 = sadd.s32 %s147, 1
      %p151 = scmp.eq.s32.totalorder %s45, 1
      %p152 = scmp.ne.s32.totalorder %s147, %s149
      %p153 = scmp.eq.s32.totalorder %s45, 0
      %p154 = por %p152, %p153
      %p155 = scmp.ne.s32.totalorder %s147, %s149
      %p156 = scmp.eq.s32.totalorder %s50, 1
      %p157 = por %p155, %p156
      %p158 = scmp.ne.s32.totalorder %s149, %s150
      %p159 = scmp.eq.s32.totalorder %s50, 0
      %p160 = por %p158, %p159
      %p161 = scmp.ne.s32.totalorder %s149, %s150
      %p162 = scmp.eq.s32.totalorder %s51, 1
      %p163 = por %p161, %p162
      %p165 = scmp.ne.s32.totalorder %s150, %s164
      %p166 = scmp.eq.s32.totalorder %s51, 0
      %p167 = por %p165, %p166
      %s169 = sadd.s32 %s168, 1
      %p172 = scmp.eq.s32.totalorder %s45, 1
      %p173 = scmp.ne.s32.totalorder %s168, %s170
      %p174 = scmp.eq.s32.totalorder %s45, 0
      %p175 = por %p173, %p174
      %p176 = scmp.ne.s32.totalorder %s168, %s170
      %p177 = scmp.eq.s32.totalorder %s50, 1
      %p178 = por %p176, %p177
      %p179 = scmp.ne.s32.totalorder %s170, %s171
      %p180 = scmp.eq.s32.totalorder %s50, 0
      %p181 = por %p179, %p180
      %p182 = scmp.ne.s32.totalorder %s170, %s171
      %p183 = scmp.eq.s32.totalorder %s51, 1
      %p184 = por %p182, %p183
      %p186 = scmp.ne.s32.totalorder %s171, %s185
      %p187 = scmp.eq.s32.totalorder %s51, 0
      %p188 = por %p186, %p187
      %s190 = sadd.s32 %s189, 1
      %p193 = scmp.eq.s32.totalorder %s45, 1
      %p194 = scmp.ne.s32.totalorder %s189, %s191
      %p195 = scmp.eq.s32.totalorder %s45, 0
      %p196 = por %p194, %p195
      %p197 = scmp.ne.s32.totalorder %s189, %s191
      %p198 = scmp.eq.s32.totalorder %s50, 1
      %p199 = por %p197, %p198
      %p200 = scmp.ne.s32.totalorder %s191, %s192
      %p201 = scmp.eq.s32.totalorder %s50, 0
      %p202 = por %p200, %p201
      %p203 = scmp.ne.s32.totalorder %s191, %s192
      %p204 = scmp.eq.s32.totalorder %s51, 1
      %p205 = por %p203, %p204
      %p207 = scmp.ne.s32.totalorder %s192, %s206
      %p208 = scmp.eq.s32.totalorder %s51, 0
      %p209 = por %p207, %p208
      %s211 = sadd.s32 %s210, 1
      %p214 = scmp.eq.s32.totalorder %s45, 1
      %p215 = scmp.ne.s32.totalorder %s210, %s212
      %p216 = scmp.eq.s32.totalorder %s45, 0
      %p217 = por %p215, %p216
      %p218 = scmp.ne.s32.totalorder %s210, %s212
      %p219 = scmp.eq.s32.totalorder %s50, 1
      %p220 = por %p218, %p219
      %p221 = scmp.ne.s32.totalorder %s212, %s213
      %p222 = scmp.eq.s32.totalorder %s50, 0
      %p223 = por %p221, %p222
      %p224 = scmp.ne.s32.totalorder %s212, %s213
      %p225 = scmp.eq.s32.totalorder %s51, 1
      %p226 = por %p224, %p225
      %p228 = scmp.ne.s32.totalorder %s213, %s227
      %p229 = scmp.eq.s32.totalorder %s51, 0
      %p230 = por %p228, %p229
      %s232 = sadd.s32 %s231, 1
      %p235 = scmp.eq.s32.totalorder %s45, 1
      %p236 = scmp.ne.s32.totalorder %s231, %s233
      %p237 = scmp.eq.s32.totalorder %s45, 0
      %p238 = por %p236, %p237
      %p239 = scmp.ne.s32.totalorder %s231, %s233
      %p240 = scmp.eq.s32.totalorder %s50, 1
      %p241 = por %p239, %p240
      %p242 = scmp.ne.s32.totalorder %s233, %s234
      %p243 = scmp.eq.s32.totalorder %s50, 0
      %p244 = por %p242, %p243
      %p245 = scmp.ne.s32.totalorder %s233, %s234
      %p246 = scmp.eq.s32.totalorder %s51, 1
      %p247 = por %p245, %p246
      %p249 = scmp.ne.s32.totalorder %s234, %s248
      %p250 = scmp.eq.s32.totalorder %s51, 0
      %p251 = por %p249, %p250
      %s253 = sadd.s32 %s252, 1
      %p256 = scmp.eq.s32.totalorder %s45, 1
      %p257 = scmp.ne.s32.totalorder %s252, %s254
      %p258 = scmp.eq.s32.totalorder %s45, 0
      %p259 = por %p257, %p258
      %p260 = scmp.ne.s32.totalorder %s252, %s254
      %p261 = scmp.eq.s32.totalorder %s50, 1
      %p262 = por %p260, %p261
      %p263 = scmp.ne.s32.totalorder %s254, %s255
      %p264 = scmp.eq.s32.totalorder %s50, 0
      %p265 = por %p263, %p264
      %p266 = scmp.ne.s32.totalorder %s254, %s255
      %p267 = scmp.eq.s32.totalorder %s51, 1
      %p268 = por %p266, %p267
      %p270 = scmp.ne.s32.totalorder %s255, %s269
      %p271 = scmp.eq.s32.totalorder %s51, 0
      %p272 = por %p270, %p271
      %s274 = sadd.s32 %s273, 1
      %p277 = scmp.eq.s32.totalorder %s45, 1
      %p278 = scmp.ne.s32.totalorder %s273, %s275
      %p279 = scmp.eq.s32.totalorder %s45, 0
      %p280 = por %p278, %p279
      %p281 = scmp.ne.s32.totalorder %s273, %s275
      %p282 = scmp.eq.s32.totalorder %s50, 1
      %p283 = por %p281, %p282
      %p284 = scmp.ne.s32.totalorder %s275, %s276
      %p285 = scmp.eq.s32.totalorder %s50, 0
      %p286 = por %p284, %p285
      %p287 = scmp.ne.s32.totalorder %s275, %s276
      %p288 = scmp.eq.s32.totalorder %s51, 1
      %p289 = por %p287, %p288
      %p291 = scmp.ne.s32.totalorder %s276, %s290
      %p292 = scmp.eq.s32.totalorder %s51, 0
      %p293 = por %p291, %p292
      %s295 = sadd.s32 %s294, 1
      %p298 = scmp.eq.s32.totalorder %s45, 1
      %p299 = scmp.ne.s32.totalorder %s294, %s296
      %p300 = scmp.eq.s32.totalorder %s45, 0
      %p301 = por %p299, %p300
      %p302 = scmp.ne.s32.totalorder %s294, %s296
      %p303 = scmp.eq.s32.totalorder %s50, 1
      %p304 = por %p302, %p303
      %p305 = scmp.ne.s32.totalorder %s296, %s297
      %p306 = scmp.eq.s32.totalorder %s50, 0
      %p307 = por %p305, %p306
      %p308 = scmp.ne.s32.totalorder %s296, %s297
      %p309 = scmp.eq.s32.totalorder %s51, 1
      %p310 = por %p308, %p309
      %p312 = scmp.ne.s32.totalorder %s297, %s311
      %p313 = scmp.eq.s32.totalorder %s51, 0
      %p314 = por %p312, %p313
      %s316 = sadd.s32 %s315, 1
      %p319 = scmp.eq.s32.totalorder %s45, 1
      %p320 = scmp.ne.s32.totalorder %s315, %s317
      %p321 = scmp.eq.s32.totalorder %s45, 0
      %p322 = por %p320, %p321
      %p323 = scmp.ne.s32.totalorder %s315, %s317
      %p324 = scmp.eq.s32.totalorder %s50, 1
      %p325 = por %p323, %p324
      %p326 = scmp.ne.s32.totalorder %s317, %s318
      %p327 = scmp.eq.s32.totalorder %s50, 0
      %p328 = por %p326, %p327
      %p329 = scmp.ne.s32.totalorder %s317, %s318
      %p330 = scmp.eq.s32.totalorder %s51, 1
      %p331 = por %p329, %p330
      %p333 = scmp.ne.s32.totalorder %s318, %s332
      %p334 = scmp.eq.s32.totalorder %s51, 0
      %p335 = por %p333, %p334
      %s337 = sadd.s32 %s336, 1
      %p340 = scmp.eq.s32.totalorder %s45, 1
      %p341 = scmp.ne.s32.totalorder %s336, %s338
      %p342 = scmp.eq.s32.totalorder %s45, 0
      %p343 = por %p341, %p342
      %p344 = scmp.ne.s32.totalorder %s336, %s338
      %p345 = scmp.eq.s32.totalorder %s50, 1
      %p346 = por %p344, %p345
      %p347 = scmp.ne.s32.totalorder %s338, %s339
      %p348 = scmp.eq.s32.totalorder %s50, 0
      %p349 = por %p347, %p348
      %p350 = scmp.ne.s32.totalorder %s338, %s339
      %p351 = scmp.eq.s32.totalorder %s51, 1
      %p352 = por %p350, %p351
      %p354 = scmp.ne.s32.totalorder %s339, %s353
      %p355 = scmp.eq.s32.totalorder %s51, 0
      %p356 = por %p354, %p355
      %s358 = sadd.s32 %s357, 1
      %p361 = scmp.eq.s32.totalorder %s45, 1
      %p362 = scmp.ne.s32.totalorder %s357, %s359
      %p363 = scmp.eq.s32.totalorder %s45, 0
      %p364 = por %p362, %p363
      %p365 = scmp.ne.s32.totalorder %s357, %s359
      %p366 = scmp.eq.s32.totalorder %s50, 1
      %p367 = por %p365, %p366
      %p368 = scmp.ne.s32.totalorder %s359, %s360
      %p369 = scmp.eq.s32.totalorder %s50, 0
      %p370 = por %p368, %p369
      %p371 = scmp.ne.s32.totalorder %s359, %s360
      %p372 = scmp.eq.s32.totalorder %s51, 1
      %p373 = por %p371, %p372
      %p375 = scmp.ne.s32.totalorder %s360, %s374
      %p376 = scmp.eq.s32.totalorder %s51, 0
      %p377 = por %p375, %p376
      %s379 = sadd.s32 %s378, 1
      %p382 = scmp.eq.s32.totalorder %s45, 1
      %p383 = scmp.ne.s32.totalorder %s378, %s380
      %p384 = scmp.eq.s32.totalorder %s45, 0
      %p385 = por %p383, %p384
      %p386 = scmp.ne.s32.totalorder %s378, %s380
      %p387 = scmp.eq.s32.totalorder %s50, 1
      %p388 = por %p386, %p387
      %p389 = scmp.ne.s32.totalorder %s380, %s381
      %p390 = scmp.eq.s32.totalorder %s50, 0
      %p391 = por %p389, %p390
      %p392 = scmp.ne.s32.totalorder %s380, %s381
      %p393 = scmp.eq.s32.totalorder %s51, 1
      %p394 = por %p392, %p393
      %p396 = scmp.ne.s32.totalorder %s381, %s395
      %p397 = scmp.eq.s32.totalorder %s51, 0
      %p398 = por %p396, %p397
      %s400 = sadd.s32 %s399, 1
      %p403 = scmp.eq.s32.totalorder %s45, 1
      %p404 = scmp.ne.s32.totalorder %s399, %s401
      %p405 = scmp.eq.s32.totalorder %s45, 0
      %p406 = por %p404, %p405
      %p407 = scmp.ne.s32.totalorder %s399, %s401
      %p408 = scmp.eq.s32.totalorder %s50, 1
      %p409 = por %p407, %p408
      %p410 = scmp.ne.s32.totalorder %s401, %s402
      %p411 = scmp.eq.s32.totalorder %s50, 0
      %p412 = por %p410, %p411
      %p413 = scmp.ne.s32.totalorder %s401, %s402
      %p414 = scmp.eq.s32.totalorder %s51, 1
      %p415 = por %p413, %p414
      %p417 = scmp.ne.s32.totalorder %s402, %s416
      %p418 = scmp.eq.s32.totalorder %s51, 0
      %p419 = por %p417, %p418
      %s421 = sadd.s32 %s420, 1
      %p424 = scmp.eq.s32.totalorder %s45, 1
      %p425 = scmp.ne.s32.totalorder %s420, %s422
      %p426 = scmp.eq.s32.totalorder %s45, 0
      %p427 = por %p425, %p426
      %p428 = scmp.ne.s32.totalorder %s420, %s422
      %p429 = scmp.eq.s32.totalorder %s50, 1
      %p430 = por %p428, %p429
      %p431 = scmp.ne.s32.totalorder %s422, %s423
      %p432 = scmp.eq.s32.totalorder %s50, 0
      %p433 = por %p431, %p432
      %p434 = scmp.ne.s32.totalorder %s422, %s423
      %p435 = scmp.eq.s32.totalorder %s51, 1
      %p436 = por %p434, %p435
      %p438 = scmp.ne.s32.totalorder %s423, %s437
      %p439 = scmp.eq.s32.totalorder %s51, 0
      %p440 = por %p438, %p439
      %s442 = sadd.s32 %s441, 1
      %p445 = scmp.eq.s32.totalorder %s45, 1
      %p446 = scmp.ne.s32.totalorder %s441, %s443
      %p447 = scmp.eq.s32.totalorder %s45, 0
      %p448 = por %p446, %p447
      %p449 = scmp.ne.s32.totalorder %s441, %s443
      %p450 = scmp.eq.s32.totalorder %s50, 1
      %p451 = por %p449, %p450
      %p452 = scmp.ne.s32.totalorder %s443, %s444
      %p453 = scmp.eq.s32.totalorder %s50, 0
      %p454 = por %p452, %p453
      %p455 = scmp.ne.s32.totalorder %s443, %s444
      %p456 = scmp.eq.s32.totalorder %s51, 1
      %p457 = por %p455, %p456
      %p459 = scmp.ne.s32.totalorder %s444, %s458
      %p460 = scmp.eq.s32.totalorder %s51, 0
      %p461 = por %p459, %p460
      %s463 = sadd.s32 %s462, 1
      %p466 = scmp.eq.s32.totalorder %s45, 1
      %p467 = scmp.ne.s32.totalorder %s462, %s464
      %p468 = scmp.eq.s32.totalorder %s45, 0
      %p469 = por %p467, %p468
      %p470 = scmp.ne.s32.totalorder %s462, %s464
      %p471 = scmp.eq.s32.totalorder %s50, 1
      %p472 = por %p470, %p471
      %p473 = scmp.ne.s32.totalorder %s464, %s465
      %p474 = scmp.eq.s32.totalorder %s50, 0
      %p475 = por %p473, %p474
      %p476 = scmp.ne.s32.totalorder %s464, %s465
      %p477 = scmp.eq.s32.totalorder %s51, 1
      %p478 = por %p476, %p477
      %p480 = scmp.ne.s32.totalorder %s465, %s479
      %p481 = scmp.eq.s32.totalorder %s51, 0
      %p482 = por %p480, %p481
      %s484 = sadd.s32 %s483, 1
      %p487 = scmp.eq.s32.totalorder %s45, 1
      %p488 = scmp.ne.s32.totalorder %s483, %s485
      %p489 = scmp.eq.s32.totalorder %s45, 0
      %p490 = por %p488, %p489
      %p491 = scmp.ne.s32.totalorder %s483, %s485
      %p492 = scmp.eq.s32.totalorder %s50, 1
      %p493 = por %p491, %p492
      %p494 = scmp.ne.s32.totalorder %s485, %s486
      %p495 = scmp.eq.s32.totalorder %s50, 0
      %p496 = por %p494, %p495
      %p497 = scmp.ne.s32.totalorder %s485, %s486
      %p498 = scmp.eq.s32.totalorder %s51, 1
      %p499 = por %p497, %p498
      %p501 = scmp.ne.s32.totalorder %s486, %s500
      %p502 = scmp.eq.s32.totalorder %s51, 0
      %p503 = por %p501, %p502
      %s505 = sadd.s32 %s504, 1
      %p508 = scmp.eq.s32.totalorder %s45, 1
      %p509 = scmp.ne.s32.totalorder %s504, %s506
      %p510 = scmp.eq.s32.totalorder %s45, 0
      %p511 = por %p509, %p510
      %p512 = scmp.ne.s32.totalorder %s504, %s506
      %p513 = scmp.eq.s32.totalorder %s50, 1
      %p514 = por %p512, %p513
      %p515 = scmp.ne.s32.totalorder %s506, %s507
      %p516 = scmp.eq.s32.totalorder %s50, 0
      %p517 = por %p515, %p516
      %p518 = scmp.ne.s32.totalorder %s506, %s507
      %p519 = scmp.eq.s32.totalorder %s51, 1
      %p520 = por %p518, %p519
      %p522 = scmp.ne.s32.totalorder %s507, %s521
      %p523 = scmp.eq.s32.totalorder %s51, 0
      %p524 = por %p522, %p523
      %s526 = sadd.s32 %s525, 1
      %p529 = scmp.eq.s32.totalorder %s45, 1
      %p530 = scmp.ne.s32.totalorder %s525, %s527
      %p531 = scmp.eq.s32.totalorder %s45, 0
      %p532 = por %p530, %p531
      %p533 = scmp.ne.s32.totalorder %s525, %s527
      %p534 = scmp.eq.s32.totalorder %s50, 1
      %p535 = por %p533, %p534
      %p536 = scmp.ne.s32.totalorder %s527, %s528
      %p537 = scmp.eq.s32.totalorder %s50, 0
      %p538 = por %p536, %p537
      %p539 = scmp.ne.s32.totalorder %s527, %s528
      %p540 = scmp.eq.s32.totalorder %s51, 1
      %p541 = por %p539, %p540
      %p543 = scmp.ne.s32.totalorder %s528, %s542
      %p544 = scmp.eq.s32.totalorder %s51, 0
      %p545 = por %p543, %p544
      %s547 = sadd.s32 %s546, 1
      %p550 = scmp.eq.s32.totalorder %s45, 1
      %p551 = scmp.ne.s32.totalorder %s546, %s548
      %p552 = scmp.eq.s32.totalorder %s45, 0
      %p553 = por %p551, %p552
      %p554 = scmp.ne.s32.totalorder %s546, %s548
      %p555 = scmp.eq.s32.totalorder %s50, 1
      %p556 = por %p554, %p555
      %p557 = scmp.ne.s32.totalorder %s548, %s549
      %p558 = scmp.eq.s32.totalorder %s50, 0
      %p559 = por %p557, %p558
      %p560 = scmp.ne.s32.totalorder %s548, %s549
      %p561 = scmp.eq.s32.totalorder %s51, 1
      %p562 = por %p560, %p561
      %p564 = scmp.ne.s32.totalorder %s549, %s563
      %p565 = scmp.eq.s32.totalorder %s51, 0
      %p566 = por %p564, %p565
      %s568 = sadd.s32 %s567, 1
      %p571 = scmp.eq.s32.totalorder %s45, 1
      %p572 = scmp.ne.s32.totalorder %s567, %s569
      %p573 = scmp.eq.s32.totalorder %s45, 0
      %p574 = por %p572, %p573
      %p575 = scmp.ne.s32.totalorder %s567, %s569
      %p576 = scmp.eq.s32.totalorder %s50, 1
      %p577 = por %p575, %p576
      %p578 = scmp.ne.s32.totalorder %s569, %s570
      %p579 = scmp.eq.s32.totalorder %s50, 0
      %p580 = por %p578, %p579
      %p581 = scmp.ne.s32.totalorder %s569, %s570
      %p582 = scmp.eq.s32.totalorder %s51, 1
      %p583 = por %p581, %p582
      %p585 = scmp.ne.s32.totalorder %s570, %s584
      %p586 = scmp.eq.s32.totalorder %s51, 0
      %p587 = por %p585, %p586
      %s588 = ssub.s32 %s45, %s52
      %p589 = scmp.eq.s32.totalorder %s588, 0
      %s591 = sadd.s32 %s590, 1
      %s592 = scalar_select %p589, %s590, %s591
      %p595 = pneg %p589
      %p596 = scmp.eq.s32.totalorder %s45, 1
      %p597 = por %p595, %p596
      %p598 = scmp.ne.s32.totalorder %s590, %s593
      %p599 = scmp.eq.s32.totalorder %s45, 0
      %p600 = por %p598, %p599
      %p601 = scmp.ne.s32.totalorder %s590, %s593
      %p602 = scmp.eq.s32.totalorder %s50, 1
      %p603 = por %p601, %p602
      %p604 = scmp.ne.s32.totalorder %s593, %s594
      %p605 = scmp.eq.s32.totalorder %s50, 0
      %p606 = por %p604, %p605
      %p607 = scmp.ne.s32.totalorder %s593, %s594
      %p608 = scmp.eq.s32.totalorder %s51, 1
      %p609 = por %p607, %p608
      %p611 = scmp.ne.s32.totalorder %s594, %s610
      %p612 = scmp.eq.s32.totalorder %s51, 0
      %p613 = por %p611, %p612
      %p614 = scmp.le.s32.totalorder 1, %s45
      %p615 = scmp.lt.s32.totalorder %s45, 3
      %p616 = pnand %p614, %p615
      %p617 = pneg %p616
      // Predicated region
      $region9: #{tpu_custom_call.1} parent=5 // pred_check
        _
      $region10: #{tpu_custom_call.1} parent=5 // pred_check_branch
        %619 = sbr.rel (%p616) target = $region12
      $region11: #{tpu_custom_call.1} parent=5 // pred_region
        %s620 = ssub.s32 %s45, 1
        // Predicated region
        $region13: #{tpu_custom_call.1} parent=11 // pred_check
          %p621 = pneg %p118
        $region14: #{tpu_custom_call.1} parent=11 // pred_check_branch
          %623 = sbr.rel (%p621) target = $region16
        $region15: #{tpu_custom_call.1} parent=11 // pred_region
          %625 = vsyncadd [#allocation10], 0
          %s626 = sshll.u32 %s2, 4
          %s627 = int_to_ptr.hbm [resolvable:$true] %s626
          %s628 = sshll.u32 [#allocation11], 4
          %s629 = int_to_ptr.vmem [resolvable:$true] %s628
          %634 = dma.hbm_to_vmem [thread:$0]  %s627, 1024, %s629, [#allocation10], 64, 64, 4
        $region16: #{tpu_custom_call.1} parent=11 // pred_fallthru
          _
        // Predicated region
        $region17: #{tpu_custom_call.1} parent=11 // pred_check
          %p635 = pneg %p139
        $region18: #{tpu_custom_call.1} parent=11 // pred_check_branch
          %637 = sbr.rel (%p635) target = $region20
        $region19: #{tpu_custom_call.1} parent=11 // pred_region
          %639 = vsyncadd [#allocation13], 0
          %s641 = sshll.u32 %s3, 4
          %s642 = int_to_ptr.hbm [resolvable:$true] %s641
          %s643 = sshll.u32 [#allocation12], 4
          %s644 = int_to_ptr.vmem [resolvable:$true] %s643
          %646 = dma.hbm_to_vmem [thread:$0]  %s642, 16, %s644, [#allocation13]
        $region20: #{tpu_custom_call.1} parent=11 // pred_fallthru
          _
        // Predicated region
        $region21: #{tpu_custom_call.1} parent=11 // pred_check
          %p647 = pneg %p160
        $region22: #{tpu_custom_call.1} parent=11 // pred_check_branch
          %649 = sbr.rel (%p647) target = $region24
        $region23: #{tpu_custom_call.1} parent=11 // pred_region
          %651 = vsyncadd [#allocation13], 0
          %s653 = sshll.u32 %s4, 4
          %s654 = int_to_ptr.hbm [resolvable:$true] %s653
          %s655 = sshll.u32 [#allocation14], 4
          %s656 = int_to_ptr.vmem [resolvable:$true] %s655
          %658 = dma.hbm_to_vmem [thread:$0]  %s654, 16, %s656, [#allocation13]
        $region24: #{tpu_custom_call.1} parent=11 // pred_fallthru
          _
        // Predicated region
        $region25: #{tpu_custom_call.1} parent=11 // pred_check
          %p659 = pneg %p181
        $region26: #{tpu_custom_call.1} parent=11 // pred_check_branch
          %661 = sbr.rel (%p659) target = $region28
        $region27: #{tpu_custom_call.1} parent=11 // pred_region
          %663 = vsyncadd [#allocation16], 0
          %s665 = sshll.u32 %s5, 4
          %s666 = int_to_ptr.hbm [resolvable:$true] %s665
          %s667 = sshll.u32 [#allocation15], 4
          %s668 = int_to_ptr.vmem [resolvable:$true] %s667
          %670 = dma.hbm_to_vmem [thread:$0]  %s666, 16, %s668, [#allocation16]
        $region28: #{tpu_custom_call.1} parent=11 // pred_fallthru
          _
        // Predicated region
        $region29: #{tpu_custom_call.1} parent=11 // pred_check
          %p671 = pneg %p202
        $region30: #{tpu_custom_call.1} parent=11 // pred_check_branch
          %673 = sbr.rel (%p671) target = $region32
        $region31: #{tpu_custom_call.1} parent=11 // pred_region
          %675 = vsyncadd [#allocation16], 0
          %s676 = sshll.u32 %s6, 4
          %s677 = int_to_ptr.hbm [resolvable:$true] %s676
          %s678 = sshll.u32 [#allocation17], 4
          %s679 = int_to_ptr.vmem [resolvable:$true] %s678
          %684 = dma.hbm_to_vmem [thread:$0]  %s677, 1024, %s679, [#allocation16], 64, 64, 4
        $region32: #{tpu_custom_call.1} parent=11 // pred_fallthru
          _
        // Predicated region
        $region33: #{tpu_custom_call.1} parent=11 // pred_check
          %p685 = pneg %p223
        $region34: #{tpu_custom_call.1} parent=11 // pred_check_branch
          %687 = sbr.rel (%p685) target = $region36
        $region35: #{tpu_custom_call.1} parent=11 // pred_region
          _
        $region36: #{tpu_custom_call.1} parent=11 // pred_fallthru
          _
        // Predicated region
        $region37: #{tpu_custom_call.1} parent=11 // pred_check
          %p688 = pneg %p244
        $region38: #{tpu_custom_call.1} parent=11 // pred_check_branch
          %690 = sbr.rel (%p688) target = $region40
        $region39: #{tpu_custom_call.1} parent=11 // pred_region
          _
        $region40: #{tpu_custom_call.1} parent=11 // pred_fallthru
          _
        // Predicated region
        $region41: #{tpu_custom_call.1} parent=11 // pred_check
          %p691 = pneg %p265
        $region42: #{tpu_custom_call.1} parent=11 // pred_check_branch
          %693 = sbr.rel (%p691) target = $region44
        $region43: #{tpu_custom_call.1} parent=11 // pred_region
          _
        $region44: #{tpu_custom_call.1} parent=11 // pred_fallthru
          _
        // Predicated region
        $region45: #{tpu_custom_call.1} parent=11 // pred_check
          %p694 = pneg %p286
        $region46: #{tpu_custom_call.1} parent=11 // pred_check_branch
          %696 = sbr.rel (%p694) target = $region48
        $region47: #{tpu_custom_call.1} parent=11 // pred_region
          %698 = vsyncadd [#allocation19], 0
          %s699 = sshll.u32 %s10, 4
          %s700 = int_to_ptr.hbm [resolvable:$true] %s699
          %s701 = sshll.u32 [#allocation18], 4
          %s702 = int_to_ptr.vmem [resolvable:$true] %s701
          %707 = dma.hbm_to_vmem [thread:$0]  %s700, 2048, %s702, [#allocation19], 128, 128, 8
        $region48: #{tpu_custom_call.1} parent=11 // pred_fallthru
          _
        // Predicated region
        $region49: #{tpu_custom_call.1} parent=11 // pred_check
          %p708 = pneg %p307
        $region50: #{tpu_custom_call.1} parent=11 // pred_check_branch
          %710 = sbr.rel (%p708) target = $region52
        $region51: #{tpu_custom_call.1} parent=11 // pred_region
          _
        $region52: #{tpu_custom_call.1} parent=11 // pred_fallthru
          _
        // Predicated region
        $region53: #{tpu_custom_call.1} parent=11 // pred_check
          %p711 = pneg %p328
        $region54: #{tpu_custom_call.1} parent=11 // pred_check_branch
          %713 = sbr.rel (%p711) target = $region56
        $region55: #{tpu_custom_call.1} parent=11 // pred_region
          %715 = vsyncadd [#allocation19], 0
          %s716 = sshll.u32 %s12, 4
          %s717 = int_to_ptr.hbm [resolvable:$true] %s716
          %s718 = sshll.u32 [#allocation20], 4
          %s719 = int_to_ptr.vmem [resolvable:$true] %s718
          %724 = dma.hbm_to_vmem [thread:$0]  %s717, 1024, %s719, [#allocation19], 64, 64, 4
        $region56: #{tpu_custom_call.1} parent=11 // pred_fallthru
          _
        // Predicated region
        $region57: #{tpu_custom_call.1} parent=11 // pred_check
          %p725 = pneg %p349
        $region58: #{tpu_custom_call.1} parent=11 // pred_check_branch
          %727 = sbr.rel (%p725) target = $region60
        $region59: #{tpu_custom_call.1} parent=11 // pred_region
          %729 = vsyncadd [#allocation22], 0
          %s730 = sshll.u32 %s13, 4
          %s731 = int_to_ptr.hbm [resolvable:$true] %s730
          %s732 = sshll.u32 [#allocation21], 4
          %s733 = int_to_ptr.vmem [resolvable:$true] %s732
          %738 = dma.hbm_to_vmem [thread:$0]  %s731, 3072, %s733, [#allocation22], 192, 192, 12
        $region60: #{tpu_custom_call.1} parent=11 // pred_fallthru
          _
        // Predicated region
        $region61: #{tpu_custom_call.1} parent=11 // pred_check
          %p739 = pneg %p370
        $region62: #{tpu_custom_call.1} parent=11 // pred_check_branch
          %741 = sbr.rel (%p739) target = $region64
        $region63: #{tpu_custom_call.1} parent=11 // pred_region
          _
        $region64: #{tpu_custom_call.1} parent=11 // pred_fallthru
          _
        // Predicated region
        $region65: #{tpu_custom_call.1} parent=11 // pred_check
          %p742 = pneg %p391
        $region66: #{tpu_custom_call.1} parent=11 // pred_check_branch
          %744 = sbr.rel (%p742) target = $region68
        $region67: #{tpu_custom_call.1} parent=11 // pred_region
          %746 = vsyncadd [#allocation22], 0
          %s747 = sshll.u32 %s15, 4
          %s748 = int_to_ptr.hbm [resolvable:$true] %s747
          %s749 = sshll.u32 [#allocation23], 4
          %s750 = int_to_ptr.vmem [resolvable:$true] %s749
          %755 = dma.hbm_to_vmem [thread:$0]  %s748, 256, %s750, [#allocation22], 64, 64, 4
        $region68: #{tpu_custom_call.1} parent=11 // pred_fallthru
          _
        // Predicated region
        $region69: #{tpu_custom_call.1} parent=11 // pred_check
          %p756 = pneg %p412
        $region70: #{tpu_custom_call.1} parent=11 // pred_check_branch
          %758 = sbr.rel (%p756) target = $region72
        $region71: #{tpu_custom_call.1} parent=11 // pred_region
          _
        $region72: #{tpu_custom_call.1} parent=11 // pred_fallthru
          _
        // Predicated region
        $region73: #{tpu_custom_call.1} parent=11 // pred_check
          %p759 = pneg %p433
        $region74: #{tpu_custom_call.1} parent=11 // pred_check_branch
          %761 = sbr.rel (%p759) target = $region76
        $region75: #{tpu_custom_call.1} parent=11 // pred_region
          _
        $region76: #{tpu_custom_call.1} parent=11 // pred_fallthru
          _
        // Predicated region
        $region77: #{tpu_custom_call.1} parent=11 // pred_check
          %p762 = pneg %p454
        $region78: #{tpu_custom_call.1} parent=11 // pred_check_branch
          %764 = sbr.rel (%p762) target = $region80
        $region79: #{tpu_custom_call.1} parent=11 // pred_region
          %766 = vsyncadd [#allocation25], 0
          %s767 = sshll.u32 %s18, 4
          %s768 = int_to_ptr.hbm [resolvable:$true] %s767
          %s769 = sshll.u32 [#allocation24], 4
          %s770 = int_to_ptr.vmem [resolvable:$true] %s769
          %775 = dma.hbm_to_vmem [thread:$0]  %s768, 1024, %s770, [#allocation25], 64, 64, 4
        $region80: #{tpu_custom_call.1} parent=11 // pred_fallthru
          _
        // Predicated region
        $region81: #{tpu_custom_call.1} parent=11 // pred_check
          %p776 = pneg %p475
        $region82: #{tpu_custom_call.1} parent=11 // pred_check_branch
          %778 = sbr.rel (%p776) target = $region84
        $region83: #{tpu_custom_call.1} parent=11 // pred_region
          _
        $region84: #{tpu_custom_call.1} parent=11 // pred_fallthru
          _
        // Predicated region
        $region85: #{tpu_custom_call.1} parent=11 // pred_check
          %p779 = pneg %p496
        $region86: #{tpu_custom_call.1} parent=11 // pred_check_branch
          %781 = sbr.rel (%p779) target = $region88
        $region87: #{tpu_custom_call.1} parent=11 // pred_region
          _
        $region88: #{tpu_custom_call.1} parent=11 // pred_fallthru
          _
        // Predicated region
        $region89: #{tpu_custom_call.1} parent=11 // pred_check
          %p782 = pneg %p517
        $region90: #{tpu_custom_call.1} parent=11 // pred_check_branch
          %784 = sbr.rel (%p782) target = $region92
        $region91: #{tpu_custom_call.1} parent=11 // pred_region
          _
        $region92: #{tpu_custom_call.1} parent=11 // pred_fallthru
          _
        // Predicated region
        $region93: #{tpu_custom_call.1} parent=11 // pred_check
          %p785 = pneg %p538
        $region94: #{tpu_custom_call.1} parent=11 // pred_check_branch
          %787 = sbr.rel (%p785) target = $region96
        $region95: #{tpu_custom_call.1} parent=11 // pred_region
          %789 = vsyncadd [#allocation25], 0
          %s790 = sshll.u32 %s22, 4
          %s791 = int_to_ptr.hbm [resolvable:$true] %s790
          %s792 = sshll.u32 [#allocation26], 4
          %s793 = int_to_ptr.vmem [resolvable:$true] %s792
          %798 = dma.hbm_to_vmem [thread:$0]  %s791, 1024, %s793, [#allocation25], 64, 64, 4
        $region96: #{tpu_custom_call.1} parent=11 // pred_fallthru
          _
        // Predicated region
        $region97: #{tpu_custom_call.1} parent=11 // pred_check
          %p799 = pneg %p559
        $region98: #{tpu_custom_call.1} parent=11 // pred_check_branch
          %801 = sbr.rel (%p799) target = $region100
        $region99: #{tpu_custom_call.1} parent=11 // pred_region
          _
        $region100: #{tpu_custom_call.1} parent=11 // pred_fallthru
          _
        // Predicated region
        $region101: #{tpu_custom_call.1} parent=11 // pred_check
          %p802 = pneg %p580
        $region102: #{tpu_custom_call.1} parent=11 // pred_check_branch
          %804 = sbr.rel (%p802) target = $region104
        $region103: #{tpu_custom_call.1} parent=11 // pred_region
          _
        $region104: #{tpu_custom_call.1} parent=11 // pred_fallthru
          _
      $region12: #{tpu_custom_call.1} parent=5 // pred_fallthru
        _
      %p805 = scmp.lt.s32.totalorder %s45, 2
      // Predicated region
      $region105: #{tpu_custom_call.1} parent=5 // pred_check
        %p806 = pneg %p805
      $region106: #{tpu_custom_call.1} parent=5 // pred_check_branch
        %808 = sbr.rel (%p806) target = $region108
      $region107: #{tpu_custom_call.1} parent=5 // pred_region
        // Predicated region
        $region109: #{tpu_custom_call.1} parent=107 // pred_check
          %p809 = pneg %p65
        $region110: #{tpu_custom_call.1} parent=107 // pred_check_branch
          %811 = sbr.rel (%p809) target = $region112
        $region111: #{tpu_custom_call.1} parent=107 // pred_region
          %s812 = sand.u32 %s55, 1
          %s813 = scalar_lea.sflag [#allocation7], %s812
          %s814 = sand.u32 %s55, 1
          %s815 = smul.addr %s814, 8
          %s816 = scalar_lea.vmem [#allocation6], %s815
          %s817 = smul.u32 2, %s45
          %819 = vsyncadd %s813, 0
          %s820 = smul.addr %s817, 4
          %s821 = scalar_lea.hbm %s0, %s820
          %s822 = sshll.u32 %s821, 4
          %s823 = int_to_ptr.hbm [resolvable:$true] %s822
          %s824 = sshll.u32 %s816, 4
          %s825 = int_to_ptr.vmem [resolvable:$true] %s824
          %830 = dma.hbm_to_vmem [thread:$0]  %s823, 128, %s825, %s813, 64, 64, 4
        $region112: #{tpu_custom_call.1} parent=107 // pred_fallthru
          _
        // Predicated region
        $region113: #{tpu_custom_call.1} parent=107 // pred_check
          %p831 = pneg %p91
        $region114: #{tpu_custom_call.1} parent=107 // pred_check_branch
          %833 = sbr.rel (%p831) target = $region116
        $region115: #{tpu_custom_call.1} parent=107 // pred_region
          %s834 = sand.u32 %s45, 1
          %s835 = scalar_lea.sflag [#allocation10], %s834
          %s836 = sand.u32 %s81, 1
          %s837 = smul.addr %s836, 8
          %s838 = scalar_lea.vmem [#allocation9], %s837
          %s839 = smul.u32 2, %s45
          %841 = vsyncadd %s835, 0
          %s842 = smul.addr %s839, 4
          %s843 = scalar_lea.hbm %s1, %s842
          %s844 = sshll.u32 %s843, 4
          %s845 = int_to_ptr.hbm [resolvable:$true] %s844
          %s846 = sshll.u32 %s838, 4
          %s847 = int_to_ptr.vmem [resolvable:$true] %s846
          %852 = dma.hbm_to_vmem [thread:$0]  %s845, 128, %s847, %s835, 64, 64, 4
        $region116: #{tpu_custom_call.1} parent=107 // pred_fallthru
          _
      $region108: #{tpu_custom_call.1} parent=5 // pred_fallthru
        _
      %p853 = scmp.le.s32.totalorder 1, %s45
      %p854 = scmp.lt.s32.totalorder %s45, 3
      %p855 = pnand %p853, %p854
      %p856 = pneg %p855
      // Predicated region
      $region117: #{tpu_custom_call.1} parent=5 // pred_check
        _
      $region118: #{tpu_custom_call.1} parent=5 // pred_check_branch
        %858 = sbr.rel (%p855) target = $region120
      $region119: #{tpu_custom_call.1} parent=5 // pred_region
        %s859 = ssub.s32 %s45, 1
        %s860 = sand.u32 %s58, 1
        %s861 = scalar_lea.sflag [#allocation7], %s860
        %s862 = sand.u32 %s58, 1
        %s863 = smul.addr %s862, 8
        %s864 = scalar_lea.vmem [#allocation6], %s863
        // Predicated region
        $region121: #{tpu_custom_call.1} parent=119 // pred_check
          %p865 = pneg %p71
        $region122: #{tpu_custom_call.1} parent=119 // pred_check_branch
          %867 = sbr.rel (%p865) target = $region124
        $region123: #{tpu_custom_call.1} parent=119 // pred_region
          %869 = dma.done %s861, 128
        $region124: #{tpu_custom_call.1} parent=119 // pred_fallthru
          _
        %s870 = sand.u32 %s50, 1
        %s871 = scalar_lea.sflag [#allocation10], %s870
        %s872 = sand.u32 %s84, 1
        %s873 = smul.addr %s872, 8
        %s874 = scalar_lea.vmem [#allocation9], %s873
        // Predicated region
        $region125: #{tpu_custom_call.1} parent=119 // pred_check
          %p875 = pneg %p97
        $region126: #{tpu_custom_call.1} parent=119 // pred_check_branch
          %877 = sbr.rel (%p875) target = $region128
        $region127: #{tpu_custom_call.1} parent=119 // pred_region
          %879 = dma.done %s871, 128
        $region128: #{tpu_custom_call.1} parent=119 // pred_fallthru
          _
        // Predicated region
        $region129: #{tpu_custom_call.1} parent=119 // pred_check
          %p880 = pneg %p118
        $region130: #{tpu_custom_call.1} parent=119 // pred_check_branch
          %882 = sbr.rel (%p880) target = $region132
        $region131: #{tpu_custom_call.1} parent=119 // pred_region
          %884 = dma.done [#allocation10], 1024
        $region132: #{tpu_custom_call.1} parent=119 // pred_fallthru
          _
        // Predicated region
        $region133: #{tpu_custom_call.1} parent=119 // pred_check
          %p885 = pneg %p139
        $region134: #{tpu_custom_call.1} parent=119 // pred_check_branch
          %887 = sbr.rel (%p885) target = $region136
        $region135: #{tpu_custom_call.1} parent=119 // pred_region
          %889 = dma.done [#allocation13], 16
        $region136: #{tpu_custom_call.1} parent=119 // pred_fallthru
          _
        // Predicated region
        $region137: #{tpu_custom_call.1} parent=119 // pred_check
          %p890 = pneg %p160
        $region138: #{tpu_custom_call.1} parent=119 // pred_check_branch
          %892 = sbr.rel (%p890) target = $region140
        $region139: #{tpu_custom_call.1} parent=119 // pred_region
          %894 = dma.done [#allocation13], 16
        $region140: #{tpu_custom_call.1} parent=119 // pred_fallthru
          _
        // Predicated region
        $region141: #{tpu_custom_call.1} parent=119 // pred_check
          %p895 = pneg %p181
        $region142: #{tpu_custom_call.1} parent=119 // pred_check_branch
          %897 = sbr.rel (%p895) target = $region144
        $region143: #{tpu_custom_call.1} parent=119 // pred_region
          %899 = dma.done [#allocation16], 16
        $region144: #{tpu_custom_call.1} parent=119 // pred_fallthru
          _
        // Predicated region
        $region145: #{tpu_custom_call.1} parent=119 // pred_check
          %p900 = pneg %p202
        $region146: #{tpu_custom_call.1} parent=119 // pred_check_branch
          %902 = sbr.rel (%p900) target = $region148
        $region147: #{tpu_custom_call.1} parent=119 // pred_region
          %904 = dma.done [#allocation16], 1024
        $region148: #{tpu_custom_call.1} parent=119 // pred_fallthru
          _
        // Predicated region
        $region149: #{tpu_custom_call.1} parent=119 // pred_check
          %p905 = pneg %p286
        $region150: #{tpu_custom_call.1} parent=119 // pred_check_branch
          %907 = sbr.rel (%p905) target = $region152
        $region151: #{tpu_custom_call.1} parent=119 // pred_region
          %909 = dma.done [#allocation19], 2048
        $region152: #{tpu_custom_call.1} parent=119 // pred_fallthru
          _
        // Predicated region
        $region153: #{tpu_custom_call.1} parent=119 // pred_check
          %p910 = pneg %p328
        $region154: #{tpu_custom_call.1} parent=119 // pred_check_branch
          %912 = sbr.rel (%p910) target = $region156
        $region155: #{tpu_custom_call.1} parent=119 // pred_region
          %914 = dma.done [#allocation19], 1024
        $region156: #{tpu_custom_call.1} parent=119 // pred_fallthru
          _
        // Predicated region
        $region157: #{tpu_custom_call.1} parent=119 // pred_check
          %p915 = pneg %p349
        $region158: #{tpu_custom_call.1} parent=119 // pred_check_branch
          %917 = sbr.rel (%p915) target = $region160
        $region159: #{tpu_custom_call.1} parent=119 // pred_region
          %919 = dma.done [#allocation22], 3072
        $region160: #{tpu_custom_call.1} parent=119 // pred_fallthru
          _
        // Predicated region
        $region161: #{tpu_custom_call.1} parent=119 // pred_check
          %p920 = pneg %p391
        $region162: #{tpu_custom_call.1} parent=119 // pred_check_branch
          %922 = sbr.rel (%p920) target = $region164
        $region163: #{tpu_custom_call.1} parent=119 // pred_region
          %924 = dma.done [#allocation22], 256
        $region164: #{tpu_custom_call.1} parent=119 // pred_fallthru
          _
        // Predicated region
        $region165: #{tpu_custom_call.1} parent=119 // pred_check
          %p925 = pneg %p454
        $region166: #{tpu_custom_call.1} parent=119 // pred_check_branch
          %927 = sbr.rel (%p925) target = $region168
        $region167: #{tpu_custom_call.1} parent=119 // pred_region
          %929 = dma.done [#allocation25], 1024
        $region168: #{tpu_custom_call.1} parent=119 // pred_fallthru
          _
        // Predicated region
        $region169: #{tpu_custom_call.1} parent=119 // pred_check
          %p930 = pneg %p538
        $region170: #{tpu_custom_call.1} parent=119 // pred_check_branch
          %932 = sbr.rel (%p930) target = $region172
        $region171: #{tpu_custom_call.1} parent=119 // pred_region
          %934 = dma.done [#allocation25], 1024
        $region172: #{tpu_custom_call.1} parent=119 // pred_fallthru
          _
        %s935 = sand.u32 %s58, 1
        %s936 = scalar_lea.sflag [#allocation7], %s935
        %s937 = sand.u32 %s58, 1
        %s938 = smul.addr %s937, 8
        %s939 = scalar_lea.vmem [#allocation6], %s938
        %p940 = pneg %p71
        %p941 = pneg %p68
        %s942 = sand.u32 %s50, 1
        %s943 = scalar_lea.sflag [#allocation10], %s942
        %s944 = sand.u32 %s84, 1
        %s945 = smul.addr %s944, 8
        %s946 = scalar_lea.vmem [#allocation9], %s945
        %p947 = pneg %p97
        %p948 = pneg %p94
        %p949 = pneg %p118
        %p950 = pneg %p115
        %p951 = pneg %p139
        %p952 = pneg %p136
        %p953 = pneg %p160
        %p954 = pneg %p157
        %p955 = pneg %p181
        %p956 = pneg %p178
        %p957 = pneg %p202
        %p958 = pneg %p199
        %p959 = pneg %p223
        %p960 = pneg %p220
        %p961 = pneg %p244
        %p962 = pneg %p241
        %p963 = pneg %p265
        %p964 = pneg %p262
        %p965 = pneg %p286
        %p966 = pneg %p283
        %p967 = pneg %p307
        %p968 = pneg %p304
        %p969 = pneg %p328
        %p970 = pneg %p325
        %p971 = pneg %p349
        %p972 = pneg %p346
        %p973 = pneg %p370
        %p974 = pneg %p367
        %p975 = pneg %p391
        %p976 = pneg %p388
        %p977 = pneg %p412
        %p978 = pneg %p409
        %p979 = pneg %p433
        %p980 = pneg %p430
        %p981 = pneg %p454
        %p982 = pneg %p451
        %p983 = pneg %p475
        %p984 = pneg %p472
        %p985 = pneg %p496
        %p986 = pneg %p493
        %p987 = pneg %p517
        %p988 = pneg %p514
        %p989 = pneg %p538
        %p990 = pneg %p535
        %p991 = pneg %p559
        %p992 = pneg %p556
        %p993 = pneg %p580
        %p994 = pneg %p577
        %p995 = pneg %p606
        %p996 = pneg %p603
        %s997 = sand.u32 %s593, 1
        %s998 = scalar_lea.sflag [#allocation8], %s997
        %s999 = sand.u32 %s593, 1
        %s1000 = smul.addr %s999, 16
        %s1001 = scalar_lea.vmem [#allocation27], %s1000
        %s1002 = smul.u32 2, %s50
        %s1003 = smul.u32 2, %s50
        %s1004 = smul.u32 2, %s50
        %v1006 = vld [vmem:[%s864] sm:$0xf]
        %v1007 = vld [vmem:[%s864 + $0x4] sm:$0xf]
        %v1008 = vld [vmem:[#allocation11] sm:$0xf]
        %v1009 = vld [vmem:[#allocation11 + $0x4] sm:$0xf]
        %v1010 = vld [vmem:[#allocation11 + $0x8] sm:$0xf]
        %v1011 = vld [vmem:[#allocation11 + $0xc] sm:$0xf]
        %v1012 = vld [vmem:[#allocation11 + $0x10] sm:$0xf]
        %v1013 = vld [vmem:[#allocation11 + $0x14] sm:$0xf]
        %v1014 = vld [vmem:[#allocation11 + $0x18] sm:$0xf]
        %v1015 = vld [vmem:[#allocation11 + $0x1c] sm:$0xf]
        %v1016 = vld [vmem:[#allocation11 + $0x20] sm:$0xf]
        %v1017 = vld [vmem:[#allocation11 + $0x24] sm:$0xf]
        %v1018 = vld [vmem:[#allocation11 + $0x28] sm:$0xf]
        %v1019 = vld [vmem:[#allocation11 + $0x2c] sm:$0xf]
        %v1020 = vld [vmem:[#allocation11 + $0x30] sm:$0xf]
        %v1021 = vld [vmem:[#allocation11 + $0x34] sm:$0xf]
        %v1022 = vld [vmem:[#allocation11 + $0x38] sm:$0xf]
        %v1023 = vld [vmem:[#allocation11 + $0x3c] sm:$0xf]
        %v1024 = vld [vmem:[#allocation12] sm:$0x1]
        %v1026 = vperm.slane %v1024, 0
        %v1030 = vunpack.c.l.b16 %v1006
        %v1031 = vunpack.c.l.b16 %v1007
        %v1032 = vpack.c.b16 %v1031, %v1030
        %v1050 = vunpack.c.l.b16 %v1008
        %v1051 = vunpack.c.l.b16 %v1009
        %v1052 = vunpack.c.l.b16 %v1010
        %v1053 = vunpack.c.l.b16 %v1011
        %v1054 = vunpack.c.l.b16 %v1012
        %v1055 = vunpack.c.l.b16 %v1013
        %v1056 = vunpack.c.l.b16 %v1014
        %v1057 = vunpack.c.l.b16 %v1015
        %v1058 = vunpack.c.l.b16 %v1016
        %v1059 = vunpack.c.l.b16 %v1017
        %v1060 = vunpack.c.l.b16 %v1018
        %v1061 = vunpack.c.l.b16 %v1019
        %v1062 = vunpack.c.l.b16 %v1020
        %v1063 = vunpack.c.l.b16 %v1021
        %v1064 = vunpack.c.l.b16 %v1022
        %v1065 = vunpack.c.l.b16 %v1023
        %v1066 = vpack.c.b16 %v1051, %v1050
        %v1067 = vpack.c.b16 %v1053, %v1052
        %v1068 = vpack.c.b16 %v1055, %v1054
        %v1069 = vpack.c.b16 %v1057, %v1056
        %v1070 = vpack.c.b16 %v1059, %v1058
        %v1071 = vpack.c.b16 %v1061, %v1060
        %v1072 = vpack.c.b16 %v1063, %v1062
        %v1073 = vpack.c.b16 %v1065, %v1064
        %1082 = vmatpush.bf16.msra.mxu0 %v1073
        %1083 = vmatpush.bf16.msra.mxu0 %v1072
        %1084 = vmatpush.bf16.msra.mxu0 %v1071
        %1085 = vmatpush.bf16.msra.mxu0 %v1070
        %1086 = vmatpush.bf16.msra.mxu0 %v1069
        %1087 = vmatpush.bf16.msra.mxu0 %v1068
        %1088 = vmatpush.bf16.msra.mxu0 %v1067
        %1089 = vmatpush.bf16.msra.mxu0 %v1066
        %1090 = vmatmul.bf16.gmra.mxu0 %v1032
        %v1091 = vpop.f32.mrf.mxu0
        %v1092 = vadd.f32 %v1026, %v1091
        %v1093 = vpop.f32.mrf.mxu0
        %v1094 = vadd.f32 %v1026, %v1093
        %1095 = vdwg.mxu0
        %v1096 = vld [vmem:[#allocation15] sm:$0x1]
        %v1098 = vperm.slane %v1096, 0
        %v1100 = vmul.f32 %v1092, %v1098
        %v1101 = vmul.f32 %v1094, %v1098
        %v1102 = vtanh.pop %v1100
        %v1103 = vtanh.pop %v1101
        %v1104 = vld [vmem:[#allocation14] sm:$0x1]
        %v1106 = vperm.slane %v1104, 0
        %v1108 = vmul.f32 %v1102, %v1106
        %v1109 = vmul.f32 %v1103, %v1106
        %v1110 = vpack.c.bf16 %v1109, %v1108
        %v1111 = vld [vmem:[#allocation17] sm:$0xf]
        %v1112 = vld [vmem:[#allocation17 + $0x4] sm:$0xf]
        %v1113 = vld [vmem:[#allocation17 + $0x8] sm:$0xf]
        %v1114 = vld [vmem:[#allocation17 + $0xc] sm:$0xf]
        %v1115 = vld [vmem:[#allocation17 + $0x10] sm:$0xf]
        %v1116 = vld [vmem:[#allocation17 + $0x14] sm:$0xf]
        %v1117 = vld [vmem:[#allocation17 + $0x18] sm:$0xf]
        %v1118 = vld [vmem:[#allocation17 + $0x1c] sm:$0xf]
        %v1119 = vld [vmem:[#allocation17 + $0x20] sm:$0xf]
        %v1120 = vld [vmem:[#allocation17 + $0x24] sm:$0xf]
        %v1121 = vld [vmem:[#allocation17 + $0x28] sm:$0xf]
        %v1122 = vld [vmem:[#allocation17 + $0x2c] sm:$0xf]
        %v1123 = vld [vmem:[#allocation17 + $0x30] sm:$0xf]
        %v1124 = vld [vmem:[#allocation17 + $0x34] sm:$0xf]
        %v1125 = vld [vmem:[#allocation17 + $0x38] sm:$0xf]
        %v1126 = vld [vmem:[#allocation17 + $0x3c] sm:$0xf]
        %v1127 = vld [vmem:[%s7] sm:$0x1]
        %v1129 = vperm.slane %v1127, 0
        %v1147 = vunpack.c.l.b16 %v1111
        %v1148 = vunpack.c.l.b16 %v1112
        %v1149 = vunpack.c.l.b16 %v1113
        %v1150 = vunpack.c.l.b16 %v1114
        %v1151 = vunpack.c.l.b16 %v1115
        %v1152 = vunpack.c.l.b16 %v1116
        %v1153 = vunpack.c.l.b16 %v1117
        %v1154 = vunpack.c.l.b16 %v1118
        %v1155 = vunpack.c.l.b16 %v1119
        %v1156 = vunpack.c.l.b16 %v1120
        %v1157 = vunpack.c.l.b16 %v1121
        %v1158 = vunpack.c.l.b16 %v1122
        %v1159 = vunpack.c.l.b16 %v1123
        %v1160 = vunpack.c.l.b16 %v1124
        %v1161 = vunpack.c.l.b16 %v1125
        %v1162 = vunpack.c.l.b16 %v1126
        %v1163 = vpack.c.b16 %v1148, %v1147
        %v1164 = vpack.c.b16 %v1150, %v1149
        %v1165 = vpack.c.b16 %v1152, %v1151
        %v1166 = vpack.c.b16 %v1154, %v1153
        %v1167 = vpack.c.b16 %v1156, %v1155
        %v1168 = vpack.c.b16 %v1158, %v1157
        %v1169 = vpack.c.b16 %v1160, %v1159
        %v1170 = vpack.c.b16 %v1162, %v1161
        %1179 = vmatpush.bf16.msra.mxu0 %v1170
        %1180 = vmatpush.bf16.msra.mxu0 %v1169
        %1181 = vmatpush.bf16.msra.mxu0 %v1168
        %1182 = vmatpush.bf16.msra.mxu0 %v1167
        %1183 = vmatpush.bf16.msra.mxu0 %v1166
        %1184 = vmatpush.bf16.msra.mxu0 %v1165
        %1185 = vmatpush.bf16.msra.mxu0 %v1164
        %1186 = vmatpush.bf16.msra.mxu0 %v1163
        %1187 = vmatmul.bf16.gmra.mxu0 %v1110
        %v1188 = vpop.f32.mrf.mxu0
        %v1189 = vadd.f32 %v1129, %v1188
        %v1190 = vpop.f32.mrf.mxu0
        %v1191 = vadd.f32 %v1129, %v1190
        %1192 = vdwg.mxu0
        %v1193 = vld [vmem:[%s9] sm:$0x1]
        %v1195 = vperm.slane %v1193, 0
        %v1197 = vmul.f32 %v1189, %v1195
        %v1198 = vmul.f32 %v1191, %v1195
        %v1199 = vtanh.pop %v1197
        %v1200 = vtanh.pop %v1198
        %v1201 = vld [vmem:[%s8] sm:$0x1]
        %v1203 = vperm.slane %v1201, 0
        %v1205 = vmul.f32 %v1199, %v1203
        %v1206 = vmul.f32 %v1200, %v1203
        %v1207 = vpack.c.bf16 %v1206, %v1205
        %v1208 = vld [vmem:[#allocation18] sm:$0xff]
        %v1209 = vld [vmem:[#allocation18 + $0x8] sm:$0xff]
        %v1210 = vld [vmem:[#allocation18 + $0x10] sm:$0xff]
        %v1211 = vld [vmem:[#allocation18 + $0x18] sm:$0xff]
        %v1212 = vld [vmem:[#allocation18 + $0x20] sm:$0xff]
        %v1213 = vld [vmem:[#allocation18 + $0x28] sm:$0xff]
        %v1214 = vld [vmem:[#allocation18 + $0x30] sm:$0xff]
        %v1215 = vld [vmem:[#allocation18 + $0x38] sm:$0xff]
        %v1216 = vld [vmem:[#allocation18 + $0x40] sm:$0xff]
        %v1217 = vld [vmem:[#allocation18 + $0x48] sm:$0xff]
        %v1218 = vld [vmem:[#allocation18 + $0x50] sm:$0xff]
        %v1219 = vld [vmem:[#allocation18 + $0x58] sm:$0xff]
        %v1220 = vld [vmem:[#allocation18 + $0x60] sm:$0xff]
        %v1221 = vld [vmem:[#allocation18 + $0x68] sm:$0xff]
        %v1222 = vld [vmem:[#allocation18 + $0x70] sm:$0xff]
        %v1223 = vld [vmem:[#allocation18 + $0x78] sm:$0xff]
        %v1224 = vld [vmem:[%s11] sm:$0x3]
        %v1226 = vperm.slane %v1224, 0
        %v1227 = vperm.slane %v1224, 1
        %v1246 = vunpack.c.l.b16 %v1208
        %v1247 = vunpack.c.h.b16 %v1208
        %v1248 = vunpack.c.l.b16 %v1209
        %v1249 = vunpack.c.h.b16 %v1209
        %v1250 = vunpack.c.l.b16 %v1210
        %v1251 = vunpack.c.h.b16 %v1210
        %v1252 = vunpack.c.l.b16 %v1211
        %v1253 = vunpack.c.h.b16 %v1211
        %v1254 = vunpack.c.l.b16 %v1212
        %v1255 = vunpack.c.h.b16 %v1212
        %v1256 = vunpack.c.l.b16 %v1213
        %v1257 = vunpack.c.h.b16 %v1213
        %v1258 = vunpack.c.l.b16 %v1214
        %v1259 = vunpack.c.h.b16 %v1214
        %v1260 = vunpack.c.l.b16 %v1215
        %v1261 = vunpack.c.h.b16 %v1215
        %v1262 = vunpack.c.l.b16 %v1216
        %v1263 = vunpack.c.h.b16 %v1216
        %v1264 = vunpack.c.l.b16 %v1217
        %v1265 = vunpack.c.h.b16 %v1217
        %v1266 = vunpack.c.l.b16 %v1218
        %v1267 = vunpack.c.h.b16 %v1218
        %v1268 = vunpack.c.l.b16 %v1219
        %v1269 = vunpack.c.h.b16 %v1219
        %v1270 = vunpack.c.l.b16 %v1220
        %v1271 = vunpack.c.h.b16 %v1220
        %v1272 = vunpack.c.l.b16 %v1221
        %v1273 = vunpack.c.h.b16 %v1221
        %v1274 = vunpack.c.l.b16 %v1222
        %v1275 = vunpack.c.h.b16 %v1222
        %v1276 = vunpack.c.l.b16 %v1223
        %v1277 = vunpack.c.h.b16 %v1223
        %v1278 = vpack.c.b16 %v1248, %v1246
        %v1279 = vpack.c.b16 %v1249, %v1247
        %v1280 = vpack.c.b16 %v1252, %v1250
        %v1281 = vpack.c.b16 %v1253, %v1251
        %v1282 = vpack.c.b16 %v1256, %v1254
        %v1283 = vpack.c.b16 %v1257, %v1255
        %v1284 = vpack.c.b16 %v1260, %v1258
        %v1285 = vpack.c.b16 %v1261, %v1259
        %v1286 = vpack.c.b16 %v1264, %v1262
        %v1287 = vpack.c.b16 %v1265, %v1263
        %v1288 = vpack.c.b16 %v1268, %v1266
        %v1289 = vpack.c.b16 %v1269, %v1267
        %v1290 = vpack.c.b16 %v1272, %v1270
        %v1291 = vpack.c.b16 %v1273, %v1271
        %v1292 = vpack.c.b16 %v1276, %v1274
        %v1293 = vpack.c.b16 %v1277, %v1275
        %1310 = vmatpush.bf16.msra.mxu0 %v1292
        %1311 = vmatpush.bf16.msra.mxu0 %v1290
        %1312 = vmatpush.bf16.msra.mxu0 %v1288
        %1313 = vmatpush.bf16.msra.mxu0 %v1286
        %1314 = vmatpush.bf16.msra.mxu0 %v1284
        %1315 = vmatpush.bf16.msra.mxu0 %v1282
        %1316 = vmatpush.bf16.msra.mxu0 %v1280
        %1317 = vmatpush.bf16.msra.mxu0 %v1278
        %1318 = vmatmul.bf16.gmra.mxu0 %v1207
        %v1319 = vpop.f32.mrf.mxu0
        %v1320 = vadd.f32 %v1226, %v1319
        %v1321 = vpop.f32.mrf.mxu0
        %v1322 = vadd.f32 %v1226, %v1321
        %1323 = vdwg.mxu0
        %1324 = vmatpush.bf16.msra.mxu0 %v1293
        %1325 = vmatpush.bf16.msra.mxu0 %v1291
        %1326 = vmatpush.bf16.msra.mxu0 %v1289
        %1327 = vmatpush.bf16.msra.mxu0 %v1287
        %1328 = vmatpush.bf16.msra.mxu0 %v1285
        %1329 = vmatpush.bf16.msra.mxu0 %v1283
        %1330 = vmatpush.bf16.msra.mxu0 %v1281
        %1331 = vmatpush.bf16.msra.mxu0 %v1279
        %1332 = vmatmul.bf16.gmra.mxu0 %v1207
        %v1333 = vpop.f32.mrf.mxu0
        %v1334 = vadd.f32 %v1227, %v1333
        %v1335 = vpop.f32.mrf.mxu0
        %v1336 = vadd.f32 %v1227, %v1335
        %1337 = vdwg.mxu0
        %v1338 = vmul.f32 %v1334, 0.5
        %v1339 = vmul.f32 %v1336, 0.5
        %v1340 = vmul.f32 %v1338, 1.442695
        %v1341 = vpow.pop %v1340
        %v1342 = vmul.f32 %v1339, 1.442695
        %v1343 = vpow.pop %v1342
        %v1344 = vld [vmem:[%s874] sm:$0xf]
        %v1345 = vld [vmem:[%s874 + $0x4] sm:$0xf]
        %v1346 = vunpack.c.l.bf16 %v1344
        %v1347 = vunpack.c.l.bf16 %v1345
        %v1348 = vmul.f32 %v1346, %v1341
        %v1349 = vmul.f32 %v1347, %v1343
        %v1350 = vadd.f32 %v1320, %v1348
        %v1351 = vadd.f32 %v1322, %v1349
        %v1352 = vadd.f32 %v1334, 1.0
        %v1353 = vadd.f32 %v1336, 1.0
        %v1354 = vmul.f32 %v1320, %v1320
        %v1355 = vmul.f32 %v1322, %v1322
        %v1356 = vsub.f32 %v1352, %v1354
        %v1357 = vsub.f32 %v1353, %v1355
        %v1358 = vmul.f32 %v1341, %v1341
        %v1359 = vmul.f32 %v1343, %v1343
        %v1360 = vsub.f32 %v1356, %v1358
        %v1361 = vsub.f32 %v1357, %v1359
        %1362 = vadd.xlane.f32.xlu0 %v1360
        %v1363 = vpop.xlane.xlu0 %1362
        %1364 = vadd.xlane.f32.xlu0 %v1361
        %v1365 = vpop.xlane.xlu0 %1364
        %vm1366 = vcmask 7168
        %1367 = vst.msk [vmem:[#allocation5] sm:$0xff] %vm1366, %v1363
        %1368 = vst.msk [vmem:[#allocation5 + $0x8] sm:$0xff] %vm1366, %v1365
        %v1369 = vpack.c.bf16 %v1351, %v1350
        %v1370 = vld [vmem:[#allocation20] sm:$0xf]
        %v1371 = vld [vmem:[#allocation20 + $0x4] sm:$0xf]
        %v1372 = vld [vmem:[#allocation20 + $0x8] sm:$0xf]
        %v1373 = vld [vmem:[#allocation20 + $0xc] sm:$0xf]
        %v1374 = vld [vmem:[#allocation20 + $0x10] sm:$0xf]
        %v1375 = vld [vmem:[#allocation20 + $0x14] sm:$0xf]
        %v1376 = vld [vmem:[#allocation20 + $0x18] sm:$0xf]
        %v1377 = vld [vmem:[#allocation20 + $0x1c] sm:$0xf]
        %v1378 = vld [vmem:[#allocation20 + $0x20] sm:$0xf]
        %v1379 = vld [vmem:[#allocation20 + $0x24] sm:$0xf]
        %v1380 = vld [vmem:[#allocation20 + $0x28] sm:$0xf]
        %v1381 = vld [vmem:[#allocation20 + $0x2c] sm:$0xf]
        %v1382 = vld [vmem:[#allocation20 + $0x30] sm:$0xf]
        %v1383 = vld [vmem:[#allocation20 + $0x34] sm:$0xf]
        %v1384 = vld [vmem:[#allocation20 + $0x38] sm:$0xf]
        %v1385 = vld [vmem:[#allocation20 + $0x3c] sm:$0xf]
        %v1402 = vunpack.c.l.b16 %v1370
        %v1403 = vunpack.c.l.b16 %v1371
        %v1404 = vunpack.c.l.b16 %v1372
        %v1405 = vunpack.c.l.b16 %v1373
        %v1406 = vunpack.c.l.b16 %v1374
        %v1407 = vunpack.c.l.b16 %v1375
        %v1408 = vunpack.c.l.b16 %v1376
        %v1409 = vunpack.c.l.b16 %v1377
        %v1410 = vunpack.c.l.b16 %v1378
        %v1411 = vunpack.c.l.b16 %v1379
        %v1412 = vunpack.c.l.b16 %v1380
        %v1413 = vunpack.c.l.b16 %v1381
        %v1414 = vunpack.c.l.b16 %v1382
        %v1415 = vunpack.c.l.b16 %v1383
        %v1416 = vunpack.c.l.b16 %v1384
        %v1417 = vunpack.c.l.b16 %v1385
        %v1418 = vpack.c.b16 %v1403, %v1402
        %v1419 = vpack.c.b16 %v1405, %v1404
        %v1420 = vpack.c.b16 %v1407, %v1406
        %v1421 = vpack.c.b16 %v1409, %v1408
        %v1422 = vpack.c.b16 %v1411, %v1410
        %v1423 = vpack.c.b16 %v1413, %v1412
        %v1424 = vpack.c.b16 %v1415, %v1414
        %v1425 = vpack.c.b16 %v1417, %v1416
        %1434 = vmatpush.bf16.msra.mxu0 %v1425
        %1435 = vmatpush.bf16.msra.mxu0 %v1424
        %1436 = vmatpush.bf16.msra.mxu0 %v1423
        %1437 = vmatpush.bf16.msra.mxu0 %v1422
        %1438 = vmatpush.bf16.msra.mxu0 %v1421
        %1439 = vmatpush.bf16.msra.mxu0 %v1420
        %1440 = vmatpush.bf16.msra.mxu0 %v1419
        %1441 = vmatpush.bf16.msra.mxu0 %v1418
        %1442 = vmatmul.bf16.gmra.mxu0 %v1369
        %v1443 = vpop.f32.mrf.mxu0
        %v1444 = vadd.f32 0.0, %v1443
        %v1445 = vpop.f32.mrf.mxu0
        %v1446 = vadd.f32 0.0, %v1445
        %1447 = vdwg.mxu0
        %v1448 = vpack.c.bf16 %v1446, %v1444
        %v1449 = vld [vmem:[#allocation21] sm:$0xff]
        %v1450 = vld [vmem:[#allocation21 + $0x8] sm:$0xf]
        %v1451 = vld [vmem:[#allocation21 + $0xc] sm:$0xff]
        %v1452 = vld [vmem:[#allocation21 + $0x14] sm:$0xf]
        %v1453 = vld [vmem:[#allocation21 + $0x18] sm:$0xff]
        %v1454 = vld [vmem:[#allocation21 + $0x20] sm:$0xf]
        %v1455 = vld [vmem:[#allocation21 + $0x24] sm:$0xff]
        %v1456 = vld [vmem:[#allocation21 + $0x2c] sm:$0xf]
        %v1457 = vld [vmem:[#allocation21 + $0x30] sm:$0xff]
        %v1458 = vld [vmem:[#allocation21 + $0x38] sm:$0xf]
        %v1459 = vld [vmem:[#allocation21 + $0x3c] sm:$0xff]
        %v1460 = vld [vmem:[#allocation21 + $0x44] sm:$0xf]
        %v1461 = vld [vmem:[#allocation21 + $0x48] sm:$0xff]
        %v1462 = vld [vmem:[#allocation21 + $0x50] sm:$0xf]
        %v1463 = vld [vmem:[#allocation21 + $0x54] sm:$0xff]
        %v1464 = vld [vmem:[#allocation21 + $0x5c] sm:$0xf]
        %v1465 = vld [vmem:[#allocation21 + $0x60] sm:$0xff]
        %v1466 = vld [vmem:[#allocation21 + $0x68] sm:$0xf]
        %v1467 = vld [vmem:[#allocation21 + $0x6c] sm:$0xff]
        %v1468 = vld [vmem:[#allocation21 + $0x74] sm:$0xf]
        %v1469 = vld [vmem:[#allocation21 + $0x78] sm:$0xff]
        %v1470 = vld [vmem:[#allocation21 + $0x80] sm:$0xf]
        %v1471 = vld [vmem:[#allocation21 + $0x84] sm:$0xff]
        %v1472 = vld [vmem:[#allocation21 + $0x8c] sm:$0xf]
        %v1473 = vld [vmem:[#allocation21 + $0x90] sm:$0xff]
        %v1474 = vld [vmem:[#allocation21 + $0x98] sm:$0xf]
        %v1475 = vld [vmem:[#allocation21 + $0x9c] sm:$0xff]
        %v1476 = vld [vmem:[#allocation21 + $0xa4] sm:$0xf]
        %v1477 = vld [vmem:[#allocation21 + $0xa8] sm:$0xff]
        %v1478 = vld [vmem:[#allocation21 + $0xb0] sm:$0xf]
        %v1479 = vld [vmem:[#allocation21 + $0xb4] sm:$0xff]
        %v1480 = vld [vmem:[#allocation21 + $0xbc] sm:$0xf]
        %v1481 = vld [vmem:[%s14] sm:$0x7]
        %v1483 = vperm.slane %v1481, 0
        %v1484 = vperm.slane %v1481, 1
        %v1485 = vperm.slane %v1481, 2
        %v1521 = vunpack.c.l.b16 %v1449
        %v1522 = vunpack.c.h.b16 %v1449
        %v1523 = vunpack.c.l.b16 %v1450
        %v1524 = vunpack.c.l.b16 %v1451
        %v1525 = vunpack.c.h.b16 %v1451
        %v1526 = vunpack.c.l.b16 %v1452
        %v1527 = vunpack.c.l.b16 %v1453
        %v1528 = vunpack.c.h.b16 %v1453
        %v1529 = vunpack.c.l.b16 %v1454
        %v1530 = vunpack.c.l.b16 %v1455
        %v1531 = vunpack.c.h.b16 %v1455
        %v1532 = vunpack.c.l.b16 %v1456
        %v1533 = vunpack.c.l.b16 %v1457
        %v1534 = vunpack.c.h.b16 %v1457
        %v1535 = vunpack.c.l.b16 %v1458
        %v1536 = vunpack.c.l.b16 %v1459
        %v1537 = vunpack.c.h.b16 %v1459
        %v1538 = vunpack.c.l.b16 %v1460
        %v1539 = vunpack.c.l.b16 %v1461
        %v1540 = vunpack.c.h.b16 %v1461
        %v1541 = vunpack.c.l.b16 %v1462
        %v1542 = vunpack.c.l.b16 %v1463
        %v1543 = vunpack.c.h.b16 %v1463
        %v1544 = vunpack.c.l.b16 %v1464
        %v1545 = vunpack.c.l.b16 %v1465
        %v1546 = vunpack.c.h.b16 %v1465
        %v1547 = vunpack.c.l.b16 %v1466
        %v1548 = vunpack.c.l.b16 %v1467
        %v1549 = vunpack.c.h.b16 %v1467
        %v1550 = vunpack.c.l.b16 %v1468
        %v1551 = vunpack.c.l.b16 %v1469
        %v1552 = vunpack.c.h.b16 %v1469
        %v1553 = vunpack.c.l.b16 %v1470
        %v1554 = vunpack.c.l.b16 %v1471
        %v1555 = vunpack.c.h.b16 %v1471
        %v1556 = vunpack.c.l.b16 %v1472
        %v1557 = vunpack.c.l.b16 %v1473
        %v1558 = vunpack.c.h.b16 %v1473
        %v1559 = vunpack.c.l.b16 %v1474
        %v1560 = vunpack.c.l.b16 %v1475
        %v1561 = vunpack.c.h.b16 %v1475
        %v1562 = vunpack.c.l.b16 %v1476
        %v1563 = vunpack.c.l.b16 %v1477
        %v1564 = vunpack.c.h.b16 %v1477
        %v1565 = vunpack.c.l.b16 %v1478
        %v1566 = vunpack.c.l.b16 %v1479
        %v1567 = vunpack.c.h.b16 %v1479
        %v1568 = vunpack.c.l.b16 %v1480
        %v1569 = vpack.c.b16 %v1524, %v1521
        %v1570 = vpack.c.b16 %v1525, %v1522
        %v1571 = vpack.c.b16 %v1526, %v1523
        %v1572 = vpack.c.b16 %v1530, %v1527
        %v1573 = vpack.c.b16 %v1531, %v1528
        %v1574 = vpack.c.b16 %v1532, %v1529
        %v1575 = vpack.c.b16 %v1536, %v1533
        %v1576 = vpack.c.b16 %v1537, %v1534
        %v1577 = vpack.c.b16 %v1538, %v1535
        %v1578 = vpack.c.b16 %v1542, %v1539
        %v1579 = vpack.c.b16 %v1543, %v1540
        %v1580 = vpack.c.b16 %v1544, %v1541
        %v1581 = vpack.c.b16 %v1548, %v1545
        %v1582 = vpack.c.b16 %v1549, %v1546
        %v1583 = vpack.c.b16 %v1550, %v1547
        %v1584 = vpack.c.b16 %v1554, %v1551
        %v1585 = vpack.c.b16 %v1555, %v1552
        %v1586 = vpack.c.b16 %v1556, %v1553
        %v1587 = vpack.c.b16 %v1560, %v1557
        %v1588 = vpack.c.b16 %v1561, %v1558
        %v1589 = vpack.c.b16 %v1562, %v1559
        %v1590 = vpack.c.b16 %v1566, %v1563
        %v1591 = vpack.c.b16 %v1567, %v1564
        %v1592 = vpack.c.b16 %v1568, %v1565
        %1617 = vmatpush.bf16.msra.mxu0 %v1590
        %1618 = vmatpush.bf16.msra.mxu0 %v1587
        %1619 = vmatpush.bf16.msra.mxu0 %v1584
        %1620 = vmatpush.bf16.msra.mxu0 %v1581
        %1621 = vmatpush.bf16.msra.mxu0 %v1578
        %1622 = vmatpush.bf16.msra.mxu0 %v1575
        %1623 = vmatpush.bf16.msra.mxu0 %v1572
        %1624 = vmatpush.bf16.msra.mxu0 %v1569
        %1625 = vmatmul.bf16.gmra.mxu0 %v1448
        %v1626 = vpop.f32.mrf.mxu0
        %v1627 = vadd.f32 %v1483, %v1626
        %v1628 = vpop.f32.mrf.mxu0
        %v1629 = vadd.f32 %v1483, %v1628
        %1630 = vdwg.mxu0
        %1631 = vmatpush.bf16.msra.mxu0 %v1591
        %1632 = vmatpush.bf16.msra.mxu0 %v1588
        %1633 = vmatpush.bf16.msra.mxu0 %v1585
        %1634 = vmatpush.bf16.msra.mxu0 %v1582
        %1635 = vmatpush.bf16.msra.mxu0 %v1579
        %1636 = vmatpush.bf16.msra.mxu0 %v1576
        %1637 = vmatpush.bf16.msra.mxu0 %v1573
        %1638 = vmatpush.bf16.msra.mxu0 %v1570
        %1639 = vmatmul.bf16.gmra.mxu0 %v1448
        %v1640 = vpop.f32.mrf.mxu0
        %v1641 = vadd.f32 %v1484, %v1640
        %v1642 = vpop.f32.mrf.mxu0
        %v1643 = vadd.f32 %v1484, %v1642
        %1644 = vdwg.mxu0
        %1645 = vmatpush.bf16.msra.mxu0 %v1592
        %1646 = vmatpush.bf16.msra.mxu0 %v1589
        %1647 = vmatpush.bf16.msra.mxu0 %v1586
        %1648 = vmatpush.bf16.msra.mxu0 %v1583
        %1649 = vmatpush.bf16.msra.mxu0 %v1580
        %1650 = vmatpush.bf16.msra.mxu0 %v1577
        %1651 = vmatpush.bf16.msra.mxu0 %v1574
        %1652 = vmatpush.bf16.msra.mxu0 %v1571
        %1653 = vmatmul.bf16.gmra.mxu0 %v1448
        %v1654 = vpop.f32.mrf.mxu0
        %v1655 = vadd.f32 %v1485, %v1654
        %v1656 = vpop.f32.mrf.mxu0
        %v1657 = vadd.f32 %v1485, %v1656
        %1658 = vdwg.mxu0
        %v1659 = vpack.c.bf16 %v1641, %v1627
        %v1660 = vpack.c.bf16 %v1655, %v1655
        %v1661 = vpack.c.bf16 %v1643, %v1629
        %v1662 = vpack.c.bf16 %v1657, %v1657
        %1663 = vst [vmem:[#allocation3] sm:$0xff] %v1659
        %1664 = vst [vmem:[#allocation3 + $0x8] sm:$0xf] %v1660
        %1665 = vst [vmem:[#allocation3 + $0xc] sm:$0xff] %v1661
        %1666 = vst [vmem:[#allocation3 + $0x14] sm:$0xf] %v1662
        %1667 = vst [vmem:[#allocation4] sm:$0xff] %v1444
        %1668 = vst [vmem:[#allocation4 + $0x8] sm:$0xff] %v1446
        %v1669 = vld [vmem:[#allocation3] sm:$0xf]
        %v1670 = vld [vmem:[#allocation3 + $0x4] sm:$0xf]
        %v1671 = vld [vmem:[#allocation3 + $0x8] sm:$0xf]
        %vm1672 = vcmask 64512
        %v1674 = vsel %vm1672, %v1669, 0
        %v1677 = vsel %vm1672, %v1670, 0
        %1679 = vmatpush.bf16.xpose.msra.mxu0 0
        %1680 = vmatpush.bf16.xpose.msra.mxu0 0
        %1681 = vmatpush.bf16.xpose.msra.mxu0 0
        %1682 = vmatpush.bf16.xpose.msra.mxu0 0
        %1683 = vmatpush.bf16.xpose.msra.mxu0 0
        %1684 = vmatpush.bf16.xpose.msra.mxu0 0
        %1685 = vmatpush.bf16.xpose.msra.mxu0 0
        %1686 = vmatpush.bf16.xpose.msra.mxu0 %v1677
        %1687 = vmatmul.bf16.gmra.mxu0 %v1674
        %v1688 = vpop.f32.mrf.mxu0
        %v1689 = vadd.f32 0.0, %v1688
        %v1690 = vpop.f32.mrf.mxu0
        %1691 = vdwg.mxu0
        %v1692 = vmul.f32 %v1689, 0.35355338
        %v1693 = vsel %vm1672, %v1692, -inf
        %1694 = vmax.xlane.f32.xlu0 %v1693
        %v1695 = vpop.xlane.xlu0 %1694
        %v1696 = vsub.f32 %v1692, %v1695
        %v1697 = vmul.f32 %v1696, 1.442695
        %v1698 = vpow.pop %v1697
        %v1699 = vsel %vm1672, %v1698, 0.0
        %1700 = vadd.xlane.f32.xlu0 %v1699
        %v1701 = vpop.xlane.xlu0 %1700
        %v1702 = vrcp.pop %v1701
        %v1703 = vmul.f32 %v1698, %v1702
        %v1704 = vpack.c.bf16 %v1703, %v1703
        %v1706 = vsel %vm1672, %v1704, 0
        %vm1708 = vcmask 1043456
        %v1710 = vsel %vm1708, %v1671, 0
        %1712 = vmatpush.bf16.msra.mxu0 0
        %1713 = vmatpush.bf16.msra.mxu0 0
        %1714 = vmatpush.bf16.msra.mxu0 0
        %1715 = vmatpush.bf16.msra.mxu0 0
        %1716 = vmatpush.bf16.msra.mxu0 0
        %1717 = vmatpush.bf16.msra.mxu0 0
        %1718 = vmatpush.bf16.msra.mxu0 0
        %1719 = vmatpush.bf16.msra.mxu0 %v1710
        %1720 = vmatmul.bf16.gmra.mxu0 %v1706
        %v1721 = vpop.f32.mrf.mxu0
        %v1722 = vadd.f32 0.0, %v1721
        %v1723 = vpop.f32.mrf.mxu0
        %1724 = vdwg.mxu0
        %1725 = vst.msk [vmem:[#allocation2] sm:$0xff] %vm1672, %v1722
        %v1726 = vld [vmem:[#allocation3] sm:$0xf]
        %v1727 = vld [vmem:[#allocation3 + $0x4] sm:$0xf]
        %v1728 = vld [vmem:[#allocation3 + $0x8] sm:$0xf]
        %v1730 = vunpack.c.l.b16 %v1726
        %v1731 = vpack.c.b16 %v1730, %v1730
        %1732 = vrot.lane.b32.xlu0 %v1731, 120
        %v1733 = vpop.permute.xlu0 %1732
        %v1735 = vunpack.c.l.b16 %v1727
        %v1736 = vpack.c.b16 %v1735, %v1735
        %1737 = vrot.lane.b32.xlu0 %v1736, 120
        %v1738 = vpop.permute.xlu0 %1737
        %v1740 = vsel %vm1672, %v1733, 0
        %v1743 = vsel %vm1672, %v1738, 0
        %1745 = vmatpush.bf16.xpose.msra.mxu0 0
        %1746 = vmatpush.bf16.xpose.msra.mxu0 0
        %1747 = vmatpush.bf16.xpose.msra.mxu0 0
        %1748 = vmatpush.bf16.xpose.msra.mxu0 0
        %1749 = vmatpush.bf16.xpose.msra.mxu0 0
        %1750 = vmatpush.bf16.xpose.msra.mxu0 0
        %1751 = vmatpush.bf16.xpose.msra.mxu0 0
        %1752 = vmatpush.bf16.xpose.msra.mxu0 %v1743
        %1753 = vmatmul.bf16.gmra.mxu0 %v1740
        %v1754 = vpop.f32.mrf.mxu0
        %v1755 = vadd.f32 0.0, %v1754
        %v1756 = vpop.f32.mrf.mxu0
        %1757 = vdwg.mxu0
        %v1758 = vmul.f32 %v1755, 0.35355338
        %v1759 = vsel %vm1672, %v1758, -inf
        %1760 = vmax.xlane.f32.xlu0 %v1759
        %v1761 = vpop.xlane.xlu0 %1760
        %v1762 = vsub.f32 %v1758, %v1761
        %v1763 = vmul.f32 %v1762, 1.442695
        %v1764 = vpow.pop %v1763
        %v1765 = vsel %vm1672, %v1764, 0.0
        %1766 = vadd.xlane.f32.xlu0 %v1765
        %v1767 = vpop.xlane.xlu0 %1766
        %v1768 = vrcp.pop %v1767
        %v1769 = vmul.f32 %v1764, %v1768
        %v1770 = vpack.c.bf16 %v1769, %v1769
        %v1772 = vunpack.c.l.b16 %v1728
        %v1773 = vpack.c.b16 %v1772, %v1772
        %1774 = vrot.lane.b32.xlu0 %v1773, 120
        %v1775 = vpop.permute.xlu0 %1774
        %v1777 = vsel %vm1672, %v1770, 0
        %v1780 = vsel %vm1708, %v1775, 0
        %1782 = vmatpush.bf16.msra.mxu0 0
        %1783 = vmatpush.bf16.msra.mxu0 0
        %1784 = vmatpush.bf16.msra.mxu0 0
        %1785 = vmatpush.bf16.msra.mxu0 0
        %1786 = vmatpush.bf16.msra.mxu0 0
        %1787 = vmatpush.bf16.msra.mxu0 0
        %1788 = vmatpush.bf16.msra.mxu0 0
        %1789 = vmatpush.bf16.msra.mxu0 %v1780
        %1790 = vmatmul.bf16.gmra.mxu0 %v1777
        %v1791 = vpop.f32.mrf.mxu0
        %v1792 = vadd.f32 0.0, %v1791
        %v1793 = vpop.f32.mrf.mxu0
        %1794 = vdwg.mxu0
        %1796 = vrot.lane.b32.xlu0 %v1792, 8
        %v1797 = vpop.permute.xlu0 %1796
        %vm1799 = vcmask 130112
        %1800 = vst.msk [vmem:[#allocation2] sm:$0xff] %vm1799, %v1797
        %v1801 = vld [vmem:[#allocation3] sm:$0xf]
        %v1802 = vld [vmem:[#allocation3 + $0x4] sm:$0xf]
        %v1803 = vld [vmem:[#allocation3 + $0x8] sm:$0xf]
        %v1805 = vunpack.c.l.b16 %v1801
        %v1806 = vpack.c.b16 %v1805, %v1805
        %1807 = vrot.lane.b32.xlu0 %v1806, 112
        %v1808 = vpop.permute.xlu0 %1807
        %v1810 = vunpack.c.l.b16 %v1802
        %v1811 = vpack.c.b16 %v1810, %v1810
        %1812 = vrot.lane.b32.xlu0 %v1811, 112
        %v1813 = vpop.permute.xlu0 %1812
        %v1815 = vsel %vm1672, %v1808, 0
        %v1818 = vsel %vm1672, %v1813, 0
        %1820 = vmatpush.bf16.xpose.msra.mxu0 0
        %1821 = vmatpush.bf16.xpose.msra.mxu0 0
        %1822 = vmatpush.bf16.xpose.msra.mxu0 0
        %1823 = vmatpush.bf16.xpose.msra.mxu0 0
        %1824 = vmatpush.bf16.xpose.msra.mxu0 0
        %1825 = vmatpush.bf16.xpose.msra.mxu0 0
        %1826 = vmatpush.bf16.xpose.msra.mxu0 0
        %1827 = vmatpush.bf16.xpose.msra.mxu0 %v1818
        %1828 = vmatmul.bf16.gmra.mxu0 %v1815
        %v1829 = vpop.f32.mrf.mxu0
        %v1830 = vadd.f32 0.0, %v1829
        %v1831 = vpop.f32.mrf.mxu0
        %1832 = vdwg.mxu0
        %v1833 = vmul.f32 %v1830, 0.35355338
        %v1834 = vsel %vm1672, %v1833, -inf
        %1835 = vmax.xlane.f32.xlu0 %v1834
        %v1836 = vpop.xlane.xlu0 %1835
        %v1837 = vsub.f32 %v1833, %v1836
        %v1838 = vmul.f32 %v1837, 1.442695
        %v1839 = vpow.pop %v1838
        %v1840 = vsel %vm1672, %v1839, 0.0
        %1841 = vadd.xlane.f32.xlu0 %v1840
        %v1842 = vpop.xlane.xlu0 %1841
        %v1843 = vrcp.pop %v1842
        %v1844 = vmul.f32 %v1839, %v1843
        %v1845 = vpack.c.bf16 %v1844, %v1844
        %v1847 = vunpack.c.l.b16 %v1803
        %v1848 = vpack.c.b16 %v1847, %v1847
        %1849 = vrot.lane.b32.xlu0 %v1848, 112
        %v1850 = vpop.permute.xlu0 %1849
        %v1852 = vsel %vm1672, %v1845, 0
        %v1855 = vsel %vm1708, %v1850, 0
        %1857 = vmatpush.bf16.msra.mxu0 0
        %1858 = vmatpush.bf16.msra.mxu0 0
        %1859 = vmatpush.bf16.msra.mxu0 0
        %1860 = vmatpush.bf16.msra.mxu0 0
        %1861 = vmatpush.bf16.msra.mxu0 0
        %1862 = vmatpush.bf16.msra.mxu0 0
        %1863 = vmatpush.bf16.msra.mxu0 0
        %1864 = vmatpush.bf16.msra.mxu0 %v1855
        %1865 = vmatmul.bf16.gmra.mxu0 %v1852
        %v1866 = vpop.f32.mrf.mxu0
        %v1867 = vadd.f32 0.0, %v1866
        %v1868 = vpop.f32.mrf.mxu0
        %1869 = vdwg.mxu0
        %1871 = vrot.lane.b32.xlu0 %v1867, 16
        %v1872 = vpop.permute.xlu0 %1871
        %vm1874 = vcmask 195712
        %1875 = vst.msk [vmem:[#allocation2] sm:$0xff] %vm1874, %v1872
        %v1876 = vld [vmem:[#allocation3] sm:$0xf]
        %v1877 = vld [vmem:[#allocation3 + $0x4] sm:$0xf]
        %v1878 = vld [vmem:[#allocation3 + $0x8] sm:$0xf]
        %v1880 = vunpack.c.l.b16 %v1876
        %v1881 = vpack.c.b16 %v1880, %v1880
        %1882 = vrot.lane.b32.xlu0 %v1881, 104
        %v1883 = vpop.permute.xlu0 %1882
        %v1885 = vunpack.c.l.b16 %v1877
        %v1886 = vpack.c.b16 %v1885, %v1885
        %1887 = vrot.lane.b32.xlu0 %v1886, 104
        %v1888 = vpop.permute.xlu0 %1887
        %v1890 = vsel %vm1672, %v1883, 0
        %v1893 = vsel %vm1672, %v1888, 0
        %1895 = vmatpush.bf16.xpose.msra.mxu0 0
        %1896 = vmatpush.bf16.xpose.msra.mxu0 0
        %1897 = vmatpush.bf16.xpose.msra.mxu0 0
        %1898 = vmatpush.bf16.xpose.msra.mxu0 0
        %1899 = vmatpush.bf16.xpose.msra.mxu0 0
        %1900 = vmatpush.bf16.xpose.msra.mxu0 0
        %1901 = vmatpush.bf16.xpose.msra.mxu0 0
        %1902 = vmatpush.bf16.xpose.msra.mxu0 %v1893
        %1903 = vmatmul.bf16.gmra.mxu0 %v1890
        %v1904 = vpop.f32.mrf.mxu0
        %v1905 = vadd.f32 0.0, %v1904
        %v1906 = vpop.f32.mrf.mxu0
        %1907 = vdwg.mxu0
        %v1908 = vmul.f32 %v1905, 0.35355338
        %v1909 = vsel %vm1672, %v1908, -inf
        %1910 = vmax.xlane.f32.xlu0 %v1909
        %v1911 = vpop.xlane.xlu0 %1910
        %v1912 = vsub.f32 %v1908, %v1911
        %v1913 = vmul.f32 %v1912, 1.442695
        %v1914 = vpow.pop %v1913
        %v1915 = vsel %vm1672, %v1914, 0.0
        %1916 = vadd.xlane.f32.xlu0 %v1915
        %v1917 = vpop.xlane.xlu0 %1916
        %v1918 = vrcp.pop %v1917
        %v1919 = vmul.f32 %v1914, %v1918
        %v1920 = vpack.c.bf16 %v1919, %v1919
        %v1922 = vunpack.c.l.b16 %v1878
        %v1923 = vpack.c.b16 %v1922, %v1922
        %1924 = vrot.lane.b32.xlu0 %v1923, 104
        %v1925 = vpop.permute.xlu0 %1924
        %v1927 = vsel %vm1672, %v1920, 0
        %v1930 = vsel %vm1708, %v1925, 0
        %1932 = vmatpush.bf16.msra.mxu0 0
        %1933 = vmatpush.bf16.msra.mxu0 0
        %1934 = vmatpush.bf16.msra.mxu0 0
        %1935 = vmatpush.bf16.msra.mxu0 0
        %1936 = vmatpush.bf16.msra.mxu0 0
        %1937 = vmatpush.bf16.msra.mxu0 0
        %1938 = vmatpush.bf16.msra.mxu0 0
        %1939 = vmatpush.bf16.msra.mxu0 %v1930
        %1940 = vmatmul.bf16.gmra.mxu0 %v1927
        %v1941 = vpop.f32.mrf.mxu0
        %v1942 = vadd.f32 0.0, %v1941
        %v1943 = vpop.f32.mrf.mxu0
        %1944 = vdwg.mxu0
        %1946 = vrot.lane.b32.xlu0 %v1942, 24
        %v1947 = vpop.permute.xlu0 %1946
        %vm1949 = vcmask 261312
        %1950 = vst.msk [vmem:[#allocation2] sm:$0xff] %vm1949, %v1947
        %v1951 = vld [vmem:[#allocation3 + $0xc] sm:$0xf]
        %v1952 = vld [vmem:[#allocation3 + $0x10] sm:$0xf]
        %v1953 = vld [vmem:[#allocation3 + $0x14] sm:$0xf]
        %v1955 = vsel %vm1672, %v1951, 0
        %v1958 = vsel %vm1672, %v1952, 0
        %1960 = vmatpush.bf16.xpose.msra.mxu0 0
        %1961 = vmatpush.bf16.xpose.msra.mxu0 0
        %1962 = vmatpush.bf16.xpose.msra.mxu0 0
        %1963 = vmatpush.bf16.xpose.msra.mxu0 0
        %1964 = vmatpush.bf16.xpose.msra.mxu0 0
        %1965 = vmatpush.bf16.xpose.msra.mxu0 0
        %1966 = vmatpush.bf16.xpose.msra.mxu0 0
        %1967 = vmatpush.bf16.xpose.msra.mxu0 %v1958
        %1968 = vmatmul.bf16.gmra.mxu0 %v1955
        %v1969 = vpop.f32.mrf.mxu0
        %v1970 = vadd.f32 0.0, %v1969
        %v1971 = vpop.f32.mrf.mxu0
        %1972 = vdwg.mxu0
        %v1973 = vmul.f32 %v1970, 0.35355338
        %v1974 = vsel %vm1672, %v1973, -inf
        %1975 = vmax.xlane.f32.xlu0 %v1974
        %v1976 = vpop.xlane.xlu0 %1975
        %v1977 = vsub.f32 %v1973, %v1976
        %v1978 = vmul.f32 %v1977, 1.442695
        %v1979 = vpow.pop %v1978
        %v1980 = vsel %vm1672, %v1979, 0.0
        %1981 = vadd.xlane.f32.xlu0 %v1980
        %v1982 = vpop.xlane.xlu0 %1981
        %v1983 = vrcp.pop %v1982
        %v1984 = vmul.f32 %v1979, %v1983
        %v1985 = vpack.c.bf16 %v1984, %v1984
        %v1987 = vsel %vm1672, %v1985, 0
        %v1990 = vsel %vm1708, %v1953, 0
        %1992 = vmatpush.bf16.msra.mxu0 0
        %1993 = vmatpush.bf16.msra.mxu0 0
        %1994 = vmatpush.bf16.msra.mxu0 0
        %1995 = vmatpush.bf16.msra.mxu0 0
        %1996 = vmatpush.bf16.msra.mxu0 0
        %1997 = vmatpush.bf16.msra.mxu0 0
        %1998 = vmatpush.bf16.msra.mxu0 0
        %1999 = vmatpush.bf16.msra.mxu0 %v1990
        %2000 = vmatmul.bf16.gmra.mxu0 %v1987
        %v2001 = vpop.f32.mrf.mxu0
        %v2002 = vadd.f32 0.0, %v2001
        %v2003 = vpop.f32.mrf.mxu0
        %2004 = vdwg.mxu0
        %2005 = vst.msk [vmem:[#allocation2 + $0x8] sm:$0xff] %vm1672, %v2002
        %v2006 = vld [vmem:[#allocation3 + $0xc] sm:$0xf]
        %v2007 = vld [vmem:[#allocation3 + $0x10] sm:$0xf]
        %v2008 = vld [vmem:[#allocation3 + $0x14] sm:$0xf]
        %v2010 = vunpack.c.l.b16 %v2006
        %v2011 = vpack.c.b16 %v2010, %v2010
        %2012 = vrot.lane.b32.xlu0 %v2011, 120
        %v2013 = vpop.permute.xlu0 %2012
        %v2015 = vunpack.c.l.b16 %v2007
        %v2016 = vpack.c.b16 %v2015, %v2015
        %2017 = vrot.lane.b32.xlu0 %v2016, 120
        %v2018 = vpop.permute.xlu0 %2017
        %v2020 = vsel %vm1672, %v2013, 0
        %v2023 = vsel %vm1672, %v2018, 0
        %2025 = vmatpush.bf16.xpose.msra.mxu0 0
        %2026 = vmatpush.bf16.xpose.msra.mxu0 0
        %2027 = vmatpush.bf16.xpose.msra.mxu0 0
        %2028 = vmatpush.bf16.xpose.msra.mxu0 0
        %2029 = vmatpush.bf16.xpose.msra.mxu0 0
        %2030 = vmatpush.bf16.xpose.msra.mxu0 0
        %2031 = vmatpush.bf16.xpose.msra.mxu0 0
        %2032 = vmatpush.bf16.xpose.msra.mxu0 %v2023
        %2033 = vmatmul.bf16.gmra.mxu0 %v2020
        %v2034 = vpop.f32.mrf.mxu0
        %v2035 = vadd.f32 0.0, %v2034
        %v2036 = vpop.f32.mrf.mxu0
        %2037 = vdwg.mxu0
        %v2038 = vmul.f32 %v2035, 0.35355338
        %v2039 = vsel %vm1672, %v2038, -inf
        %2040 = vmax.xlane.f32.xlu0 %v2039
        %v2041 = vpop.xlane.xlu0 %2040
        %v2042 = vsub.f32 %v2038, %v2041
        %v2043 = vmul.f32 %v2042, 1.442695
        %v2044 = vpow.pop %v2043
        %v2045 = vsel %vm1672, %v2044, 0.0
        %2046 = vadd.xlane.f32.xlu0 %v2045
        %v2047 = vpop.xlane.xlu0 %2046
        %v2048 = vrcp.pop %v2047
        %v2049 = vmul.f32 %v2044, %v2048
        %v2050 = vpack.c.bf16 %v2049, %v2049
        %v2052 = vunpack.c.l.b16 %v2008
        %v2053 = vpack.c.b16 %v2052, %v2052
        %2054 = vrot.lane.b32.xlu0 %v2053, 120
        %v2055 = vpop.permute.xlu0 %2054
        %v2057 = vsel %vm1672, %v2050, 0
        %v2060 = vsel %vm1708, %v2055, 0
        %2062 = vmatpush.bf16.msra.mxu0 0
        %2063 = vmatpush.bf16.msra.mxu0 0
        %2064 = vmatpush.bf16.msra.mxu0 0
        %2065 = vmatpush.bf16.msra.mxu0 0
        %2066 = vmatpush.bf16.msra.mxu0 0
        %2067 = vmatpush.bf16.msra.mxu0 0
        %2068 = vmatpush.bf16.msra.mxu0 0
        %2069 = vmatpush.bf16.msra.mxu0 %v2060
        %2070 = vmatmul.bf16.gmra.mxu0 %v2057
        %v2071 = vpop.f32.mrf.mxu0
        %v2072 = vadd.f32 0.0, %v2071
        %v2073 = vpop.f32.mrf.mxu0
        %2074 = vdwg.mxu0
        %2076 = vrot.lane.b32.xlu0 %v2072, 8
        %v2077 = vpop.permute.xlu0 %2076
        %2079 = vst.msk [vmem:[#allocation2 + $0x8] sm:$0xff] %vm1799, %v2077
        %v2080 = vld [vmem:[#allocation3 + $0xc] sm:$0xf]
        %v2081 = vld [vmem:[#allocation3 + $0x10] sm:$0xf]
        %v2082 = vld [vmem:[#allocation3 + $0x14] sm:$0xf]
        %v2084 = vunpack.c.l.b16 %v2080
        %v2085 = vpack.c.b16 %v2084, %v2084
        %2086 = vrot.lane.b32.xlu0 %v2085, 112
        %v2087 = vpop.permute.xlu0 %2086
        %v2089 = vunpack.c.l.b16 %v2081
        %v2090 = vpack.c.b16 %v2089, %v2089
        %2091 = vrot.lane.b32.xlu0 %v2090, 112
        %v2092 = vpop.permute.xlu0 %2091
        %v2094 = vsel %vm1672, %v2087, 0
        %v2097 = vsel %vm1672, %v2092, 0
        %2099 = vmatpush.bf16.xpose.msra.mxu0 0
        %2100 = vmatpush.bf16.xpose.msra.mxu0 0
        %2101 = vmatpush.bf16.xpose.msra.mxu0 0
        %2102 = vmatpush.bf16.xpose.msra.mxu0 0
        %2103 = vmatpush.bf16.xpose.msra.mxu0 0
        %2104 = vmatpush.bf16.xpose.msra.mxu0 0
        %2105 = vmatpush.bf16.xpose.msra.mxu0 0
        %2106 = vmatpush.bf16.xpose.msra.mxu0 %v2097
        %2107 = vmatmul.bf16.gmra.mxu0 %v2094
        %v2108 = vpop.f32.mrf.mxu0
        %v2109 = vadd.f32 0.0, %v2108
        %v2110 = vpop.f32.mrf.mxu0
        %2111 = vdwg.mxu0
        %v2112 = vmul.f32 %v2109, 0.35355338
        %v2113 = vsel %vm1672, %v2112, -inf
        %2114 = vmax.xlane.f32.xlu0 %v2113
        %v2115 = vpop.xlane.xlu0 %2114
        %v2116 = vsub.f32 %v2112, %v2115
        %v2117 = vmul.f32 %v2116, 1.442695
        %v2118 = vpow.pop %v2117
        %v2119 = vsel %vm1672, %v2118, 0.0
        %2120 = vadd.xlane.f32.xlu0 %v2119
        %v2121 = vpop.xlane.xlu0 %2120
        %v2122 = vrcp.pop %v2121
        %v2123 = vmul.f32 %v2118, %v2122
        %v2124 = vpack.c.bf16 %v2123, %v2123
        %v2126 = vunpack.c.l.b16 %v2082
        %v2127 = vpack.c.b16 %v2126, %v2126
        %2128 = vrot.lane.b32.xlu0 %v2127, 112
        %v2129 = vpop.permute.xlu0 %2128
        %v2131 = vsel %vm1672, %v2124, 0
        %v2134 = vsel %vm1708, %v2129, 0
        %2136 = vmatpush.bf16.msra.mxu0 0
        %2137 = vmatpush.bf16.msra.mxu0 0
        %2138 = vmatpush.bf16.msra.mxu0 0
        %2139 = vmatpush.bf16.msra.mxu0 0
        %2140 = vmatpush.bf16.msra.mxu0 0
        %2141 = vmatpush.bf16.msra.mxu0 0
        %2142 = vmatpush.bf16.msra.mxu0 0
        %2143 = vmatpush.bf16.msra.mxu0 %v2134
        %2144 = vmatmul.bf16.gmra.mxu0 %v2131
        %v2145 = vpop.f32.mrf.mxu0
        %v2146 = vadd.f32 0.0, %v2145
        %v2147 = vpop.f32.mrf.mxu0
        %2148 = vdwg.mxu0
        %2150 = vrot.lane.b32.xlu0 %v2146, 16
        %v2151 = vpop.permute.xlu0 %2150
        %2153 = vst.msk [vmem:[#allocation2 + $0x8] sm:$0xff] %vm1874, %v2151
        %v2154 = vld [vmem:[#allocation3 + $0xc] sm:$0xf]
        %v2155 = vld [vmem:[#allocation3 + $0x10] sm:$0xf]
        %v2156 = vld [vmem:[#allocation3 + $0x14] sm:$0xf]
        %v2158 = vunpack.c.l.b16 %v2154
        %v2159 = vpack.c.b16 %v2158, %v2158
        %2160 = vrot.lane.b32.xlu0 %v2159, 104
        %v2161 = vpop.permute.xlu0 %2160
        %v2163 = vunpack.c.l.b16 %v2155
        %v2164 = vpack.c.b16 %v2163, %v2163
        %2165 = vrot.lane.b32.xlu0 %v2164, 104
        %v2166 = vpop.permute.xlu0 %2165
        %v2168 = vsel %vm1672, %v2161, 0
        %v2171 = vsel %vm1672, %v2166, 0
        %2173 = vmatpush.bf16.xpose.msra.mxu0 0
        %2174 = vmatpush.bf16.xpose.msra.mxu0 0
        %2175 = vmatpush.bf16.xpose.msra.mxu0 0
        %2176 = vmatpush.bf16.xpose.msra.mxu0 0
        %2177 = vmatpush.bf16.xpose.msra.mxu0 0
        %2178 = vmatpush.bf16.xpose.msra.mxu0 0
        %2179 = vmatpush.bf16.xpose.msra.mxu0 0
        %2180 = vmatpush.bf16.xpose.msra.mxu0 %v2171
        %2181 = vmatmul.bf16.gmra.mxu0 %v2168
        %v2182 = vpop.f32.mrf.mxu0
        %v2183 = vadd.f32 0.0, %v2182
        %v2184 = vpop.f32.mrf.mxu0
        %2185 = vdwg.mxu0
        %v2186 = vmul.f32 %v2183, 0.35355338
        %v2187 = vsel %vm1672, %v2186, -inf
        %2188 = vmax.xlane.f32.xlu0 %v2187
        %v2189 = vpop.xlane.xlu0 %2188
        %v2190 = vsub.f32 %v2186, %v2189
        %v2191 = vmul.f32 %v2190, 1.442695
        %v2192 = vpow.pop %v2191
        %v2193 = vsel %vm1672, %v2192, 0.0
        %2194 = vadd.xlane.f32.xlu0 %v2193
        %v2195 = vpop.xlane.xlu0 %2194
        %v2196 = vrcp.pop %v2195
        %v2197 = vmul.f32 %v2192, %v2196
        %v2198 = vpack.c.bf16 %v2197, %v2197
        %v2200 = vunpack.c.l.b16 %v2156
        %v2201 = vpack.c.b16 %v2200, %v2200
        %2202 = vrot.lane.b32.xlu0 %v2201, 104
        %v2203 = vpop.permute.xlu0 %2202
        %v2205 = vsel %vm1672, %v2198, 0
        %v2208 = vsel %vm1708, %v2203, 0
        %2210 = vmatpush.bf16.msra.mxu0 0
        %2211 = vmatpush.bf16.msra.mxu0 0
        %2212 = vmatpush.bf16.msra.mxu0 0
        %2213 = vmatpush.bf16.msra.mxu0 0
        %2214 = vmatpush.bf16.msra.mxu0 0
        %2215 = vmatpush.bf16.msra.mxu0 0
        %2216 = vmatpush.bf16.msra.mxu0 0
        %2217 = vmatpush.bf16.msra.mxu0 %v2208
        %2218 = vmatmul.bf16.gmra.mxu0 %v2205
        %v2219 = vpop.f32.mrf.mxu0
        %v2220 = vadd.f32 0.0, %v2219
        %v2221 = vpop.f32.mrf.mxu0
        %2222 = vdwg.mxu0
        %2224 = vrot.lane.b32.xlu0 %v2220, 24
        %v2225 = vpop.permute.xlu0 %2224
        %2227 = vst.msk [vmem:[#allocation2 + $0x8] sm:$0xff] %vm1949, %v2225
        %v2228 = vld [vmem:[#allocation4] sm:$0xff]
        %v2229 = vld [vmem:[#allocation4 + $0x8] sm:$0xff]
        %v2230 = vld [vmem:[#allocation2] sm:$0xff]
        %v2231 = vld [vmem:[#allocation2 + $0x8] sm:$0xff]
        %v2232 = vpack.c.bf16 %v2231, %v2230
        %v2233 = vld [vmem:[#allocation23] sm:$0xf]
        %v2234 = vld [vmem:[#allocation23 + $0x4] sm:$0xf]
        %v2235 = vld [vmem:[#allocation23 + $0x8] sm:$0xf]
        %v2236 = vld [vmem:[#allocation23 + $0xc] sm:$0xf]
        %v2237 = vld [vmem:[%s16] sm:$0x1]
        %v2239 = vperm.slane %v2237, 0
        %v2245 = vunpack.c.l.b16 %v2233
        %v2246 = vunpack.c.l.b16 %v2234
        %v2247 = vunpack.c.l.b16 %v2235
        %v2248 = vunpack.c.l.b16 %v2236
        %v2249 = vpack.c.b16 %v2246, %v2245
        %v2250 = vpack.c.b16 %v2248, %v2247
        %vm2253 = vcmask 261120
        %v2255 = vsel %vm2253, %v2232, 0
        %2257 = vmatpush.bf16.msra.mxu0 0
        %2258 = vmatpush.bf16.msra.mxu0 0
        %2259 = vmatpush.bf16.msra.mxu0 0
        %2260 = vmatpush.bf16.msra.mxu0 0
        %2261 = vmatpush.bf16.msra.mxu0 0
        %2262 = vmatpush.bf16.msra.mxu0 0
        %2263 = vmatpush.bf16.msra.mxu0 %v2250
        %2264 = vmatpush.bf16.msra.mxu0 %v2249
        %2265 = vmatmul.bf16.gmra.mxu0 %v2255
        %v2266 = vpop.f32.mrf.mxu0
        %v2267 = vadd.f32 %v2239, %v2266
        %v2268 = vpop.f32.mrf.mxu0
        %v2269 = vadd.f32 %v2239, %v2268
        %2270 = vdwg.mxu0
        %v2271 = vadd.f32 %v2228, %v2267
        %v2272 = vadd.f32 %v2229, %v2269
        %v2273 = vld [vmem:[%s17] sm:$0x1]
        %v2275 = vperm.slane %v2273, 0
        %v2277 = vmul.f32 %v2271, %v2275
        %v2278 = vmul.f32 %v2272, %v2275
        %v2279 = vpack.c.bf16 %v2278, %v2277
        %v2280 = vld [vmem:[#allocation24] sm:$0xf]
        %v2281 = vld [vmem:[#allocation24 + $0x4] sm:$0xf]
        %v2282 = vld [vmem:[#allocation24 + $0x8] sm:$0xf]
        %v2283 = vld [vmem:[#allocation24 + $0xc] sm:$0xf]
        %v2284 = vld [vmem:[#allocation24 + $0x10] sm:$0xf]
        %v2285 = vld [vmem:[#allocation24 + $0x14] sm:$0xf]
        %v2286 = vld [vmem:[#allocation24 + $0x18] sm:$0xf]
        %v2287 = vld [vmem:[#allocation24 + $0x1c] sm:$0xf]
        %v2288 = vld [vmem:[#allocation24 + $0x20] sm:$0xf]
        %v2289 = vld [vmem:[#allocation24 + $0x24] sm:$0xf]
        %v2290 = vld [vmem:[#allocation24 + $0x28] sm:$0xf]
        %v2291 = vld [vmem:[#allocation24 + $0x2c] sm:$0xf]
        %v2292 = vld [vmem:[#allocation24 + $0x30] sm:$0xf]
        %v2293 = vld [vmem:[#allocation24 + $0x34] sm:$0xf]
        %v2294 = vld [vmem:[#allocation24 + $0x38] sm:$0xf]
        %v2295 = vld [vmem:[#allocation24 + $0x3c] sm:$0xf]
        %v2296 = vld [vmem:[%s19] sm:$0x1]
        %v2298 = vperm.slane %v2296, 0
        %v2316 = vunpack.c.l.b16 %v2280
        %v2317 = vunpack.c.l.b16 %v2281
        %v2318 = vunpack.c.l.b16 %v2282
        %v2319 = vunpack.c.l.b16 %v2283
        %v2320 = vunpack.c.l.b16 %v2284
        %v2321 = vunpack.c.l.b16 %v2285
        %v2322 = vunpack.c.l.b16 %v2286
        %v2323 = vunpack.c.l.b16 %v2287
        %v2324 = vunpack.c.l.b16 %v2288
        %v2325 = vunpack.c.l.b16 %v2289
        %v2326 = vunpack.c.l.b16 %v2290
        %v2327 = vunpack.c.l.b16 %v2291
        %v2328 = vunpack.c.l.b16 %v2292
        %v2329 = vunpack.c.l.b16 %v2293
        %v2330 = vunpack.c.l.b16 %v2294
        %v2331 = vunpack.c.l.b16 %v2295
        %v2332 = vpack.c.b16 %v2317, %v2316
        %v2333 = vpack.c.b16 %v2319, %v2318
        %v2334 = vpack.c.b16 %v2321, %v2320
        %v2335 = vpack.c.b16 %v2323, %v2322
        %v2336 = vpack.c.b16 %v2325, %v2324
        %v2337 = vpack.c.b16 %v2327, %v2326
        %v2338 = vpack.c.b16 %v2329, %v2328
        %v2339 = vpack.c.b16 %v2331, %v2330
        %2348 = vmatpush.bf16.msra.mxu0 %v2339
        %2349 = vmatpush.bf16.msra.mxu0 %v2338
        %2350 = vmatpush.bf16.msra.mxu0 %v2337
        %2351 = vmatpush.bf16.msra.mxu0 %v2336
        %2352 = vmatpush.bf16.msra.mxu0 %v2335
        %2353 = vmatpush.bf16.msra.mxu0 %v2334
        %2354 = vmatpush.bf16.msra.mxu0 %v2333
        %2355 = vmatpush.bf16.msra.mxu0 %v2332
        %2356 = vmatmul.bf16.gmra.mxu0 %v2279
        %v2357 = vpop.f32.mrf.mxu0
        %v2358 = vadd.f32 %v2298, %v2357
        %v2359 = vpop.f32.mrf.mxu0
        %v2360 = vadd.f32 %v2298, %v2359
        %2361 = vdwg.mxu0
        %v2362 = vld [vmem:[%s21] sm:$0x1]
        %v2364 = vperm.slane %v2362, 0
        %v2366 = vmul.f32 %v2358, %v2364
        %v2367 = vmul.f32 %v2360, %v2364
        %v2368 = vtanh.pop %v2366
        %v2369 = vtanh.pop %v2367
        %v2370 = vld [vmem:[%s20] sm:$0x1]
        %v2372 = vperm.slane %v2370, 0
        %v2374 = vmul.f32 %v2368, %v2372
        %v2375 = vmul.f32 %v2369, %v2372
        %v2376 = vpack.c.bf16 %v2375, %v2374
        %v2377 = vld [vmem:[#allocation26] sm:$0xf]
        %v2378 = vld [vmem:[#allocation26 + $0x4] sm:$0xf]
        %v2379 = vld [vmem:[#allocation26 + $0x8] sm:$0xf]
        %v2380 = vld [vmem:[#allocation26 + $0xc] sm:$0xf]
        %v2381 = vld [vmem:[#allocation26 + $0x10] sm:$0xf]
        %v2382 = vld [vmem:[#allocation26 + $0x14] sm:$0xf]
        %v2383 = vld [vmem:[#allocation26 + $0x18] sm:$0xf]
        %v2384 = vld [vmem:[#allocation26 + $0x1c] sm:$0xf]
        %v2385 = vld [vmem:[#allocation26 + $0x20] sm:$0xf]
        %v2386 = vld [vmem:[#allocation26 + $0x24] sm:$0xf]
        %v2387 = vld [vmem:[#allocation26 + $0x28] sm:$0xf]
        %v2388 = vld [vmem:[#allocation26 + $0x2c] sm:$0xf]
        %v2389 = vld [vmem:[#allocation26 + $0x30] sm:$0xf]
        %v2390 = vld [vmem:[#allocation26 + $0x34] sm:$0xf]
        %v2391 = vld [vmem:[#allocation26 + $0x38] sm:$0xf]
        %v2392 = vld [vmem:[#allocation26 + $0x3c] sm:$0xf]
        %v2393 = vld [vmem:[%s23] sm:$0x1]
        %v2395 = vperm.slane %v2393, 0
        %v2413 = vunpack.c.l.b16 %v2377
        %v2414 = vunpack.c.l.b16 %v2378
        %v2415 = vunpack.c.l.b16 %v2379
        %v2416 = vunpack.c.l.b16 %v2380
        %v2417 = vunpack.c.l.b16 %v2381
        %v2418 = vunpack.c.l.b16 %v2382
        %v2419 = vunpack.c.l.b16 %v2383
        %v2420 = vunpack.c.l.b16 %v2384
        %v2421 = vunpack.c.l.b16 %v2385
        %v2422 = vunpack.c.l.b16 %v2386
        %v2423 = vunpack.c.l.b16 %v2387
        %v2424 = vunpack.c.l.b16 %v2388
        %v2425 = vunpack.c.l.b16 %v2389
        %v2426 = vunpack.c.l.b16 %v2390
        %v2427 = vunpack.c.l.b16 %v2391
        %v2428 = vunpack.c.l.b16 %v2392
        %v2429 = vpack.c.b16 %v2414, %v2413
        %v2430 = vpack.c.b16 %v2416, %v2415
        %v2431 = vpack.c.b16 %v2418, %v2417
        %v2432 = vpack.c.b16 %v2420, %v2419
        %v2433 = vpack.c.b16 %v2422, %v2421
        %v2434 = vpack.c.b16 %v2424, %v2423
        %v2435 = vpack.c.b16 %v2426, %v2425
        %v2436 = vpack.c.b16 %v2428, %v2427
        %2445 = vmatpush.bf16.msra.mxu0 %v2436
        %2446 = vmatpush.bf16.msra.mxu0 %v2435
        %2447 = vmatpush.bf16.msra.mxu0 %v2434
        %2448 = vmatpush.bf16.msra.mxu0 %v2433
        %2449 = vmatpush.bf16.msra.mxu0 %v2432
        %2450 = vmatpush.bf16.msra.mxu0 %v2431
        %2451 = vmatpush.bf16.msra.mxu0 %v2430
        %2452 = vmatpush.bf16.msra.mxu0 %v2429
        %2453 = vmatmul.bf16.gmra.mxu0 %v2376
        %v2454 = vpop.f32.mrf.mxu0
        %v2455 = vadd.f32 %v2395, %v2454
        %v2456 = vpop.f32.mrf.mxu0
        %v2457 = vadd.f32 %v2395, %v2456
        %2458 = vdwg.mxu0
        %v2459 = vld [vmem:[#allocation5] sm:$0xff]
        %v2460 = vld [vmem:[#allocation5 + $0x8] sm:$0xff]
        %v2461 = vld [vmem:[%s24] sm:$0x1]
        %2463 = vset.pattern.permute.xlu0 0
        %2464 = vperm.xlu0 %2463, %v2459
        %v2465 = vpop.permute.xlu0 %2464
        %2468 = vset.pattern.permute.xlu0 0
        %2469 = vperm.xlu0 %2468, %v2460
        %v2470 = vpop.permute.xlu0 %2469
        %v2473 = vperm.slane %v2461, 0
        %v2475 = vmul.f32 %v2465, %v2473
        %v2476 = vmul.f32 %v2470, %v2473
        %v2477 = vadd.f32 %v2455, %v2475
        %v2478 = vadd.f32 %v2457, %v2476
        %2479 = vst [vmem:[%s1001] sm:$0xff] %v2477
        %2480 = vst [vmem:[%s1001 + $0x8] sm:$0xff] %v2478
        %s2481 = sand.u32 %s593, 1
        %s2482 = scalar_lea.sflag [#allocation8], %s2481
        %s2483 = sand.u32 %s593, 1
        %s2484 = smul.addr %s2483, 16
        %s2485 = scalar_lea.vmem [#allocation27], %s2484
        // Predicated region
        $region173: #{tpu_custom_call.1} parent=119 // pred_check
          %p2486 = pneg %p603
        $region174: #{tpu_custom_call.1} parent=119 // pred_check_branch
          %2488 = sbr.rel (%p2486) target = $region176
        $region175: #{tpu_custom_call.1} parent=119 // pred_region
          %s2489 = smul.u32 2, %s50
          %2491 = vsyncadd %s2482, 0
          %s2492 = smul.addr %s2489, 8
          %s2493 = scalar_lea.hbm %s25, %s2492
          %s2494 = sshll.u32 %s2485, 4
          %s2495 = int_to_ptr.vmem [resolvable:$true] %s2494
          %s2496 = sshll.u32 %s2493, 4
          %s2497 = int_to_ptr.hbm [resolvable:$true] %s2496
          %2502 = dma.vmem_to_hbm [thread:$0]  %s2495, 256, %s2497, %s2482, 128, 128, 8
        $region176: #{tpu_custom_call.1} parent=119 // pred_fallthru
          _
      $region120: #{tpu_custom_call.1} parent=5 // pred_fallthru
        _
      %p2503 = scmp.le.s32.totalorder 2, %s45
      // Predicated region
      $region177: #{tpu_custom_call.1} parent=5 // pred_check
        %p2504 = pneg %p2503
      $region178: #{tpu_custom_call.1} parent=5 // pred_check_branch
        %2506 = sbr.rel (%p2504) target = $region180
      $region179: #{tpu_custom_call.1} parent=5 // pred_region
        %s2507 = ssub.s32 %s45, 2
        // Predicated region
        $region181: #{tpu_custom_call.1} parent=179 // pred_check
          %p2508 = pneg %p609
        $region182: #{tpu_custom_call.1} parent=179 // pred_check_branch
          %2510 = sbr.rel (%p2508) target = $region184
        $region183: #{tpu_custom_call.1} parent=179 // pred_region
          %s2511 = sand.u32 %s594, 1
          %s2512 = scalar_lea.sflag [#allocation8], %s2511
          %s2513 = sand.u32 %s594, 1
          %s2514 = smul.addr %s2513, 16
          %s2515 = scalar_lea.vmem [#allocation27], %s2514
          %2517 = dma.done %s2512, 256
        $region184: #{tpu_custom_call.1} parent=179 // pred_fallthru
          _
      $region180: #{tpu_custom_call.1} parent=5 // pred_fallthru
        _
    $region6: #{tpu_custom_call.1} parent=1 // loop_footer
      %s49 = sadd.s32 1, %s45
    $region7: #{tpu_custom_call.1} parent=1 // loop_footer_branch
      %44 = sbr.rel target = $region3
    $region8: #{tpu_custom_call.1} parent=1 // loop_exit
      _
    %2518 = vsyncpa [#allocation7], 1
    %s2519 = scalar_lea.sflag [#allocation7], 1
    %2520 = vsyncpa %s2519, 1
    %2521 = vsyncpa [#allocation10], 1
    %s2522 = scalar_lea.sflag [#allocation10], 1
    %2523 = vsyncpa %s2522, 1
    %2524 = vsyncpa [#allocation13], 1
    %2525 = vsyncpa [#allocation16], 1
    %2526 = vsyncpa [#allocation19], 1
    %2527 = vsyncpa [#allocation22], 1
    %2528 = vsyncpa [#allocation25], 1
    %2529 = vsyncpa [#allocation8], 1
    %s2530 = scalar_lea.sflag [#allocation8], 1
    %2531 = vsyncpa %s2530, 1

</llo_original>
